<compile_context>
chip_gen: v6e
topology: v6e:2x2x1
jax: 0.10.0
libtpu: 0.0.40
codegen_flags: <defaults>
</compile_context>

<pallas_src>
import functools

import jax
import jax.numpy as jnp
from jax import lax
from jax.experimental import pallas as pl
from jax.experimental.pallas import tpu as pltpu

DIM_X = 3
NE = 32
HIDDEN = 1024

# Chips where one JAX device hosts two TensorCores (sharded via "parallel").
_DUAL_TC_MARKERS = ("v4", "v5p", "v7")


# ---------------------------------------------------------------------------
# Per-step math (batch-on-lanes layout).
#   x_t    : (dim_x, tb)   f32 value
#   w1b_ref: (H, dim_x+1)  f32 ref   [columns 0..dx-1 = W1^T, column dx = b1^T]
#   w2t_ref: (ne, H)       bf16 ref  [W2^T]
#   b2t    : (ne, 1)       f32 value
#   wm9t   : (M9, ne)      f32 value [wm9^T, zero-padded rows]
# ---------------------------------------------------------------------------
def _transition_step(x_t, w1b_ref, w2t_ref, b2t, wm9t, *, dim_x):
    # Layer 1: Linear(dim_x, H) as dim_x VPU broadcast-FMAs (K=3 -> skip MXU).
    h = w1b_ref[:, dim_x:dim_x + 1]                       # bias column (H, 1)
    for i in range(dim_x):
        h = h + w1b_ref[:, i:i + 1] * x_t[i:i + 1, :]     # (H, tb)
    h = jnp.maximum(h, 0.0).astype(jnp.bfloat16)          # bf16 MXU operand

    # Layer 2: the only real matmul, lane-dense N=tb, bf16 MXU / f32 accum.
    logits = jnp.dot(w2t_ref[...], h,
                     preferred_element_type=jnp.float32) + b2t   # (ne, tb)

    # Numerically-stable softmax over the ne (sublane) axis, exact divide.
    m = jnp.max(logits, axis=0, keepdims=True)
    e = jnp.exp(logits - m)
    denom = jnp.sum(e, axis=0, keepdims=True)
    bsm = e / denom                                        # (ne, tb)

    # Mixing:  (cat @ Wm)^T == sum_i x_i * (wm9^T @ bsm^T)[i*dx:(i+1)*dx, :]
    mix = jnp.dot(wm9t, bsm, preferred_element_type=jnp.float32)  # (M9, tb)
    out = x_t
    for i in range(dim_x):
        out = out + x_t[i:i + 1, :] * mix[i * dim_x:(i + 1) * dim_x, :]
    return out                                             # (dim_x, tb)


# ---------------------------------------------------------------------------
# Kernels
# ---------------------------------------------------------------------------
def _single_step_kernel(x_ref, w1b_ref, w2t_ref, b2t_ref, wm9t_ref, o_ref,
                        *, dim_x):
    o_ref[...] = _transition_step(x_ref[...], w1b_ref, w2t_ref,
                                  b2t_ref[...], wm9t_ref[...], dim_x=dim_x)


def _rollout_kernel(x_ref, w1b_ref, w2t_ref, b2t_ref, wm9t_ref, o_ref,
                    *, dim_x, n_steps):
    # Fused RNN time loop: weights stay VMEM-resident, state stays on-chip.
    # Hoist the small loop-invariant reads; w2t stays a ref (streamed to MXU),
    # w1b stays a ref (its lane-padded value would only spill).
    b2t = b2t_ref[...]
    wm9t = wm9t_ref[...]

    def body(_, x):
        return _transition_step(x, w1b_ref, w2t_ref, b2t, wm9t, dim_x=dim_x)

    o_ref[...] = lax.fori_loop(0, n_steps, body, x_ref[...])


# ---------------------------------------------------------------------------
# Wrappers
# ---------------------------------------------------------------------------
def _num_parallel_tiles():
    """2 batch tiles on dual-TensorCore chips, 1 otherwise (grid is a serial
    loop on single-TC chips, so extra tiles are pure per-step overhead)."""
    try:
        kind = jax.devices()[0].device_kind.lower()
    except Exception:
        return 1
    return 2 if any(t in kind for t in _DUAL_TC_MARKERS) else 1


def _batch_tile(B, n_tiles):
    """Lane (batch) tile size: lane-dense (multiple of 128) whenever possible,
    split into >= n_tiles tiles on dual-TC chips."""
    if B % 128 != 0 or n_tiles <= 1:
        return B                      # full-extent block is always legal
    nblk = B // 128
    for c in range(nblk // n_tiles, 0, -1):
        if nblk % c == 0:
            return c * 128            # >= n_tiles lane-dense tiles
    return B                          # B == 128: cannot split and stay lane-dense


def _in_specs(tb, dx, H, ne, m9):
    return [
        pl.BlockSpec((dx, tb), lambda i: (0, i)),        # x^T (batch on lanes)
        pl.BlockSpec((H, dx + 1), lambda i: (0, 0)),     # [W1^T | b1^T]
        pl.BlockSpec((ne, H), lambda i: (0, 0)),         # W2^T (bf16)
        pl.BlockSpec((ne, 1), lambda i: (0, 0)),         # b2^T
        pl.BlockSpec((m9, ne), lambda i: (0, 0)),        # wm9^T (row-padded)
    ]


def _call(kernel, x, params):
    w1b, w2t, b2t, wm9t = params
    B, dx = x.shape
    H = w1b.shape[0]
    ne = w2t.shape[0]
    m9 = wm9t.shape[0]
    tb = _batch_tile(B, _num_parallel_tiles())
    x_t = x.T                                            # (dx, B), once
    out_t = pl.pallas_call(
        kernel,
        out_shape=jax.ShapeDtypeStruct((dx, B), jnp.float32),
        grid=(B // tb,),
        in_specs=_in_specs(tb, dx, H, ne, m9),
        out_specs=pl.BlockSpec((dx, tb), lambda i: (0, i)),
        compiler_params=pltpu.CompilerParams(
            dimension_semantics=("parallel",)),
    )(x_t, w1b, w2t, b2t, wm9t)
    return out_t.T                                       # back to (B, dx)


def transition_model_forward(x, params):
    """One application of transition_model.forward (module semantics)."""
    dx = x.shape[1]
    return _call(functools.partial(_single_step_kernel, dim_x=dx), x, params)


def transition_model_rollout(x0, params, n_steps):
    """Apply transition_model n_steps times inside a single fused kernel."""
    dx = x0.shape[1]
    return _call(functools.partial(_rollout_kernel, dim_x=dx, n_steps=n_steps),
                 x0, params)


# ---------------------------------------------------------------------------
# Parameter re-layout + pure-JAX reference + init
# ---------------------------------------------------------------------------
def prepare_params(w1, b1, w2, b2, wm):
    """Math-layout params (h = x@w1+b1; logits = h@w2+b2; out = x + cat@wm)
    -> kernel layout (one-time conversion)."""
    dim_x, _ = w1.shape
    ne = w2.shape[1]
    w1b = jnp.concatenate([w1.T, b1.T], axis=1).astype(jnp.float32)  # (H, dx+1)
    w2t = w2.T.astype(jnp.bfloat16)                                  # (ne, H)
    b2t = b2.T.astype(jnp.float32)                                   # (ne, 1)
    # wm9[k, i*dx + o] = wm[i*ne + k, o];  kernel uses wm9^T zero-padded to
    # a multiple of 8 rows (aligned MXU M, extra rows unused).
    wm9 = wm.reshape(dim_x, ne, dim_x).transpose(1, 0, 2).reshape(ne, dim_x * dim_x)
    m9 = ((dim_x * dim_x + 7) // 8) * 8
    wm9t = jnp.zeros((m9, ne), jnp.float32).at[:dim_x * dim_x, :].set(wm9.T)
    return w1b, w2t, b2t, wm9t


def _reference_forward(x, w1, b1, w2, b2, wm):
    h = jnp.maximum(x @ w1 + b1, 0.0)
    logits = h @ w2 + b2
    bsm = jax.nn.softmax(logits, axis=1)
    cat = (x[:, :, None] * bsm[:, None, :]).reshape(x.shape[0], -1)
    return x + cat @ wm


def _init_params(key, dim_x=DIM_X, hidden=HIDDEN, ne=NE):
    """Deterministic init mimicking PyTorch's default uniform(-1/sqrt(fan_in))."""
    k1, k2, k3, k4, k5 = jax.random.split(key, 5)
    lim1 = 1.0 / jnp.sqrt(dim_x)
    lim2 = 1.0 / jnp.sqrt(hidden)
    lim3 = 1.0 / jnp.sqrt(dim_x * ne)
    w1 = jax.random.uniform(k1, (dim_x, hidden), jnp.float32, -lim1, lim1)
    b1 = jax.random.uniform(k2, (1, hidden), jnp.float32, -lim1, lim1)
    w2 = jax.random.uniform(k3, (hidden, ne), jnp.float32, -lim2, lim2)
    b2 = jax.random.uniform(k4, (1, ne), jnp.float32, -lim2, lim2)
    wm = jax.random.uniform(k5, (dim_x * ne, dim_x), jnp.float32, -lim3, lim3)
    return w1, b1, w2, b2, wm


if __name__ == "__main__":
    key = jax.random.PRNGKey(0)
    kx, kp = jax.random.split(key)

    B = 256          # batch on lanes: multiple of 128 -> lane-dense MXU / stores
    T = 8            # fused RNN timesteps
    x = jax.random.normal(kx, (B, DIM_X), dtype=jnp.float32)
    w1, b1, w2, b2, wm = _init_params(kp)
    params = prepare_params(w1, b1, w2, b2, wm)   # one-time weight re-layout

    # --- single forward step vs pure-f32 JAX reference ----------------------
    out = jax.block_until_ready(transition_model_forward(x, params))
    ref = _reference_forward(x, w1, b1, w2, b2, wm)
    assert out.shape == (B, DIM_X)
    # tolerance accounts for the bf16 MXU operands (f32 accumulation)
    assert jnp.allclose(out, ref, atol=1e-2, rtol=1e-2), "single-step mismatch"

    # --- fused T-step rollout vs iterating the single-step kernel -----------
    roll = jax.block_until_ready(transition_model_rollout(x, params, n_steps=T))
    it = x
    for _ in range(T):
        it = transition_model_forward(it, params)
    it = jax.block_until_ready(it)
    assert roll.shape == (B, DIM_X)
    assert jnp.allclose(roll, it, atol=5e-4, rtol=5e-4), "rollout mismatch"

    print("KERNEL_OK")
</pallas_src>

<mosaic_0001>
module attributes {stable_mosaic.version = 11 : i64} {
  func.func @_single_step_kernel(%arg0: i32, %arg1: memref<3x256xf32, #tpu.memory_space<vmem>>, %arg2: memref<1024x4xf32, #tpu.memory_space<vmem>>, %arg3: memref<32x1024xbf16, #tpu.memory_space<vmem>>, %arg4: memref<32x1xf32, #tpu.memory_space<vmem>>, %arg5: memref<16x32xf32, #tpu.memory_space<vmem>>, %arg6: memref<3x256xf32, #tpu.memory_space<vmem>>) attributes {dimension_semantics = [#tpu.dimension_semantics<parallel>], iteration_bounds = array<i64: 1>, scalar_prefetch = 0 : i64, scratch_operands = 0 : i64, tpu.core_type = #tpu.core_type<tc>, window_params = [{transform_indices = @transform_0, window_bounds = array<i64: 3, 256>}, {pipeline_mode = #tpu.pipeline_mode<synchronous>, transform_indices = @transform_1, window_bounds = array<i64: 1024, 4>}, {pipeline_mode = #tpu.pipeline_mode<synchronous>, transform_indices = @transform_2, window_bounds = array<i64: 32, 1024>}, {pipeline_mode = #tpu.pipeline_mode<synchronous>, transform_indices = @transform_3, window_bounds = array<i64: 32, 1>}, {pipeline_mode = #tpu.pipeline_mode<synchronous>, transform_indices = @transform_4, window_bounds = array<i64: 16, 32>}, {transform_indices = @transform_5, window_bounds = array<i64: 3, 256>}]} {
    %c0 = arith.constant 0 : index
    %c0_0 = arith.constant 0 : index
    %0 = vector.load %arg1[%c0, %c0_0] : memref<3x256xf32, #tpu.memory_space<vmem>>, vector<3x256xf32>
    %c0_1 = arith.constant 0 : index
    %c0_2 = arith.constant 0 : index
    %1 = vector.load %arg4[%c0_1, %c0_2] : memref<32x1xf32, #tpu.memory_space<vmem>>, vector<32x1xf32>
    %c0_3 = arith.constant 0 : index
    %c0_4 = arith.constant 0 : index
    %2 = vector.load %arg5[%c0_3, %c0_4] : memref<16x32xf32, #tpu.memory_space<vmem>>, vector<16x32xf32>
    %c0_5 = arith.constant 0 : index
    %c3 = arith.constant 3 : index
    %3 = vector.load %arg2[%c0_5, %c3] : memref<1024x4xf32, #tpu.memory_space<vmem>>, vector<1024x1xf32>
    %c0_6 = arith.constant 0 : index
    %c0_7 = arith.constant 0 : index
    %4 = vector.load %arg2[%c0_6, %c0_7] : memref<1024x4xf32, #tpu.memory_space<vmem>>, vector<1024x1xf32>
    %5 = vector.extract_strided_slice %0 {offsets = [0, 0], sizes = [1, 256], strides = [1, 1]} : vector<3x256xf32> to vector<1x256xf32>
    %6 = vector.broadcast %4 : vector<1024x1xf32> to vector<1024x256xf32>
    %7 = vector.broadcast %5 : vector<1x256xf32> to vector<1024x256xf32>
    %8 = arith.mulf %6, %7 : vector<1024x256xf32>
    %9 = vector.broadcast %3 : vector<1024x1xf32> to vector<1024x256xf32>
    %10 = arith.addf %9, %8 : vector<1024x256xf32>
    %c0_8 = arith.constant 0 : index
    %c1 = arith.constant 1 : index
    %11 = vector.load %arg2[%c0_8, %c1] : memref<1024x4xf32, #tpu.memory_space<vmem>>, vector<1024x1xf32>
    %12 = vector.extract_strided_slice %0 {offsets = [1, 0], sizes = [1, 256], strides = [1, 1]} : vector<3x256xf32> to vector<1x256xf32>
    %13 = vector.broadcast %11 : vector<1024x1xf32> to vector<1024x256xf32>
    %14 = vector.broadcast %12 : vector<1x256xf32> to vector<1024x256xf32>
    %15 = arith.mulf %13, %14 : vector<1024x256xf32>
    %16 = arith.addf %10, %15 : vector<1024x256xf32>
    %c0_9 = arith.constant 0 : index
    %c2 = arith.constant 2 : index
    %17 = vector.load %arg2[%c0_9, %c2] : memref<1024x4xf32, #tpu.memory_space<vmem>>, vector<1024x1xf32>
    %18 = vector.extract_strided_slice %0 {offsets = [2, 0], sizes = [1, 256], strides = [1, 1]} : vector<3x256xf32> to vector<1x256xf32>
    %19 = vector.broadcast %17 : vector<1024x1xf32> to vector<1024x256xf32>
    %20 = vector.broadcast %18 : vector<1x256xf32> to vector<1024x256xf32>
    %21 = arith.mulf %19, %20 : vector<1024x256xf32>
    %22 = arith.addf %16, %21 : vector<1024x256xf32>
    %cst = arith.constant 0.000000e+00 : f32
    %23 = vector.broadcast %cst : f32 to vector<1024x256xf32>
    %24 = arith.maximumf %22, %23 : vector<1024x256xf32>
    %25 = arith.truncf %24 : vector<1024x256xf32> to vector<1024x256xbf16>
    %c0_10 = arith.constant 0 : index
    %c0_11 = arith.constant 0 : index
    %26 = vector.load %arg3[%c0_10, %c0_11] : memref<32x1024xbf16, #tpu.memory_space<vmem>>, vector<32x1024xbf16>
    %cst_12 = arith.constant dense<0.000000e+00> : vector<32x256xf32>
    %27 = tpu.matmul %26, %25, %cst_12 {dimension_numbers = #tpu.dot_dimension_numbers<[1], [0], [0], [1], [0, 0, 1, 1], [], []>} : vector<32x1024xbf16>, vector<1024x256xbf16>, vector<32x256xf32> -> vector<32x256xf32>
    %28 = vector.broadcast %1 : vector<32x1xf32> to vector<32x256xf32>
    %29 = arith.addf %27, %28 : vector<32x256xf32>
    %cst_13 = arith.constant dense<0xFF800000> : vector<256xf32>
    %30 = vector.multi_reduction <maximumf>, %29, %cst_13 [0] : vector<32x256xf32> to vector<256xf32>
    %31 = vector.shape_cast %30 : vector<256xf32> to vector<1x256xf32>
    %32 = vector.broadcast %31 : vector<1x256xf32> to vector<32x256xf32>
    %33 = arith.subf %29, %32 : vector<32x256xf32>
    %34 = math.exp %33 : vector<32x256xf32>
    %cst_14 = arith.constant dense<0.000000e+00> : vector<256xf32>
    %35 = vector.multi_reduction <add>, %34, %cst_14 [0] : vector<32x256xf32> to vector<256xf32>
    %36 = vector.shape_cast %35 : vector<256xf32> to vector<1x256xf32>
    %37 = vector.broadcast %36 : vector<1x256xf32> to vector<32x256xf32>
    %38 = arith.divf %34, %37 : vector<32x256xf32>
    %cst_15 = arith.constant dense<0.000000e+00> : vector<16x256xf32>
    %39 = tpu.matmul %2, %38, %cst_15 {dimension_numbers = #tpu.dot_dimension_numbers<[1], [0], [0], [1], [0, 0, 1, 1], [], []>} : vector<16x32xf32>, vector<32x256xf32>, vector<16x256xf32> -> vector<16x256xf32>
    %40 = vector.extract_strided_slice %0 {offsets = [0, 0], sizes = [1, 256], strides = [1, 1]} : vector<3x256xf32> to vector<1x256xf32>
    %41 = vector.extract_strided_slice %39 {offsets = [0, 0], sizes = [3, 256], strides = [1, 1]} : vector<16x256xf32> to vector<3x256xf32>
    %42 = vector.broadcast %40 : vector<1x256xf32> to vector<3x256xf32>
    %43 = arith.mulf %42, %41 : vector<3x256xf32>
    %44 = arith.addf %0, %43 : vector<3x256xf32>
    %45 = vector.extract_strided_slice %0 {offsets = [1, 0], sizes = [1, 256], strides = [1, 1]} : vector<3x256xf32> to vector<1x256xf32>
    %46 = vector.extract_strided_slice %39 {offsets = [3, 0], sizes = [3, 256], strides = [1, 1]} : vector<16x256xf32> to vector<3x256xf32>
    %47 = vector.broadcast %45 : vector<1x256xf32> to vector<3x256xf32>
    %48 = arith.mulf %47, %46 : vector<3x256xf32>
    %49 = arith.addf %44, %48 : vector<3x256xf32>
    %50 = vector.extract_strided_slice %0 {offsets = [2, 0], sizes = [1, 256], strides = [1, 1]} : vector<3x256xf32> to vector<1x256xf32>
    %51 = vector.extract_strided_slice %39 {offsets = [6, 0], sizes = [3, 256], strides = [1, 1]} : vector<16x256xf32> to vector<3x256xf32>
    %52 = vector.broadcast %50 : vector<1x256xf32> to vector<3x256xf32>
    %53 = arith.mulf %52, %51 : vector<3x256xf32>
    %54 = arith.addf %49, %53 : vector<3x256xf32>
    %c0_16 = arith.constant 0 : index
    %c0_17 = arith.constant 0 : index
    %55 = vector.load %arg6[%c0_16, %c0_17] : memref<3x256xf32, #tpu.memory_space<vmem>>, vector<3x256xf32>
    tpu.vector_store %arg6[%c0_16, %c0_17], %54 {strides = array<i32>} : memref<3x256xf32, #tpu.memory_space<vmem>>, vector<3x256xf32>,
    return
  }
  func.func @transform_0(%arg0: i32) -> (i32, i32) {
    %c0_i32 = arith.constant 0 : i32
    %c0_i32_0 = arith.constant 0 : i32
    return %c0_i32, %arg0 : i32, i32
  }
  func.func @transform_1(%arg0: i32) -> (i32, i32) {
    %c0_i32 = arith.constant 0 : i32
    %c0_i32_0 = arith.constant 0 : i32
    %c0_i32_1 = arith.constant 0 : i32
    return %c0_i32, %c0_i32_0 : i32, i32
  }
  func.func @transform_2(%arg0: i32) -> (i32, i32) {
    %c0_i32 = arith.constant 0 : i32
    %c0_i32_0 = arith.constant 0 : i32
    %c0_i32_1 = arith.constant 0 : i32
    return %c0_i32, %c0_i32_0 : i32, i32
  }
  func.func @transform_3(%arg0: i32) -> (i32, i32) {
    %c0_i32 = arith.constant 0 : i32
    %c0_i32_0 = arith.constant 0 : i32
    %c0_i32_1 = arith.constant 0 : i32
    return %c0_i32, %c0_i32_0 : i32, i32
  }
  func.func @transform_4(%arg0: i32) -> (i32, i32) {
    %c0_i32 = arith.constant 0 : i32
    %c0_i32_0 = arith.constant 0 : i32
    %c0_i32_1 = arith.constant 0 : i32
    return %c0_i32, %c0_i32_0 : i32, i32
  }
  func.func @transform_5(%arg0: i32) -> (i32, i32) {
    %c0_i32 = arith.constant 0 : i32
    %c0_i32_0 = arith.constant 0 : i32
    return %c0_i32, %arg0 : i32, i32
  }
}

</mosaic_0001>

<llo_original>
// kernel: tpu_custom_call.1
$region0: #{tpu_custom_call.1}
  #allocation0 [shape = 'u32[]', space=smem, size = 0x4, offset = 0x4, fixed_abs, tag = 'smem constant byte address 0x4 - core index']
  #allocation1 [shape = 'u32[144,128]{1,0:T(1,128)}', space=vmem, size = 0x12000, scoped, tag = 'internal scratch']
  %s0 = inlined_call_operand.vmem [shape: f32[3,256], index: 0, kind: input, shape index: {}]
  %s1 = inlined_call_operand.vmem [shape: f32[1024,4], index: 1, kind: input, shape index: {}]
  %s2 = inlined_call_operand.vmem [shape: bf16[32,1024], index: 2, kind: input, shape index: {}]
  %s3 = inlined_call_operand.vmem [shape: f32[32,1], index: 3, kind: input, shape index: {}]
  %s4 = inlined_call_operand.vmem [shape: f32[16,32], index: 4, kind: input, shape index: {}]
  %s5 = inlined_call_operand.hbm [shape: f32[3,256], index: 5, kind: output, shape index: {}]
  %s6 = sld [smem:[#allocation0]]
  $region30: #{tpu_custom_call.1} parent=0
    _
  %s8 = ssub.s32 1, %s6
  %s9 = scalar_select 0, %s8, %s6
  $region1: #{tpu_custom_call.1} parent=0
    #allocation2 [shape = 'u8[4096]{0}', space=vmem, size = 0x1000, scoped, tag = 'output window, operand 0, single buffered']
    #allocation3 [shape = 's32[1]{0}', space=sflag, size = 0x4, scoped, tag = 'scoped memory for tpu_custom_call.1']
    %10 = vsyncpa [#allocation3], 0
    // Predicated region
    $region2: #{tpu_custom_call.1} parent=1 // pred_check
      _
    $region3: #{tpu_custom_call.1} parent=1 // pred_check_branch
      %12 = sbr.rel (0) target = $region5
    $region4: #{tpu_custom_call.1} parent=1 // pred_region
      _
    $region5: #{tpu_custom_call.1} parent=1 // pred_fallthru
      _
    // Predicated region
    $region6: #{tpu_custom_call.1} parent=1 // pred_check
      _
    $region7: #{tpu_custom_call.1} parent=1 // pred_check_branch
      %14 = sbr.rel (0) target = $region9
    $region8: #{tpu_custom_call.1} parent=1 // pred_region
      _
    $region9: #{tpu_custom_call.1} parent=1 // pred_fallthru
      _
    // Predicated region
    $region10: #{tpu_custom_call.1} parent=1 // pred_check
      _
    $region11: #{tpu_custom_call.1} parent=1 // pred_check_branch
      %16 = sbr.rel (0) target = $region13
    $region12: #{tpu_custom_call.1} parent=1 // pred_region
      _
    $region13: #{tpu_custom_call.1} parent=1 // pred_fallthru
      _
    // Predicated region
    $region14: #{tpu_custom_call.1} parent=1 // pred_check
      _
    $region15: #{tpu_custom_call.1} parent=1 // pred_check_branch
      %18 = sbr.rel (0) target = $region17
    $region16: #{tpu_custom_call.1} parent=1 // pred_region
      _
    $region17: #{tpu_custom_call.1} parent=1 // pred_fallthru
      _
    // Predicated region
    $region18: #{tpu_custom_call.1} parent=1 // pred_check
      _
    $region19: #{tpu_custom_call.1} parent=1 // pred_check_branch
      %20 = sbr.rel (0) target = $region21
    $region20: #{tpu_custom_call.1} parent=1 // pred_region
      _
    $region21: #{tpu_custom_call.1} parent=1 // pred_fallthru
      _
    %v21 = vld [vmem:[%s0] sm:$0x77]
    %v22 = vld [vmem:[%s3] sm:$0xff]
    %v23 = vld [vmem:[%s3 + $0x8] sm:$0xff]
    %v24 = vld [vmem:[%s3 + $0x10] sm:$0xff]
    %v25 = vld [vmem:[%s3 + $0x18] sm:$0xff]
    %v26 = vld [vmem:[%s4] sm:$0xff]
    %v27 = vld [vmem:[%s4 + $0x8] sm:$0xff]
    %v28 = vld [vmem:[%s1] sm:$0xff]
    %v29 = vld [vmem:[%s1 + $0x8] sm:$0xff]
    %v30 = vld [vmem:[%s1 + $0x10] sm:$0xff]
    %v31 = vld [vmem:[%s1 + $0x18] sm:$0xff]
    %v32 = vld [vmem:[%s1 + $0x20] sm:$0xff]
    %v33 = vld [vmem:[%s1 + $0x28] sm:$0xff]
    %v34 = vld [vmem:[%s1 + $0x30] sm:$0xff]
    %v35 = vld [vmem:[%s1 + $0x38] sm:$0xff]
    %v36 = vld [vmem:[%s1 + $0x40] sm:$0xff]
    %v37 = vld [vmem:[%s1 + $0x48] sm:$0xff]
    %v38 = vld [vmem:[%s1 + $0x50] sm:$0xff]
    %v39 = vld [vmem:[%s1 + $0x58] sm:$0xff]
    %v40 = vld [vmem:[%s1 + $0x60] sm:$0xff]
    %v41 = vld [vmem:[%s1 + $0x68] sm:$0xff]
    %v42 = vld [vmem:[%s1 + $0x70] sm:$0xff]
    %v43 = vld [vmem:[%s1 + $0x78] sm:$0xff]
    %v44 = vld [vmem:[%s1 + $0x80] sm:$0xff]
    %v45 = vld [vmem:[%s1 + $0x88] sm:$0xff]
    %v46 = vld [vmem:[%s1 + $0x90] sm:$0xff]
    %v47 = vld [vmem:[%s1 + $0x98] sm:$0xff]
    %v48 = vld [vmem:[%s1 + $0xa0] sm:$0xff]
    %v49 = vld [vmem:[%s1 + $0xa8] sm:$0xff]
    %v50 = vld [vmem:[%s1 + $0xb0] sm:$0xff]
    %v51 = vld [vmem:[%s1 + $0xb8] sm:$0xff]
    %v52 = vld [vmem:[%s1 + $0xc0] sm:$0xff]
    %v53 = vld [vmem:[%s1 + $0xc8] sm:$0xff]
    %v54 = vld [vmem:[%s1 + $0xd0] sm:$0xff]
    %v55 = vld [vmem:[%s1 + $0xd8] sm:$0xff]
    %v56 = vld [vmem:[%s1 + $0xe0] sm:$0xff]
    %v57 = vld [vmem:[%s1 + $0xe8] sm:$0xff]
    %v58 = vld [vmem:[%s1 + $0xf0] sm:$0xff]
    %v59 = vld [vmem:[%s1 + $0xf8] sm:$0xff]
    %v60 = vld [vmem:[%s1 + $0x100] sm:$0xff]
    %v61 = vld [vmem:[%s1 + $0x108] sm:$0xff]
    %v62 = vld [vmem:[%s1 + $0x110] sm:$0xff]
    %v63 = vld [vmem:[%s1 + $0x118] sm:$0xff]
    %v64 = vld [vmem:[%s1 + $0x120] sm:$0xff]
    %v65 = vld [vmem:[%s1 + $0x128] sm:$0xff]
    %v66 = vld [vmem:[%s1 + $0x130] sm:$0xff]
    %v67 = vld [vmem:[%s1 + $0x138] sm:$0xff]
    %v68 = vld [vmem:[%s1 + $0x140] sm:$0xff]
    %v69 = vld [vmem:[%s1 + $0x148] sm:$0xff]
    %v70 = vld [vmem:[%s1 + $0x150] sm:$0xff]
    %v71 = vld [vmem:[%s1 + $0x158] sm:$0xff]
    %v72 = vld [vmem:[%s1 + $0x160] sm:$0xff]
    %v73 = vld [vmem:[%s1 + $0x168] sm:$0xff]
    %v74 = vld [vmem:[%s1 + $0x170] sm:$0xff]
    %v75 = vld [vmem:[%s1 + $0x178] sm:$0xff]
    %v76 = vld [vmem:[%s1 + $0x180] sm:$0xff]
    %v77 = vld [vmem:[%s1 + $0x188] sm:$0xff]
    %v78 = vld [vmem:[%s1 + $0x190] sm:$0xff]
    %v79 = vld [vmem:[%s1 + $0x198] sm:$0xff]
    %v80 = vld [vmem:[%s1 + $0x1a0] sm:$0xff]
    %v81 = vld [vmem:[%s1 + $0x1a8] sm:$0xff]
    %v82 = vld [vmem:[%s1 + $0x1b0] sm:$0xff]
    %v83 = vld [vmem:[%s1 + $0x1b8] sm:$0xff]
    %v84 = vld [vmem:[%s1 + $0x1c0] sm:$0xff]
    %v85 = vld [vmem:[%s1 + $0x1c8] sm:$0xff]
    %v86 = vld [vmem:[%s1 + $0x1d0] sm:$0xff]
    %v87 = vld [vmem:[%s1 + $0x1d8] sm:$0xff]
    %v88 = vld [vmem:[%s1 + $0x1e0] sm:$0xff]
    %v89 = vld [vmem:[%s1 + $0x1e8] sm:$0xff]
    %v90 = vld [vmem:[%s1 + $0x1f0] sm:$0xff]
    %v91 = vld [vmem:[%s1 + $0x1f8] sm:$0xff]
    %v92 = vld [vmem:[%s1 + $0x200] sm:$0xff]
    %v93 = vld [vmem:[%s1 + $0x208] sm:$0xff]
    %v94 = vld [vmem:[%s1 + $0x210] sm:$0xff]
    %v95 = vld [vmem:[%s1 + $0x218] sm:$0xff]
    %v96 = vld [vmem:[%s1 + $0x220] sm:$0xff]
    %v97 = vld [vmem:[%s1 + $0x228] sm:$0xff]
    %v98 = vld [vmem:[%s1 + $0x230] sm:$0xff]
    %v99 = vld [vmem:[%s1 + $0x238] sm:$0xff]
    %v100 = vld [vmem:[%s1 + $0x240] sm:$0xff]
    %v101 = vld [vmem:[%s1 + $0x248] sm:$0xff]
    %v102 = vld [vmem:[%s1 + $0x250] sm:$0xff]
    %v103 = vld [vmem:[%s1 + $0x258] sm:$0xff]
    %v104 = vld [vmem:[%s1 + $0x260] sm:$0xff]
    %v105 = vld [vmem:[%s1 + $0x268] sm:$0xff]
    %v106 = vld [vmem:[%s1 + $0x270] sm:$0xff]
    %v107 = vld [vmem:[%s1 + $0x278] sm:$0xff]
    %v108 = vld [vmem:[%s1 + $0x280] sm:$0xff]
    %v109 = vld [vmem:[%s1 + $0x288] sm:$0xff]
    %v110 = vld [vmem:[%s1 + $0x290] sm:$0xff]
    %v111 = vld [vmem:[%s1 + $0x298] sm:$0xff]
    %v112 = vld [vmem:[%s1 + $0x2a0] sm:$0xff]
    %v113 = vld [vmem:[%s1 + $0x2a8] sm:$0xff]
    %v114 = vld [vmem:[%s1 + $0x2b0] sm:$0xff]
    %v115 = vld [vmem:[%s1 + $0x2b8] sm:$0xff]
    %v116 = vld [vmem:[%s1 + $0x2c0] sm:$0xff]
    %v117 = vld [vmem:[%s1 + $0x2c8] sm:$0xff]
    %v118 = vld [vmem:[%s1 + $0x2d0] sm:$0xff]
    %v119 = vld [vmem:[%s1 + $0x2d8] sm:$0xff]
    %v120 = vld [vmem:[%s1 + $0x2e0] sm:$0xff]
    %v121 = vld [vmem:[%s1 + $0x2e8] sm:$0xff]
    %v122 = vld [vmem:[%s1 + $0x2f0] sm:$0xff]
    %v123 = vld [vmem:[%s1 + $0x2f8] sm:$0xff]
    %v124 = vld [vmem:[%s1 + $0x300] sm:$0xff]
    %v125 = vld [vmem:[%s1 + $0x308] sm:$0xff]
    %v126 = vld [vmem:[%s1 + $0x310] sm:$0xff]
    %v127 = vld [vmem:[%s1 + $0x318] sm:$0xff]
    %v128 = vld [vmem:[%s1 + $0x320] sm:$0xff]
    %v129 = vld [vmem:[%s1 + $0x328] sm:$0xff]
    %v130 = vld [vmem:[%s1 + $0x330] sm:$0xff]
    %v131 = vld [vmem:[%s1 + $0x338] sm:$0xff]
    %v132 = vld [vmem:[%s1 + $0x340] sm:$0xff]
    %v133 = vld [vmem:[%s1 + $0x348] sm:$0xff]
    %v134 = vld [vmem:[%s1 + $0x350] sm:$0xff]
    %v135 = vld [vmem:[%s1 + $0x358] sm:$0xff]
    %v136 = vld [vmem:[%s1 + $0x360] sm:$0xff]
    %v137 = vld [vmem:[%s1 + $0x368] sm:$0xff]
    %v138 = vld [vmem:[%s1 + $0x370] sm:$0xff]
    %v139 = vld [vmem:[%s1 + $0x378] sm:$0xff]
    %v140 = vld [vmem:[%s1 + $0x380] sm:$0xff]
    %v141 = vld [vmem:[%s1 + $0x388] sm:$0xff]
    %v142 = vld [vmem:[%s1 + $0x390] sm:$0xff]
    %v143 = vld [vmem:[%s1 + $0x398] sm:$0xff]
    %v144 = vld [vmem:[%s1 + $0x3a0] sm:$0xff]
    %v145 = vld [vmem:[%s1 + $0x3a8] sm:$0xff]
    %v146 = vld [vmem:[%s1 + $0x3b0] sm:$0xff]
    %v147 = vld [vmem:[%s1 + $0x3b8] sm:$0xff]
    %v148 = vld [vmem:[%s1 + $0x3c0] sm:$0xff]
    %v149 = vld [vmem:[%s1 + $0x3c8] sm:$0xff]
    %v150 = vld [vmem:[%s1 + $0x3d0] sm:$0xff]
    %v151 = vld [vmem:[%s1 + $0x3d8] sm:$0xff]
    %v152 = vld [vmem:[%s1 + $0x3e0] sm:$0xff]
    %v153 = vld [vmem:[%s1 + $0x3e8] sm:$0xff]
    %v154 = vld [vmem:[%s1 + $0x3f0] sm:$0xff]
    %v155 = vld [vmem:[%s1 + $0x3f8] sm:$0xff]
    %157 = vset.pattern.permute.xlu0 0
    %158 = vperm.xlu0 %157, %v28
    %v159 = vpop.permute.xlu0 %158
    %162 = vset.pattern.permute.xlu0 0
    %163 = vperm.xlu0 %162, %v29
    %v164 = vpop.permute.xlu0 %163
    %167 = vset.pattern.permute.xlu0 0
    %168 = vperm.xlu0 %167, %v30
    %v169 = vpop.permute.xlu0 %168
    %172 = vset.pattern.permute.xlu0 0
    %173 = vperm.xlu0 %172, %v31
    %v174 = vpop.permute.xlu0 %173
    %177 = vset.pattern.permute.xlu0 0
    %178 = vperm.xlu0 %177, %v32
    %v179 = vpop.permute.xlu0 %178
    %182 = vset.pattern.permute.xlu0 0
    %183 = vperm.xlu0 %182, %v33
    %v184 = vpop.permute.xlu0 %183
    %187 = vset.pattern.permute.xlu0 0
    %188 = vperm.xlu0 %187, %v34
    %v189 = vpop.permute.xlu0 %188
    %192 = vset.pattern.permute.xlu0 0
    %193 = vperm.xlu0 %192, %v35
    %v194 = vpop.permute.xlu0 %193
    %197 = vset.pattern.permute.xlu0 0
    %198 = vperm.xlu0 %197, %v36
    %v199 = vpop.permute.xlu0 %198
    %202 = vset.pattern.permute.xlu0 0
    %203 = vperm.xlu0 %202, %v37
    %v204 = vpop.permute.xlu0 %203
    %207 = vset.pattern.permute.xlu0 0
    %208 = vperm.xlu0 %207, %v38
    %v209 = vpop.permute.xlu0 %208
    %212 = vset.pattern.permute.xlu0 0
    %213 = vperm.xlu0 %212, %v39
    %v214 = vpop.permute.xlu0 %213
    %217 = vset.pattern.permute.xlu0 0
    %218 = vperm.xlu0 %217, %v40
    %v219 = vpop.permute.xlu0 %218
    %222 = vset.pattern.permute.xlu0 0
    %223 = vperm.xlu0 %222, %v41
    %v224 = vpop.permute.xlu0 %223
    %227 = vset.pattern.permute.xlu0 0
    %228 = vperm.xlu0 %227, %v42
    %v229 = vpop.permute.xlu0 %228
    %232 = vset.pattern.permute.xlu0 0
    %233 = vperm.xlu0 %232, %v43
    %v234 = vpop.permute.xlu0 %233
    %237 = vset.pattern.permute.xlu0 0
    %238 = vperm.xlu0 %237, %v44
    %v239 = vpop.permute.xlu0 %238
    %242 = vset.pattern.permute.xlu0 0
    %243 = vperm.xlu0 %242, %v45
    %v244 = vpop.permute.xlu0 %243
    %247 = vset.pattern.permute.xlu0 0
    %248 = vperm.xlu0 %247, %v46
    %v249 = vpop.permute.xlu0 %248
    %252 = vset.pattern.permute.xlu0 0
    %253 = vperm.xlu0 %252, %v47
    %v254 = vpop.permute.xlu0 %253
    %257 = vset.pattern.permute.xlu0 0
    %258 = vperm.xlu0 %257, %v48
    %v259 = vpop.permute.xlu0 %258
    %262 = vset.pattern.permute.xlu0 0
    %263 = vperm.xlu0 %262, %v49
    %v264 = vpop.permute.xlu0 %263
    %267 = vset.pattern.permute.xlu0 0
    %268 = vperm.xlu0 %267, %v50
    %v269 = vpop.permute.xlu0 %268
    %272 = vset.pattern.permute.xlu0 0
    %273 = vperm.xlu0 %272, %v51
    %v274 = vpop.permute.xlu0 %273
    %277 = vset.pattern.permute.xlu0 0
    %278 = vperm.xlu0 %277, %v52
    %v279 = vpop.permute.xlu0 %278
    %282 = vset.pattern.permute.xlu0 0
    %283 = vperm.xlu0 %282, %v53
    %v284 = vpop.permute.xlu0 %283
    %287 = vset.pattern.permute.xlu0 0
    %288 = vperm.xlu0 %287, %v54
    %v289 = vpop.permute.xlu0 %288
    %292 = vset.pattern.permute.xlu0 0
    %293 = vperm.xlu0 %292, %v55
    %v294 = vpop.permute.xlu0 %293
    %297 = vset.pattern.permute.xlu0 0
    %298 = vperm.xlu0 %297, %v56
    %v299 = vpop.permute.xlu0 %298
    %302 = vset.pattern.permute.xlu0 0
    %303 = vperm.xlu0 %302, %v57
    %v304 = vpop.permute.xlu0 %303
    %307 = vset.pattern.permute.xlu0 0
    %308 = vperm.xlu0 %307, %v58
    %v309 = vpop.permute.xlu0 %308
    %312 = vset.pattern.permute.xlu0 0
    %313 = vperm.xlu0 %312, %v59
    %v314 = vpop.permute.xlu0 %313
    %317 = vset.pattern.permute.xlu0 0
    %318 = vperm.xlu0 %317, %v60
    %v319 = vpop.permute.xlu0 %318
    %322 = vset.pattern.permute.xlu0 0
    %323 = vperm.xlu0 %322, %v61
    %v324 = vpop.permute.xlu0 %323
    %327 = vset.pattern.permute.xlu0 0
    %328 = vperm.xlu0 %327, %v62
    %v329 = vpop.permute.xlu0 %328
    %332 = vset.pattern.permute.xlu0 0
    %333 = vperm.xlu0 %332, %v63
    %v334 = vpop.permute.xlu0 %333
    %337 = vset.pattern.permute.xlu0 0
    %338 = vperm.xlu0 %337, %v64
    %v339 = vpop.permute.xlu0 %338
    %342 = vset.pattern.permute.xlu0 0
    %343 = vperm.xlu0 %342, %v65
    %v344 = vpop.permute.xlu0 %343
    %347 = vset.pattern.permute.xlu0 0
    %348 = vperm.xlu0 %347, %v66
    %v349 = vpop.permute.xlu0 %348
    %352 = vset.pattern.permute.xlu0 0
    %353 = vperm.xlu0 %352, %v67
    %v354 = vpop.permute.xlu0 %353
    %357 = vset.pattern.permute.xlu0 0
    %358 = vperm.xlu0 %357, %v68
    %v359 = vpop.permute.xlu0 %358
    %362 = vset.pattern.permute.xlu0 0
    %363 = vperm.xlu0 %362, %v69
    %v364 = vpop.permute.xlu0 %363
    %367 = vset.pattern.permute.xlu0 0
    %368 = vperm.xlu0 %367, %v70
    %v369 = vpop.permute.xlu0 %368
    %372 = vset.pattern.permute.xlu0 0
    %373 = vperm.xlu0 %372, %v71
    %v374 = vpop.permute.xlu0 %373
    %377 = vset.pattern.permute.xlu0 0
    %378 = vperm.xlu0 %377, %v72
    %v379 = vpop.permute.xlu0 %378
    %382 = vset.pattern.permute.xlu0 0
    %383 = vperm.xlu0 %382, %v73
    %v384 = vpop.permute.xlu0 %383
    %387 = vset.pattern.permute.xlu0 0
    %388 = vperm.xlu0 %387, %v74
    %v389 = vpop.permute.xlu0 %388
    %392 = vset.pattern.permute.xlu0 0
    %393 = vperm.xlu0 %392, %v75
    %v394 = vpop.permute.xlu0 %393
    %397 = vset.pattern.permute.xlu0 0
    %398 = vperm.xlu0 %397, %v76
    %v399 = vpop.permute.xlu0 %398
    %402 = vset.pattern.permute.xlu0 0
    %403 = vperm.xlu0 %402, %v77
    %v404 = vpop.permute.xlu0 %403
    %407 = vset.pattern.permute.xlu0 0
    %408 = vperm.xlu0 %407, %v78
    %v409 = vpop.permute.xlu0 %408
    %412 = vset.pattern.permute.xlu0 0
    %413 = vperm.xlu0 %412, %v79
    %v414 = vpop.permute.xlu0 %413
    %417 = vset.pattern.permute.xlu0 0
    %418 = vperm.xlu0 %417, %v80
    %v419 = vpop.permute.xlu0 %418
    %422 = vset.pattern.permute.xlu0 0
    %423 = vperm.xlu0 %422, %v81
    %v424 = vpop.permute.xlu0 %423
    %427 = vset.pattern.permute.xlu0 0
    %428 = vperm.xlu0 %427, %v82
    %v429 = vpop.permute.xlu0 %428
    %432 = vset.pattern.permute.xlu0 0
    %433 = vperm.xlu0 %432, %v83
    %v434 = vpop.permute.xlu0 %433
    %437 = vset.pattern.permute.xlu0 0
    %438 = vperm.xlu0 %437, %v84
    %v439 = vpop.permute.xlu0 %438
    %442 = vset.pattern.permute.xlu0 0
    %443 = vperm.xlu0 %442, %v85
    %v444 = vpop.permute.xlu0 %443
    %447 = vset.pattern.permute.xlu0 0
    %448 = vperm.xlu0 %447, %v86
    %v449 = vpop.permute.xlu0 %448
    %452 = vset.pattern.permute.xlu0 0
    %453 = vperm.xlu0 %452, %v87
    %v454 = vpop.permute.xlu0 %453
    %457 = vset.pattern.permute.xlu0 0
    %458 = vperm.xlu0 %457, %v88
    %v459 = vpop.permute.xlu0 %458
    %462 = vset.pattern.permute.xlu0 0
    %463 = vperm.xlu0 %462, %v89
    %v464 = vpop.permute.xlu0 %463
    %467 = vset.pattern.permute.xlu0 0
    %468 = vperm.xlu0 %467, %v90
    %v469 = vpop.permute.xlu0 %468
    %472 = vset.pattern.permute.xlu0 0
    %473 = vperm.xlu0 %472, %v91
    %v474 = vpop.permute.xlu0 %473
    %477 = vset.pattern.permute.xlu0 0
    %478 = vperm.xlu0 %477, %v92
    %v479 = vpop.permute.xlu0 %478
    %482 = vset.pattern.permute.xlu0 0
    %483 = vperm.xlu0 %482, %v93
    %v484 = vpop.permute.xlu0 %483
    %487 = vset.pattern.permute.xlu0 0
    %488 = vperm.xlu0 %487, %v94
    %v489 = vpop.permute.xlu0 %488
    %492 = vset.pattern.permute.xlu0 0
    %493 = vperm.xlu0 %492, %v95
    %v494 = vpop.permute.xlu0 %493
    %497 = vset.pattern.permute.xlu0 0
    %498 = vperm.xlu0 %497, %v96
    %v499 = vpop.permute.xlu0 %498
    %502 = vset.pattern.permute.xlu0 0
    %503 = vperm.xlu0 %502, %v97
    %v504 = vpop.permute.xlu0 %503
    %507 = vset.pattern.permute.xlu0 0
    %508 = vperm.xlu0 %507, %v98
    %v509 = vpop.permute.xlu0 %508
    %512 = vset.pattern.permute.xlu0 0
    %513 = vperm.xlu0 %512, %v99
    %v514 = vpop.permute.xlu0 %513
    %517 = vset.pattern.permute.xlu0 0
    %518 = vperm.xlu0 %517, %v100
    %v519 = vpop.permute.xlu0 %518
    %522 = vset.pattern.permute.xlu0 0
    %523 = vperm.xlu0 %522, %v101
    %v524 = vpop.permute.xlu0 %523
    %527 = vset.pattern.permute.xlu0 0
    %528 = vperm.xlu0 %527, %v102
    %v529 = vpop.permute.xlu0 %528
    %532 = vset.pattern.permute.xlu0 0
    %533 = vperm.xlu0 %532, %v103
    %v534 = vpop.permute.xlu0 %533
    %537 = vset.pattern.permute.xlu0 0
    %538 = vperm.xlu0 %537, %v104
    %v539 = vpop.permute.xlu0 %538
    %542 = vset.pattern.permute.xlu0 0
    %543 = vperm.xlu0 %542, %v105
    %v544 = vpop.permute.xlu0 %543
    %547 = vset.pattern.permute.xlu0 0
    %548 = vperm.xlu0 %547, %v106
    %v549 = vpop.permute.xlu0 %548
    %552 = vset.pattern.permute.xlu0 0
    %553 = vperm.xlu0 %552, %v107
    %v554 = vpop.permute.xlu0 %553
    %557 = vset.pattern.permute.xlu0 0
    %558 = vperm.xlu0 %557, %v108
    %v559 = vpop.permute.xlu0 %558
    %562 = vset.pattern.permute.xlu0 0
    %563 = vperm.xlu0 %562, %v109
    %v564 = vpop.permute.xlu0 %563
    %567 = vset.pattern.permute.xlu0 0
    %568 = vperm.xlu0 %567, %v110
    %v569 = vpop.permute.xlu0 %568
    %572 = vset.pattern.permute.xlu0 0
    %573 = vperm.xlu0 %572, %v111
    %v574 = vpop.permute.xlu0 %573
    %577 = vset.pattern.permute.xlu0 0
    %578 = vperm.xlu0 %577, %v112
    %v579 = vpop.permute.xlu0 %578
    %582 = vset.pattern.permute.xlu0 0
    %583 = vperm.xlu0 %582, %v113
    %v584 = vpop.permute.xlu0 %583
    %587 = vset.pattern.permute.xlu0 0
    %588 = vperm.xlu0 %587, %v114
    %v589 = vpop.permute.xlu0 %588
    %592 = vset.pattern.permute.xlu0 0
    %593 = vperm.xlu0 %592, %v115
    %v594 = vpop.permute.xlu0 %593
    %597 = vset.pattern.permute.xlu0 0
    %598 = vperm.xlu0 %597, %v116
    %v599 = vpop.permute.xlu0 %598
    %602 = vset.pattern.permute.xlu0 0
    %603 = vperm.xlu0 %602, %v117
    %v604 = vpop.permute.xlu0 %603
    %607 = vset.pattern.permute.xlu0 0
    %608 = vperm.xlu0 %607, %v118
    %v609 = vpop.permute.xlu0 %608
    %612 = vset.pattern.permute.xlu0 0
    %613 = vperm.xlu0 %612, %v119
    %v614 = vpop.permute.xlu0 %613
    %617 = vset.pattern.permute.xlu0 0
    %618 = vperm.xlu0 %617, %v120
    %v619 = vpop.permute.xlu0 %618
    %622 = vset.pattern.permute.xlu0 0
    %623 = vperm.xlu0 %622, %v121
    %v624 = vpop.permute.xlu0 %623
    %627 = vset.pattern.permute.xlu0 0
    %628 = vperm.xlu0 %627, %v122
    %v629 = vpop.permute.xlu0 %628
    %632 = vset.pattern.permute.xlu0 0
    %633 = vperm.xlu0 %632, %v123
    %v634 = vpop.permute.xlu0 %633
    %637 = vset.pattern.permute.xlu0 0
    %638 = vperm.xlu0 %637, %v124
    %v639 = vpop.permute.xlu0 %638
    %642 = vset.pattern.permute.xlu0 0
    %643 = vperm.xlu0 %642, %v125
    %v644 = vpop.permute.xlu0 %643
    %647 = vset.pattern.permute.xlu0 0
    %648 = vperm.xlu0 %647, %v126
    %v649 = vpop.permute.xlu0 %648
    %652 = vset.pattern.permute.xlu0 0
    %653 = vperm.xlu0 %652, %v127
    %v654 = vpop.permute.xlu0 %653
    %657 = vset.pattern.permute.xlu0 0
    %658 = vperm.xlu0 %657, %v128
    %v659 = vpop.permute.xlu0 %658
    %662 = vset.pattern.permute.xlu0 0
    %663 = vperm.xlu0 %662, %v129
    %v664 = vpop.permute.xlu0 %663
    %667 = vset.pattern.permute.xlu0 0
    %668 = vperm.xlu0 %667, %v130
    %v669 = vpop.permute.xlu0 %668
    %672 = vset.pattern.permute.xlu0 0
    %673 = vperm.xlu0 %672, %v131
    %v674 = vpop.permute.xlu0 %673
    %677 = vset.pattern.permute.xlu0 0
    %678 = vperm.xlu0 %677, %v132
    %v679 = vpop.permute.xlu0 %678
    %682 = vset.pattern.permute.xlu0 0
    %683 = vperm.xlu0 %682, %v133
    %v684 = vpop.permute.xlu0 %683
    %687 = vset.pattern.permute.xlu0 0
    %688 = vperm.xlu0 %687, %v134
    %v689 = vpop.permute.xlu0 %688
    %692 = vset.pattern.permute.xlu0 0
    %693 = vperm.xlu0 %692, %v135
    %v694 = vpop.permute.xlu0 %693
    %697 = vset.pattern.permute.xlu0 0
    %698 = vperm.xlu0 %697, %v136
    %v699 = vpop.permute.xlu0 %698
    %702 = vset.pattern.permute.xlu0 0
    %703 = vperm.xlu0 %702, %v137
    %v704 = vpop.permute.xlu0 %703
    %707 = vset.pattern.permute.xlu0 0
    %708 = vperm.xlu0 %707, %v138
    %v709 = vpop.permute.xlu0 %708
    %712 = vset.pattern.permute.xlu0 0
    %713 = vperm.xlu0 %712, %v139
    %v714 = vpop.permute.xlu0 %713
    %717 = vset.pattern.permute.xlu0 0
    %718 = vperm.xlu0 %717, %v140
    %v719 = vpop.permute.xlu0 %718
    %722 = vset.pattern.permute.xlu0 0
    %723 = vperm.xlu0 %722, %v141
    %v724 = vpop.permute.xlu0 %723
    %727 = vset.pattern.permute.xlu0 0
    %728 = vperm.xlu0 %727, %v142
    %v729 = vpop.permute.xlu0 %728
    %732 = vset.pattern.permute.xlu0 0
    %733 = vperm.xlu0 %732, %v143
    %v734 = vpop.permute.xlu0 %733
    %737 = vset.pattern.permute.xlu0 0
    %738 = vperm.xlu0 %737, %v144
    %v739 = vpop.permute.xlu0 %738
    %742 = vset.pattern.permute.xlu0 0
    %743 = vperm.xlu0 %742, %v145
    %v744 = vpop.permute.xlu0 %743
    %747 = vset.pattern.permute.xlu0 0
    %748 = vperm.xlu0 %747, %v146
    %v749 = vpop.permute.xlu0 %748
    %752 = vset.pattern.permute.xlu0 0
    %753 = vperm.xlu0 %752, %v147
    %v754 = vpop.permute.xlu0 %753
    %757 = vset.pattern.permute.xlu0 0
    %758 = vperm.xlu0 %757, %v148
    %v759 = vpop.permute.xlu0 %758
    %762 = vset.pattern.permute.xlu0 0
    %763 = vperm.xlu0 %762, %v149
    %v764 = vpop.permute.xlu0 %763
    %767 = vset.pattern.permute.xlu0 0
    %768 = vperm.xlu0 %767, %v150
    %v769 = vpop.permute.xlu0 %768
    %772 = vset.pattern.permute.xlu0 0
    %773 = vperm.xlu0 %772, %v151
    %v774 = vpop.permute.xlu0 %773
    %777 = vset.pattern.permute.xlu0 0
    %778 = vperm.xlu0 %777, %v152
    %v779 = vpop.permute.xlu0 %778
    %782 = vset.pattern.permute.xlu0 0
    %783 = vperm.xlu0 %782, %v153
    %v784 = vpop.permute.xlu0 %783
    %787 = vset.pattern.permute.xlu0 0
    %788 = vperm.xlu0 %787, %v154
    %v789 = vpop.permute.xlu0 %788
    %792 = vset.pattern.permute.xlu0 0
    %793 = vperm.xlu0 %792, %v155
    %v794 = vpop.permute.xlu0 %793
    %v797 = vlaneseq
    %v798 = vshrl.u32 %v797, 7
    %v799 = vsub.s32 0, %v798
    %v800 = vrot.slane %v21, %v799
    %v801 = vlaneseq
    %v802 = vshrl.u32 %v801, 7
    %v803 = vsub.s32 4, %v802
    %v804 = vrot.slane %v21, %v803
    %v807 = vlaneseq
    %v808 = vshrl.u32 %v807, 7
    %v809 = vsub.s32 0, %v808
    %v810 = vrot.slane %v800, %v809
    %v811 = vlaneseq
    %v812 = vshrl.u32 %v811, 7
    %v813 = vsub.s32 0, %v812
    %v814 = vrot.slane %v804, %v813
    %v815 = vmul.f32 %v159, %v810
    %v816 = vmul.f32 %v159, %v814
    %v817 = vmul.f32 %v164, %v810
    %v818 = vmul.f32 %v164, %v814
    %v819 = vmul.f32 %v169, %v810
    %v820 = vmul.f32 %v169, %v814
    %v821 = vmul.f32 %v174, %v810
    %v822 = vmul.f32 %v174, %v814
    %v823 = vmul.f32 %v179, %v810
    %v824 = vmul.f32 %v179, %v814
    %v825 = vmul.f32 %v184, %v810
    %v826 = vmul.f32 %v184, %v814
    %v827 = vmul.f32 %v189, %v810
    %v828 = vmul.f32 %v189, %v814
    %v829 = vmul.f32 %v194, %v810
    %v830 = vmul.f32 %v194, %v814
    %v831 = vmul.f32 %v199, %v810
    %v832 = vmul.f32 %v199, %v814
    %v833 = vmul.f32 %v204, %v810
    %v834 = vmul.f32 %v204, %v814
    %v835 = vmul.f32 %v209, %v810
    %v836 = vmul.f32 %v209, %v814
    %v837 = vmul.f32 %v214, %v810
    %v838 = vmul.f32 %v214, %v814
    %v839 = vmul.f32 %v219, %v810
    %v840 = vmul.f32 %v219, %v814
    %v841 = vmul.f32 %v224, %v810
    %v842 = vmul.f32 %v224, %v814
    %v843 = vmul.f32 %v229, %v810
    %v844 = vmul.f32 %v229, %v814
    %v845 = vmul.f32 %v234, %v810
    %v846 = vmul.f32 %v234, %v814
    %v847 = vmul.f32 %v239, %v810
    %v848 = vmul.f32 %v239, %v814
    %v849 = vmul.f32 %v244, %v810
    %v850 = vmul.f32 %v244, %v814
    %v851 = vmul.f32 %v249, %v810
    %v852 = vmul.f32 %v249, %v814
    %v853 = vmul.f32 %v254, %v810
    %v854 = vmul.f32 %v254, %v814
    %v855 = vmul.f32 %v259, %v810
    %v856 = vmul.f32 %v259, %v814
    %v857 = vmul.f32 %v264, %v810
    %v858 = vmul.f32 %v264, %v814
    %v859 = vmul.f32 %v269, %v810
    %v860 = vmul.f32 %v269, %v814
    %v861 = vmul.f32 %v274, %v810
    %v862 = vmul.f32 %v274, %v814
    %v863 = vmul.f32 %v279, %v810
    %v864 = vmul.f32 %v279, %v814
    %v865 = vmul.f32 %v284, %v810
    %v866 = vmul.f32 %v284, %v814
    %v867 = vmul.f32 %v289, %v810
    %v868 = vmul.f32 %v289, %v814
    %v869 = vmul.f32 %v294, %v810
    %v870 = vmul.f32 %v294, %v814
    %v871 = vmul.f32 %v299, %v810
    %v872 = vmul.f32 %v299, %v814
    %v873 = vmul.f32 %v304, %v810
    %v874 = vmul.f32 %v304, %v814
    %v875 = vmul.f32 %v309, %v810
    %v876 = vmul.f32 %v309, %v814
    %v877 = vmul.f32 %v314, %v810
    %v878 = vmul.f32 %v314, %v814
    %v879 = vmul.f32 %v319, %v810
    %v880 = vmul.f32 %v319, %v814
    %v881 = vmul.f32 %v324, %v810
    %v882 = vmul.f32 %v324, %v814
    %v883 = vmul.f32 %v329, %v810
    %v884 = vmul.f32 %v329, %v814
    %v885 = vmul.f32 %v334, %v810
    %v886 = vmul.f32 %v334, %v814
    %v887 = vmul.f32 %v339, %v810
    %v888 = vmul.f32 %v339, %v814
    %v889 = vmul.f32 %v344, %v810
    %v890 = vmul.f32 %v344, %v814
    %v891 = vmul.f32 %v349, %v810
    %v892 = vmul.f32 %v349, %v814
    %v893 = vmul.f32 %v354, %v810
    %v894 = vmul.f32 %v354, %v814
    %v895 = vmul.f32 %v359, %v810
    %v896 = vmul.f32 %v359, %v814
    %v897 = vmul.f32 %v364, %v810
    %v898 = vmul.f32 %v364, %v814
    %v899 = vmul.f32 %v369, %v810
    %v900 = vmul.f32 %v369, %v814
    %v901 = vmul.f32 %v374, %v810
    %v902 = vmul.f32 %v374, %v814
    %v903 = vmul.f32 %v379, %v810
    %v904 = vmul.f32 %v379, %v814
    %v905 = vmul.f32 %v384, %v810
    %v906 = vmul.f32 %v384, %v814
    %v907 = vmul.f32 %v389, %v810
    %v908 = vmul.f32 %v389, %v814
    %v909 = vmul.f32 %v394, %v810
    %v910 = vmul.f32 %v394, %v814
    %v911 = vmul.f32 %v399, %v810
    %v912 = vmul.f32 %v399, %v814
    %v913 = vmul.f32 %v404, %v810
    %v914 = vmul.f32 %v404, %v814
    %v915 = vmul.f32 %v409, %v810
    %v916 = vmul.f32 %v409, %v814
    %v917 = vmul.f32 %v414, %v810
    %v918 = vmul.f32 %v414, %v814
    %v919 = vmul.f32 %v419, %v810
    %v920 = vmul.f32 %v419, %v814
    %v921 = vmul.f32 %v424, %v810
    %v922 = vmul.f32 %v424, %v814
    %v923 = vmul.f32 %v429, %v810
    %v924 = vmul.f32 %v429, %v814
    %v925 = vmul.f32 %v434, %v810
    %v926 = vmul.f32 %v434, %v814
    %v927 = vmul.f32 %v439, %v810
    %v928 = vmul.f32 %v439, %v814
    %v929 = vmul.f32 %v444, %v810
    %v930 = vmul.f32 %v444, %v814
    %v931 = vmul.f32 %v449, %v810
    %v932 = vmul.f32 %v449, %v814
    %v933 = vmul.f32 %v454, %v810
    %v934 = vmul.f32 %v454, %v814
    %v935 = vmul.f32 %v459, %v810
    %v936 = vmul.f32 %v459, %v814
    %v937 = vmul.f32 %v464, %v810
    %v938 = vmul.f32 %v464, %v814
    %v939 = vmul.f32 %v469, %v810
    %v940 = vmul.f32 %v469, %v814
    %v941 = vmul.f32 %v474, %v810
    %v942 = vmul.f32 %v474, %v814
    %v943 = vmul.f32 %v479, %v810
    %v944 = vmul.f32 %v479, %v814
    %v945 = vmul.f32 %v484, %v810
    %v946 = vmul.f32 %v484, %v814
    %v947 = vmul.f32 %v489, %v810
    %v948 = vmul.f32 %v489, %v814
    %v949 = vmul.f32 %v494, %v810
    %v950 = vmul.f32 %v494, %v814
    %v951 = vmul.f32 %v499, %v810
    %v952 = vmul.f32 %v499, %v814
    %v953 = vmul.f32 %v504, %v810
    %v954 = vmul.f32 %v504, %v814
    %v955 = vmul.f32 %v509, %v810
    %v956 = vmul.f32 %v509, %v814
    %v957 = vmul.f32 %v514, %v810
    %v958 = vmul.f32 %v514, %v814
    %v959 = vmul.f32 %v519, %v810
    %v960 = vmul.f32 %v519, %v814
    %v961 = vmul.f32 %v524, %v810
    %v962 = vmul.f32 %v524, %v814
    %v963 = vmul.f32 %v529, %v810
    %v964 = vmul.f32 %v529, %v814
    %v965 = vmul.f32 %v534, %v810
    %v966 = vmul.f32 %v534, %v814
    %v967 = vmul.f32 %v539, %v810
    %v968 = vmul.f32 %v539, %v814
    %v969 = vmul.f32 %v544, %v810
    %v970 = vmul.f32 %v544, %v814
    %v971 = vmul.f32 %v549, %v810
    %v972 = vmul.f32 %v549, %v814
    %v973 = vmul.f32 %v554, %v810
    %v974 = vmul.f32 %v554, %v814
    %v975 = vmul.f32 %v559, %v810
    %v976 = vmul.f32 %v559, %v814
    %v977 = vmul.f32 %v564, %v810
    %v978 = vmul.f32 %v564, %v814
    %v979 = vmul.f32 %v569, %v810
    %v980 = vmul.f32 %v569, %v814
    %v981 = vmul.f32 %v574, %v810
    %v982 = vmul.f32 %v574, %v814
    %v983 = vmul.f32 %v579, %v810
    %v984 = vmul.f32 %v579, %v814
    %v985 = vmul.f32 %v584, %v810
    %v986 = vmul.f32 %v584, %v814
    %v987 = vmul.f32 %v589, %v810
    %v988 = vmul.f32 %v589, %v814
    %v989 = vmul.f32 %v594, %v810
    %v990 = vmul.f32 %v594, %v814
    %v991 = vmul.f32 %v599, %v810
    %v992 = vmul.f32 %v599, %v814
    %v993 = vmul.f32 %v604, %v810
    %v994 = vmul.f32 %v604, %v814
    %v995 = vmul.f32 %v609, %v810
    %v996 = vmul.f32 %v609, %v814
    %v997 = vmul.f32 %v614, %v810
    %v998 = vmul.f32 %v614, %v814
    %v999 = vmul.f32 %v619, %v810
    %v1000 = vmul.f32 %v619, %v814
    %v1001 = vmul.f32 %v624, %v810
    %v1002 = vmul.f32 %v624, %v814
    %v1003 = vmul.f32 %v629, %v810
    %v1004 = vmul.f32 %v629, %v814
    %v1005 = vmul.f32 %v634, %v810
    %v1006 = vmul.f32 %v634, %v814
    %v1007 = vmul.f32 %v639, %v810
    %v1008 = vmul.f32 %v639, %v814
    %v1009 = vmul.f32 %v644, %v810
    %v1010 = vmul.f32 %v644, %v814
    %v1011 = vmul.f32 %v649, %v810
    %v1012 = vmul.f32 %v649, %v814
    %v1013 = vmul.f32 %v654, %v810
    %v1014 = vmul.f32 %v654, %v814
    %v1015 = vmul.f32 %v659, %v810
    %v1016 = vmul.f32 %v659, %v814
    %v1017 = vmul.f32 %v664, %v810
    %v1018 = vmul.f32 %v664, %v814
    %v1019 = vmul.f32 %v669, %v810
    %v1020 = vmul.f32 %v669, %v814
    %v1021 = vmul.f32 %v674, %v810
    %v1022 = vmul.f32 %v674, %v814
    %v1023 = vmul.f32 %v679, %v810
    %v1024 = vmul.f32 %v679, %v814
    %v1025 = vmul.f32 %v684, %v810
    %v1026 = vmul.f32 %v684, %v814
    %v1027 = vmul.f32 %v689, %v810
    %v1028 = vmul.f32 %v689, %v814
    %v1029 = vmul.f32 %v694, %v810
    %v1030 = vmul.f32 %v694, %v814
    %v1031 = vmul.f32 %v699, %v810
    %v1032 = vmul.f32 %v699, %v814
    %v1033 = vmul.f32 %v704, %v810
    %v1034 = vmul.f32 %v704, %v814
    %v1035 = vmul.f32 %v709, %v810
    %v1036 = vmul.f32 %v709, %v814
    %v1037 = vmul.f32 %v714, %v810
    %v1038 = vmul.f32 %v714, %v814
    %v1039 = vmul.f32 %v719, %v810
    %v1040 = vmul.f32 %v719, %v814
    %v1041 = vmul.f32 %v724, %v810
    %v1042 = vmul.f32 %v724, %v814
    %v1043 = vmul.f32 %v729, %v810
    %v1044 = vmul.f32 %v729, %v814
    %v1045 = vmul.f32 %v734, %v810
    %v1046 = vmul.f32 %v734, %v814
    %v1047 = vmul.f32 %v739, %v810
    %v1048 = vmul.f32 %v739, %v814
    %v1049 = vmul.f32 %v744, %v810
    %v1050 = vmul.f32 %v744, %v814
    %v1051 = vmul.f32 %v749, %v810
    %v1052 = vmul.f32 %v749, %v814
    %v1053 = vmul.f32 %v754, %v810
    %v1054 = vmul.f32 %v754, %v814
    %v1055 = vmul.f32 %v759, %v810
    %v1056 = vmul.f32 %v759, %v814
    %v1057 = vmul.f32 %v764, %v810
    %v1058 = vmul.f32 %v764, %v814
    %v1059 = vmul.f32 %v769, %v810
    %v1060 = vmul.f32 %v769, %v814
    %v1061 = vmul.f32 %v774, %v810
    %v1062 = vmul.f32 %v774, %v814
    %v1063 = vmul.f32 %v779, %v810
    %v1064 = vmul.f32 %v779, %v814
    %v1065 = vmul.f32 %v784, %v810
    %v1066 = vmul.f32 %v784, %v814
    %v1067 = vmul.f32 %v789, %v810
    %v1068 = vmul.f32 %v789, %v814
    %v1069 = vmul.f32 %v794, %v810
    %v1070 = vmul.f32 %v794, %v814
    %1071 = vset.pattern.permute.xlu0 3
    %1072 = vperm.xlu0 %1071, %v28
    %v1073 = vpop.permute.xlu0 %1072
    %1075 = vset.pattern.permute.xlu0 3
    %1076 = vperm.xlu0 %1075, %v29
    %v1077 = vpop.permute.xlu0 %1076
    %1079 = vset.pattern.permute.xlu0 3
    %1080 = vperm.xlu0 %1079, %v30
    %v1081 = vpop.permute.xlu0 %1080
    %1083 = vset.pattern.permute.xlu0 3
    %1084 = vperm.xlu0 %1083, %v31
    %v1085 = vpop.permute.xlu0 %1084
    %1087 = vset.pattern.permute.xlu0 3
    %1088 = vperm.xlu0 %1087, %v32
    %v1089 = vpop.permute.xlu0 %1088
    %1091 = vset.pattern.permute.xlu0 3
    %1092 = vperm.xlu0 %1091, %v33
    %v1093 = vpop.permute.xlu0 %1092
    %1095 = vset.pattern.permute.xlu0 3
    %1096 = vperm.xlu0 %1095, %v34
    %v1097 = vpop.permute.xlu0 %1096
    %1099 = vset.pattern.permute.xlu0 3
    %1100 = vperm.xlu0 %1099, %v35
    %v1101 = vpop.permute.xlu0 %1100
    %1103 = vset.pattern.permute.xlu0 3
    %1104 = vperm.xlu0 %1103, %v36
    %v1105 = vpop.permute.xlu0 %1104
    %1107 = vset.pattern.permute.xlu0 3
    %1108 = vperm.xlu0 %1107, %v37
    %v1109 = vpop.permute.xlu0 %1108
    %1111 = vset.pattern.permute.xlu0 3
    %1112 = vperm.xlu0 %1111, %v38
    %v1113 = vpop.permute.xlu0 %1112
    %1115 = vset.pattern.permute.xlu0 3
    %1116 = vperm.xlu0 %1115, %v39
    %v1117 = vpop.permute.xlu0 %1116
    %1119 = vset.pattern.permute.xlu0 3
    %1120 = vperm.xlu0 %1119, %v40
    %v1121 = vpop.permute.xlu0 %1120
    %1123 = vset.pattern.permute.xlu0 3
    %1124 = vperm.xlu0 %1123, %v41
    %v1125 = vpop.permute.xlu0 %1124
    %1127 = vset.pattern.permute.xlu0 3
    %1128 = vperm.xlu0 %1127, %v42
    %v1129 = vpop.permute.xlu0 %1128
    %1131 = vset.pattern.permute.xlu0 3
    %1132 = vperm.xlu0 %1131, %v43
    %v1133 = vpop.permute.xlu0 %1132
    %1135 = vset.pattern.permute.xlu0 3
    %1136 = vperm.xlu0 %1135, %v44
    %v1137 = vpop.permute.xlu0 %1136
    %1139 = vset.pattern.permute.xlu0 3
    %1140 = vperm.xlu0 %1139, %v45
    %v1141 = vpop.permute.xlu0 %1140
    %1143 = vset.pattern.permute.xlu0 3
    %1144 = vperm.xlu0 %1143, %v46
    %v1145 = vpop.permute.xlu0 %1144
    %1147 = vset.pattern.permute.xlu0 3
    %1148 = vperm.xlu0 %1147, %v47
    %v1149 = vpop.permute.xlu0 %1148
    %1151 = vset.pattern.permute.xlu0 3
    %1152 = vperm.xlu0 %1151, %v48
    %v1153 = vpop.permute.xlu0 %1152
    %1155 = vset.pattern.permute.xlu0 3
    %1156 = vperm.xlu0 %1155, %v49
    %v1157 = vpop.permute.xlu0 %1156
    %1159 = vset.pattern.permute.xlu0 3
    %1160 = vperm.xlu0 %1159, %v50
    %v1161 = vpop.permute.xlu0 %1160
    %1163 = vset.pattern.permute.xlu0 3
    %1164 = vperm.xlu0 %1163, %v51
    %v1165 = vpop.permute.xlu0 %1164
    %1167 = vset.pattern.permute.xlu0 3
    %1168 = vperm.xlu0 %1167, %v52
    %v1169 = vpop.permute.xlu0 %1168
    %1171 = vset.pattern.permute.xlu0 3
    %1172 = vperm.xlu0 %1171, %v53
    %v1173 = vpop.permute.xlu0 %1172
    %1175 = vset.pattern.permute.xlu0 3
    %1176 = vperm.xlu0 %1175, %v54
    %v1177 = vpop.permute.xlu0 %1176
    %1179 = vset.pattern.permute.xlu0 3
    %1180 = vperm.xlu0 %1179, %v55
    %v1181 = vpop.permute.xlu0 %1180
    %1183 = vset.pattern.permute.xlu0 3
    %1184 = vperm.xlu0 %1183, %v56
    %v1185 = vpop.permute.xlu0 %1184
    %1187 = vset.pattern.permute.xlu0 3
    %1188 = vperm.xlu0 %1187, %v57
    %v1189 = vpop.permute.xlu0 %1188
    %1191 = vset.pattern.permute.xlu0 3
    %1192 = vperm.xlu0 %1191, %v58
    %v1193 = vpop.permute.xlu0 %1192
    %1195 = vset.pattern.permute.xlu0 3
    %1196 = vperm.xlu0 %1195, %v59
    %v1197 = vpop.permute.xlu0 %1196
    %1199 = vset.pattern.permute.xlu0 3
    %1200 = vperm.xlu0 %1199, %v60
    %v1201 = vpop.permute.xlu0 %1200
    %1203 = vset.pattern.permute.xlu0 3
    %1204 = vperm.xlu0 %1203, %v61
    %v1205 = vpop.permute.xlu0 %1204
    %1207 = vset.pattern.permute.xlu0 3
    %1208 = vperm.xlu0 %1207, %v62
    %v1209 = vpop.permute.xlu0 %1208
    %1211 = vset.pattern.permute.xlu0 3
    %1212 = vperm.xlu0 %1211, %v63
    %v1213 = vpop.permute.xlu0 %1212
    %1215 = vset.pattern.permute.xlu0 3
    %1216 = vperm.xlu0 %1215, %v64
    %v1217 = vpop.permute.xlu0 %1216
    %1219 = vset.pattern.permute.xlu0 3
    %1220 = vperm.xlu0 %1219, %v65
    %v1221 = vpop.permute.xlu0 %1220
    %1223 = vset.pattern.permute.xlu0 3
    %1224 = vperm.xlu0 %1223, %v66
    %v1225 = vpop.permute.xlu0 %1224
    %1227 = vset.pattern.permute.xlu0 3
    %1228 = vperm.xlu0 %1227, %v67
    %v1229 = vpop.permute.xlu0 %1228
    %1231 = vset.pattern.permute.xlu0 3
    %1232 = vperm.xlu0 %1231, %v68
    %v1233 = vpop.permute.xlu0 %1232
    %1235 = vset.pattern.permute.xlu0 3
    %1236 = vperm.xlu0 %1235, %v69
    %v1237 = vpop.permute.xlu0 %1236
    %1239 = vset.pattern.permute.xlu0 3
    %1240 = vperm.xlu0 %1239, %v70
    %v1241 = vpop.permute.xlu0 %1240
    %1243 = vset.pattern.permute.xlu0 3
    %1244 = vperm.xlu0 %1243, %v71
    %v1245 = vpop.permute.xlu0 %1244
    %1247 = vset.pattern.permute.xlu0 3
    %1248 = vperm.xlu0 %1247, %v72
    %v1249 = vpop.permute.xlu0 %1248
    %1251 = vset.pattern.permute.xlu0 3
    %1252 = vperm.xlu0 %1251, %v73
    %v1253 = vpop.permute.xlu0 %1252
    %1255 = vset.pattern.permute.xlu0 3
    %1256 = vperm.xlu0 %1255, %v74
    %v1257 = vpop.permute.xlu0 %1256
    %1259 = vset.pattern.permute.xlu0 3
    %1260 = vperm.xlu0 %1259, %v75
    %v1261 = vpop.permute.xlu0 %1260
    %1263 = vset.pattern.permute.xlu0 3
    %1264 = vperm.xlu0 %1263, %v76
    %v1265 = vpop.permute.xlu0 %1264
    %1267 = vset.pattern.permute.xlu0 3
    %1268 = vperm.xlu0 %1267, %v77
    %v1269 = vpop.permute.xlu0 %1268
    %1271 = vset.pattern.permute.xlu0 3
    %1272 = vperm.xlu0 %1271, %v78
    %v1273 = vpop.permute.xlu0 %1272
    %1275 = vset.pattern.permute.xlu0 3
    %1276 = vperm.xlu0 %1275, %v79
    %v1277 = vpop.permute.xlu0 %1276
    %1279 = vset.pattern.permute.xlu0 3
    %1280 = vperm.xlu0 %1279, %v80
    %v1281 = vpop.permute.xlu0 %1280
    %1283 = vset.pattern.permute.xlu0 3
    %1284 = vperm.xlu0 %1283, %v81
    %v1285 = vpop.permute.xlu0 %1284
    %1287 = vset.pattern.permute.xlu0 3
    %1288 = vperm.xlu0 %1287, %v82
    %v1289 = vpop.permute.xlu0 %1288
    %1291 = vset.pattern.permute.xlu0 3
    %1292 = vperm.xlu0 %1291, %v83
    %v1293 = vpop.permute.xlu0 %1292
    %1295 = vset.pattern.permute.xlu0 3
    %1296 = vperm.xlu0 %1295, %v84
    %v1297 = vpop.permute.xlu0 %1296
    %1299 = vset.pattern.permute.xlu0 3
    %1300 = vperm.xlu0 %1299, %v85
    %v1301 = vpop.permute.xlu0 %1300
    %1303 = vset.pattern.permute.xlu0 3
    %1304 = vperm.xlu0 %1303, %v86
    %v1305 = vpop.permute.xlu0 %1304
    %1307 = vset.pattern.permute.xlu0 3
    %1308 = vperm.xlu0 %1307, %v87
    %v1309 = vpop.permute.xlu0 %1308
    %1311 = vset.pattern.permute.xlu0 3
    %1312 = vperm.xlu0 %1311, %v88
    %v1313 = vpop.permute.xlu0 %1312
    %1315 = vset.pattern.permute.xlu0 3
    %1316 = vperm.xlu0 %1315, %v89
    %v1317 = vpop.permute.xlu0 %1316
    %1319 = vset.pattern.permute.xlu0 3
    %1320 = vperm.xlu0 %1319, %v90
    %v1321 = vpop.permute.xlu0 %1320
    %1323 = vset.pattern.permute.xlu0 3
    %1324 = vperm.xlu0 %1323, %v91
    %v1325 = vpop.permute.xlu0 %1324
    %1327 = vset.pattern.permute.xlu0 3
    %1328 = vperm.xlu0 %1327, %v92
    %v1329 = vpop.permute.xlu0 %1328
    %1331 = vset.pattern.permute.xlu0 3
    %1332 = vperm.xlu0 %1331, %v93
    %v1333 = vpop.permute.xlu0 %1332
    %1335 = vset.pattern.permute.xlu0 3
    %1336 = vperm.xlu0 %1335, %v94
    %v1337 = vpop.permute.xlu0 %1336
    %1339 = vset.pattern.permute.xlu0 3
    %1340 = vperm.xlu0 %1339, %v95
    %v1341 = vpop.permute.xlu0 %1340
    %1343 = vset.pattern.permute.xlu0 3
    %1344 = vperm.xlu0 %1343, %v96
    %v1345 = vpop.permute.xlu0 %1344
    %1347 = vset.pattern.permute.xlu0 3
    %1348 = vperm.xlu0 %1347, %v97
    %v1349 = vpop.permute.xlu0 %1348
    %1351 = vset.pattern.permute.xlu0 3
    %1352 = vperm.xlu0 %1351, %v98
    %v1353 = vpop.permute.xlu0 %1352
    %1355 = vset.pattern.permute.xlu0 3
    %1356 = vperm.xlu0 %1355, %v99
    %v1357 = vpop.permute.xlu0 %1356
    %1359 = vset.pattern.permute.xlu0 3
    %1360 = vperm.xlu0 %1359, %v100
    %v1361 = vpop.permute.xlu0 %1360
    %1363 = vset.pattern.permute.xlu0 3
    %1364 = vperm.xlu0 %1363, %v101
    %v1365 = vpop.permute.xlu0 %1364
    %1367 = vset.pattern.permute.xlu0 3
    %1368 = vperm.xlu0 %1367, %v102
    %v1369 = vpop.permute.xlu0 %1368
    %1371 = vset.pattern.permute.xlu0 3
    %1372 = vperm.xlu0 %1371, %v103
    %v1373 = vpop.permute.xlu0 %1372
    %1375 = vset.pattern.permute.xlu0 3
    %1376 = vperm.xlu0 %1375, %v104
    %v1377 = vpop.permute.xlu0 %1376
    %1379 = vset.pattern.permute.xlu0 3
    %1380 = vperm.xlu0 %1379, %v105
    %v1381 = vpop.permute.xlu0 %1380
    %1383 = vset.pattern.permute.xlu0 3
    %1384 = vperm.xlu0 %1383, %v106
    %v1385 = vpop.permute.xlu0 %1384
    %1387 = vset.pattern.permute.xlu0 3
    %1388 = vperm.xlu0 %1387, %v107
    %v1389 = vpop.permute.xlu0 %1388
    %1391 = vset.pattern.permute.xlu0 3
    %1392 = vperm.xlu0 %1391, %v108
    %v1393 = vpop.permute.xlu0 %1392
    %1395 = vset.pattern.permute.xlu0 3
    %1396 = vperm.xlu0 %1395, %v109
    %v1397 = vpop.permute.xlu0 %1396
    %1399 = vset.pattern.permute.xlu0 3
    %1400 = vperm.xlu0 %1399, %v110
    %v1401 = vpop.permute.xlu0 %1400
    %1403 = vset.pattern.permute.xlu0 3
    %1404 = vperm.xlu0 %1403, %v111
    %v1405 = vpop.permute.xlu0 %1404
    %1407 = vset.pattern.permute.xlu0 3
    %1408 = vperm.xlu0 %1407, %v112
    %v1409 = vpop.permute.xlu0 %1408
    %1411 = vset.pattern.permute.xlu0 3
    %1412 = vperm.xlu0 %1411, %v113
    %v1413 = vpop.permute.xlu0 %1412
    %1415 = vset.pattern.permute.xlu0 3
    %1416 = vperm.xlu0 %1415, %v114
    %v1417 = vpop.permute.xlu0 %1416
    %1419 = vset.pattern.permute.xlu0 3
    %1420 = vperm.xlu0 %1419, %v115
    %v1421 = vpop.permute.xlu0 %1420
    %1423 = vset.pattern.permute.xlu0 3
    %1424 = vperm.xlu0 %1423, %v116
    %v1425 = vpop.permute.xlu0 %1424
    %1427 = vset.pattern.permute.xlu0 3
    %1428 = vperm.xlu0 %1427, %v117
    %v1429 = vpop.permute.xlu0 %1428
    %1431 = vset.pattern.permute.xlu0 3
    %1432 = vperm.xlu0 %1431, %v118
    %v1433 = vpop.permute.xlu0 %1432
    %1435 = vset.pattern.permute.xlu0 3
    %1436 = vperm.xlu0 %1435, %v119
    %v1437 = vpop.permute.xlu0 %1436
    %1439 = vset.pattern.permute.xlu0 3
    %1440 = vperm.xlu0 %1439, %v120
    %v1441 = vpop.permute.xlu0 %1440
    %1443 = vset.pattern.permute.xlu0 3
    %1444 = vperm.xlu0 %1443, %v121
    %v1445 = vpop.permute.xlu0 %1444
    %1447 = vset.pattern.permute.xlu0 3
    %1448 = vperm.xlu0 %1447, %v122
    %v1449 = vpop.permute.xlu0 %1448
    %1451 = vset.pattern.permute.xlu0 3
    %1452 = vperm.xlu0 %1451, %v123
    %v1453 = vpop.permute.xlu0 %1452
    %1455 = vset.pattern.permute.xlu0 3
    %1456 = vperm.xlu0 %1455, %v124
    %v1457 = vpop.permute.xlu0 %1456
    %1459 = vset.pattern.permute.xlu0 3
    %1460 = vperm.xlu0 %1459, %v125
    %v1461 = vpop.permute.xlu0 %1460
    %1463 = vset.pattern.permute.xlu0 3
    %1464 = vperm.xlu0 %1463, %v126
    %v1465 = vpop.permute.xlu0 %1464
    %1467 = vset.pattern.permute.xlu0 3
    %1468 = vperm.xlu0 %1467, %v127
    %v1469 = vpop.permute.xlu0 %1468
    %1471 = vset.pattern.permute.xlu0 3
    %1472 = vperm.xlu0 %1471, %v128
    %v1473 = vpop.permute.xlu0 %1472
    %1475 = vset.pattern.permute.xlu0 3
    %1476 = vperm.xlu0 %1475, %v129
    %v1477 = vpop.permute.xlu0 %1476
    %1479 = vset.pattern.permute.xlu0 3
    %1480 = vperm.xlu0 %1479, %v130
    %v1481 = vpop.permute.xlu0 %1480
    %1483 = vset.pattern.permute.xlu0 3
    %1484 = vperm.xlu0 %1483, %v131
    %v1485 = vpop.permute.xlu0 %1484
    %1487 = vset.pattern.permute.xlu0 3
    %1488 = vperm.xlu0 %1487, %v132
    %v1489 = vpop.permute.xlu0 %1488
    %1491 = vset.pattern.permute.xlu0 3
    %1492 = vperm.xlu0 %1491, %v133
    %v1493 = vpop.permute.xlu0 %1492
    %1495 = vset.pattern.permute.xlu0 3
    %1496 = vperm.xlu0 %1495, %v134
    %v1497 = vpop.permute.xlu0 %1496
    %1499 = vset.pattern.permute.xlu0 3
    %1500 = vperm.xlu0 %1499, %v135
    %v1501 = vpop.permute.xlu0 %1500
    %1503 = vset.pattern.permute.xlu0 3
    %1504 = vperm.xlu0 %1503, %v136
    %v1505 = vpop.permute.xlu0 %1504
    %1507 = vset.pattern.permute.xlu0 3
    %1508 = vperm.xlu0 %1507, %v137
    %v1509 = vpop.permute.xlu0 %1508
    %1511 = vset.pattern.permute.xlu0 3
    %1512 = vperm.xlu0 %1511, %v138
    %v1513 = vpop.permute.xlu0 %1512
    %1515 = vset.pattern.permute.xlu0 3
    %1516 = vperm.xlu0 %1515, %v139
    %v1517 = vpop.permute.xlu0 %1516
    %1519 = vset.pattern.permute.xlu0 3
    %1520 = vperm.xlu0 %1519, %v140
    %v1521 = vpop.permute.xlu0 %1520
    %1523 = vset.pattern.permute.xlu0 3
    %1524 = vperm.xlu0 %1523, %v141
    %v1525 = vpop.permute.xlu0 %1524
    %1527 = vset.pattern.permute.xlu0 3
    %1528 = vperm.xlu0 %1527, %v142
    %v1529 = vpop.permute.xlu0 %1528
    %1531 = vset.pattern.permute.xlu0 3
    %1532 = vperm.xlu0 %1531, %v143
    %v1533 = vpop.permute.xlu0 %1532
    %1535 = vset.pattern.permute.xlu0 3
    %1536 = vperm.xlu0 %1535, %v144
    %v1537 = vpop.permute.xlu0 %1536
    %1539 = vset.pattern.permute.xlu0 3
    %1540 = vperm.xlu0 %1539, %v145
    %v1541 = vpop.permute.xlu0 %1540
    %1543 = vset.pattern.permute.xlu0 3
    %1544 = vperm.xlu0 %1543, %v146
    %v1545 = vpop.permute.xlu0 %1544
    %1547 = vset.pattern.permute.xlu0 3
    %1548 = vperm.xlu0 %1547, %v147
    %v1549 = vpop.permute.xlu0 %1548
    %1551 = vset.pattern.permute.xlu0 3
    %1552 = vperm.xlu0 %1551, %v148
    %v1553 = vpop.permute.xlu0 %1552
    %1555 = vset.pattern.permute.xlu0 3
    %1556 = vperm.xlu0 %1555, %v149
    %v1557 = vpop.permute.xlu0 %1556
    %1559 = vset.pattern.permute.xlu0 3
    %1560 = vperm.xlu0 %1559, %v150
    %v1561 = vpop.permute.xlu0 %1560
    %1563 = vset.pattern.permute.xlu0 3
    %1564 = vperm.xlu0 %1563, %v151
    %v1565 = vpop.permute.xlu0 %1564
    %1567 = vset.pattern.permute.xlu0 3
    %1568 = vperm.xlu0 %1567, %v152
    %v1569 = vpop.permute.xlu0 %1568
    %1571 = vset.pattern.permute.xlu0 3
    %1572 = vperm.xlu0 %1571, %v153
    %v1573 = vpop.permute.xlu0 %1572
    %1575 = vset.pattern.permute.xlu0 3
    %1576 = vperm.xlu0 %1575, %v154
    %v1577 = vpop.permute.xlu0 %1576
    %1579 = vset.pattern.permute.xlu0 3
    %1580 = vperm.xlu0 %1579, %v155
    %v1581 = vpop.permute.xlu0 %1580
    %v1583 = vadd.f32 %v1073, %v815
    %v1584 = vadd.f32 %v1073, %v816
    %v1585 = vadd.f32 %v1077, %v817
    %v1586 = vadd.f32 %v1077, %v818
    %v1587 = vadd.f32 %v1081, %v819
    %v1588 = vadd.f32 %v1081, %v820
    %v1589 = vadd.f32 %v1085, %v821
    %v1590 = vadd.f32 %v1085, %v822
    %v1591 = vadd.f32 %v1089, %v823
    %v1592 = vadd.f32 %v1089, %v824
    %v1593 = vadd.f32 %v1093, %v825
    %v1594 = vadd.f32 %v1093, %v826
    %v1595 = vadd.f32 %v1097, %v827
    %v1596 = vadd.f32 %v1097, %v828
    %v1597 = vadd.f32 %v1101, %v829
    %v1598 = vadd.f32 %v1101, %v830
    %v1599 = vadd.f32 %v1105, %v831
    %v1600 = vadd.f32 %v1105, %v832
    %v1601 = vadd.f32 %v1109, %v833
    %v1602 = vadd.f32 %v1109, %v834
    %v1603 = vadd.f32 %v1113, %v835
    %v1604 = vadd.f32 %v1113, %v836
    %v1605 = vadd.f32 %v1117, %v837
    %v1606 = vadd.f32 %v1117, %v838
    %v1607 = vadd.f32 %v1121, %v839
    %v1608 = vadd.f32 %v1121, %v840
    %v1609 = vadd.f32 %v1125, %v841
    %v1610 = vadd.f32 %v1125, %v842
    %v1611 = vadd.f32 %v1129, %v843
    %v1612 = vadd.f32 %v1129, %v844
    %v1613 = vadd.f32 %v1133, %v845
    %v1614 = vadd.f32 %v1133, %v846
    %v1615 = vadd.f32 %v1137, %v847
    %v1616 = vadd.f32 %v1137, %v848
    %v1617 = vadd.f32 %v1141, %v849
    %v1618 = vadd.f32 %v1141, %v850
    %v1619 = vadd.f32 %v1145, %v851
    %v1620 = vadd.f32 %v1145, %v852
    %v1621 = vadd.f32 %v1149, %v853
    %v1622 = vadd.f32 %v1149, %v854
    %v1623 = vadd.f32 %v1153, %v855
    %v1624 = vadd.f32 %v1153, %v856
    %v1625 = vadd.f32 %v1157, %v857
    %v1626 = vadd.f32 %v1157, %v858
    %v1627 = vadd.f32 %v1161, %v859
    %v1628 = vadd.f32 %v1161, %v860
    %v1629 = vadd.f32 %v1165, %v861
    %v1630 = vadd.f32 %v1165, %v862
    %v1631 = vadd.f32 %v1169, %v863
    %v1632 = vadd.f32 %v1169, %v864
    %v1633 = vadd.f32 %v1173, %v865
    %v1634 = vadd.f32 %v1173, %v866
    %v1635 = vadd.f32 %v1177, %v867
    %v1636 = vadd.f32 %v1177, %v868
    %v1637 = vadd.f32 %v1181, %v869
    %v1638 = vadd.f32 %v1181, %v870
    %v1639 = vadd.f32 %v1185, %v871
    %v1640 = vadd.f32 %v1185, %v872
    %v1641 = vadd.f32 %v1189, %v873
    %v1642 = vadd.f32 %v1189, %v874
    %v1643 = vadd.f32 %v1193, %v875
    %v1644 = vadd.f32 %v1193, %v876
    %v1645 = vadd.f32 %v1197, %v877
    %v1646 = vadd.f32 %v1197, %v878
    %v1647 = vadd.f32 %v1201, %v879
    %v1648 = vadd.f32 %v1201, %v880
    %v1649 = vadd.f32 %v1205, %v881
    %v1650 = vadd.f32 %v1205, %v882
    %v1651 = vadd.f32 %v1209, %v883
    %v1652 = vadd.f32 %v1209, %v884
    %v1653 = vadd.f32 %v1213, %v885
    %v1654 = vadd.f32 %v1213, %v886
    %v1655 = vadd.f32 %v1217, %v887
    %v1656 = vadd.f32 %v1217, %v888
    %v1657 = vadd.f32 %v1221, %v889
    %v1658 = vadd.f32 %v1221, %v890
    %v1659 = vadd.f32 %v1225, %v891
    %v1660 = vadd.f32 %v1225, %v892
    %v1661 = vadd.f32 %v1229, %v893
    %v1662 = vadd.f32 %v1229, %v894
    %v1663 = vadd.f32 %v1233, %v895
    %v1664 = vadd.f32 %v1233, %v896
    %v1665 = vadd.f32 %v1237, %v897
    %v1666 = vadd.f32 %v1237, %v898
    %v1667 = vadd.f32 %v1241, %v899
    %v1668 = vadd.f32 %v1241, %v900
    %v1669 = vadd.f32 %v1245, %v901
    %v1670 = vadd.f32 %v1245, %v902
    %v1671 = vadd.f32 %v1249, %v903
    %v1672 = vadd.f32 %v1249, %v904
    %v1673 = vadd.f32 %v1253, %v905
    %v1674 = vadd.f32 %v1253, %v906
    %v1675 = vadd.f32 %v1257, %v907
    %v1676 = vadd.f32 %v1257, %v908
    %v1677 = vadd.f32 %v1261, %v909
    %v1678 = vadd.f32 %v1261, %v910
    %v1679 = vadd.f32 %v1265, %v911
    %v1680 = vadd.f32 %v1265, %v912
    %v1681 = vadd.f32 %v1269, %v913
    %v1682 = vadd.f32 %v1269, %v914
    %v1683 = vadd.f32 %v1273, %v915
    %v1684 = vadd.f32 %v1273, %v916
    %v1685 = vadd.f32 %v1277, %v917
    %v1686 = vadd.f32 %v1277, %v918
    %v1687 = vadd.f32 %v1281, %v919
    %v1688 = vadd.f32 %v1281, %v920
    %v1689 = vadd.f32 %v1285, %v921
    %v1690 = vadd.f32 %v1285, %v922
    %v1691 = vadd.f32 %v1289, %v923
    %v1692 = vadd.f32 %v1289, %v924
    %v1693 = vadd.f32 %v1293, %v925
    %v1694 = vadd.f32 %v1293, %v926
    %v1695 = vadd.f32 %v1297, %v927
    %v1696 = vadd.f32 %v1297, %v928
    %v1697 = vadd.f32 %v1301, %v929
    %v1698 = vadd.f32 %v1301, %v930
    %v1699 = vadd.f32 %v1305, %v931
    %v1700 = vadd.f32 %v1305, %v932
    %v1701 = vadd.f32 %v1309, %v933
    %v1702 = vadd.f32 %v1309, %v934
    %v1703 = vadd.f32 %v1313, %v935
    %v1704 = vadd.f32 %v1313, %v936
    %v1705 = vadd.f32 %v1317, %v937
    %v1706 = vadd.f32 %v1317, %v938
    %v1707 = vadd.f32 %v1321, %v939
    %v1708 = vadd.f32 %v1321, %v940
    %v1709 = vadd.f32 %v1325, %v941
    %v1710 = vadd.f32 %v1325, %v942
    %v1711 = vadd.f32 %v1329, %v943
    %v1712 = vadd.f32 %v1329, %v944
    %v1713 = vadd.f32 %v1333, %v945
    %v1714 = vadd.f32 %v1333, %v946
    %v1715 = vadd.f32 %v1337, %v947
    %v1716 = vadd.f32 %v1337, %v948
    %v1717 = vadd.f32 %v1341, %v949
    %v1718 = vadd.f32 %v1341, %v950
    %v1719 = vadd.f32 %v1345, %v951
    %v1720 = vadd.f32 %v1345, %v952
    %v1721 = vadd.f32 %v1349, %v953
    %v1722 = vadd.f32 %v1349, %v954
    %v1723 = vadd.f32 %v1353, %v955
    %v1724 = vadd.f32 %v1353, %v956
    %v1725 = vadd.f32 %v1357, %v957
    %v1726 = vadd.f32 %v1357, %v958
    %v1727 = vadd.f32 %v1361, %v959
    %v1728 = vadd.f32 %v1361, %v960
    %v1729 = vadd.f32 %v1365, %v961
    %v1730 = vadd.f32 %v1365, %v962
    %v1731 = vadd.f32 %v1369, %v963
    %v1732 = vadd.f32 %v1369, %v964
    %v1733 = vadd.f32 %v1373, %v965
    %v1734 = vadd.f32 %v1373, %v966
    %v1735 = vadd.f32 %v1377, %v967
    %v1736 = vadd.f32 %v1377, %v968
    %v1737 = vadd.f32 %v1381, %v969
    %v1738 = vadd.f32 %v1381, %v970
    %v1739 = vadd.f32 %v1385, %v971
    %v1740 = vadd.f32 %v1385, %v972
    %v1741 = vadd.f32 %v1389, %v973
    %v1742 = vadd.f32 %v1389, %v974
    %v1743 = vadd.f32 %v1393, %v975
    %v1744 = vadd.f32 %v1393, %v976
    %v1745 = vadd.f32 %v1397, %v977
    %v1746 = vadd.f32 %v1397, %v978
    %v1747 = vadd.f32 %v1401, %v979
    %v1748 = vadd.f32 %v1401, %v980
    %v1749 = vadd.f32 %v1405, %v981
    %v1750 = vadd.f32 %v1405, %v982
    %v1751 = vadd.f32 %v1409, %v983
    %v1752 = vadd.f32 %v1409, %v984
    %v1753 = vadd.f32 %v1413, %v985
    %v1754 = vadd.f32 %v1413, %v986
    %v1755 = vadd.f32 %v1417, %v987
    %v1756 = vadd.f32 %v1417, %v988
    %v1757 = vadd.f32 %v1421, %v989
    %v1758 = vadd.f32 %v1421, %v990
    %v1759 = vadd.f32 %v1425, %v991
    %v1760 = vadd.f32 %v1425, %v992
    %v1761 = vadd.f32 %v1429, %v993
    %v1762 = vadd.f32 %v1429, %v994
    %v1763 = vadd.f32 %v1433, %v995
    %v1764 = vadd.f32 %v1433, %v996
    %v1765 = vadd.f32 %v1437, %v997
    %v1766 = vadd.f32 %v1437, %v998
    %v1767 = vadd.f32 %v1441, %v999
    %v1768 = vadd.f32 %v1441, %v1000
    %v1769 = vadd.f32 %v1445, %v1001
    %v1770 = vadd.f32 %v1445, %v1002
    %v1771 = vadd.f32 %v1449, %v1003
    %v1772 = vadd.f32 %v1449, %v1004
    %v1773 = vadd.f32 %v1453, %v1005
    %v1774 = vadd.f32 %v1453, %v1006
    %v1775 = vadd.f32 %v1457, %v1007
    %v1776 = vadd.f32 %v1457, %v1008
    %v1777 = vadd.f32 %v1461, %v1009
    %v1778 = vadd.f32 %v1461, %v1010
    %v1779 = vadd.f32 %v1465, %v1011
    %v1780 = vadd.f32 %v1465, %v1012
    %v1781 = vadd.f32 %v1469, %v1013
    %v1782 = vadd.f32 %v1469, %v1014
    %v1783 = vadd.f32 %v1473, %v1015
    %v1784 = vadd.f32 %v1473, %v1016
    %v1785 = vadd.f32 %v1477, %v1017
    %v1786 = vadd.f32 %v1477, %v1018
    %v1787 = vadd.f32 %v1481, %v1019
    %v1788 = vadd.f32 %v1481, %v1020
    %v1789 = vadd.f32 %v1485, %v1021
    %v1790 = vadd.f32 %v1485, %v1022
    %v1791 = vadd.f32 %v1489, %v1023
    %v1792 = vadd.f32 %v1489, %v1024
    %v1793 = vadd.f32 %v1493, %v1025
    %v1794 = vadd.f32 %v1493, %v1026
    %v1795 = vadd.f32 %v1497, %v1027
    %v1796 = vadd.f32 %v1497, %v1028
    %v1797 = vadd.f32 %v1501, %v1029
    %v1798 = vadd.f32 %v1501, %v1030
    %v1799 = vadd.f32 %v1505, %v1031
    %v1800 = vadd.f32 %v1505, %v1032
    %v1801 = vadd.f32 %v1509, %v1033
    %v1802 = vadd.f32 %v1509, %v1034
    %v1803 = vadd.f32 %v1513, %v1035
    %v1804 = vadd.f32 %v1513, %v1036
    %v1805 = vadd.f32 %v1517, %v1037
    %v1806 = vadd.f32 %v1517, %v1038
    %v1807 = vadd.f32 %v1521, %v1039
    %v1808 = vadd.f32 %v1521, %v1040
    %v1809 = vadd.f32 %v1525, %v1041
    %v1810 = vadd.f32 %v1525, %v1042
    %v1811 = vadd.f32 %v1529, %v1043
    %v1812 = vadd.f32 %v1529, %v1044
    %v1813 = vadd.f32 %v1533, %v1045
    %v1814 = vadd.f32 %v1533, %v1046
    %v1815 = vadd.f32 %v1537, %v1047
    %v1816 = vadd.f32 %v1537, %v1048
    %v1817 = vadd.f32 %v1541, %v1049
    %v1818 = vadd.f32 %v1541, %v1050
    %v1819 = vadd.f32 %v1545, %v1051
    %v1820 = vadd.f32 %v1545, %v1052
    %v1821 = vadd.f32 %v1549, %v1053
    %v1822 = vadd.f32 %v1549, %v1054
    %v1823 = vadd.f32 %v1553, %v1055
    %v1824 = vadd.f32 %v1553, %v1056
    %v1825 = vadd.f32 %v1557, %v1057
    %v1826 = vadd.f32 %v1557, %v1058
    %v1827 = vadd.f32 %v1561, %v1059
    %v1828 = vadd.f32 %v1561, %v1060
    %v1829 = vadd.f32 %v1565, %v1061
    %v1830 = vadd.f32 %v1565, %v1062
    %v1831 = vadd.f32 %v1569, %v1063
    %v1832 = vadd.f32 %v1569, %v1064
    %v1833 = vadd.f32 %v1573, %v1065
    %v1834 = vadd.f32 %v1573, %v1066
    %v1835 = vadd.f32 %v1577, %v1067
    %v1836 = vadd.f32 %v1577, %v1068
    %v1837 = vadd.f32 %v1581, %v1069
    %v1838 = vadd.f32 %v1581, %v1070
    %1839 = vset.pattern.permute.xlu0 1
    %1840 = vperm.xlu0 %1839, %v28
    %v1841 = vpop.permute.xlu0 %1840
    %1843 = vset.pattern.permute.xlu0 1
    %1844 = vperm.xlu0 %1843, %v29
    %v1845 = vpop.permute.xlu0 %1844
    %1847 = vset.pattern.permute.xlu0 1
    %1848 = vperm.xlu0 %1847, %v30
    %v1849 = vpop.permute.xlu0 %1848
    %1851 = vset.pattern.permute.xlu0 1
    %1852 = vperm.xlu0 %1851, %v31
    %v1853 = vpop.permute.xlu0 %1852
    %1855 = vset.pattern.permute.xlu0 1
    %1856 = vperm.xlu0 %1855, %v32
    %v1857 = vpop.permute.xlu0 %1856
    %1859 = vset.pattern.permute.xlu0 1
    %1860 = vperm.xlu0 %1859, %v33
    %v1861 = vpop.permute.xlu0 %1860
    %1863 = vset.pattern.permute.xlu0 1
    %1864 = vperm.xlu0 %1863, %v34
    %v1865 = vpop.permute.xlu0 %1864
    %1867 = vset.pattern.permute.xlu0 1
    %1868 = vperm.xlu0 %1867, %v35
    %v1869 = vpop.permute.xlu0 %1868
    %1871 = vset.pattern.permute.xlu0 1
    %1872 = vperm.xlu0 %1871, %v36
    %v1873 = vpop.permute.xlu0 %1872
    %1875 = vset.pattern.permute.xlu0 1
    %1876 = vperm.xlu0 %1875, %v37
    %v1877 = vpop.permute.xlu0 %1876
    %1879 = vset.pattern.permute.xlu0 1
    %1880 = vperm.xlu0 %1879, %v38
    %v1881 = vpop.permute.xlu0 %1880
    %1883 = vset.pattern.permute.xlu0 1
    %1884 = vperm.xlu0 %1883, %v39
    %v1885 = vpop.permute.xlu0 %1884
    %1887 = vset.pattern.permute.xlu0 1
    %1888 = vperm.xlu0 %1887, %v40
    %v1889 = vpop.permute.xlu0 %1888
    %1891 = vset.pattern.permute.xlu0 1
    %1892 = vperm.xlu0 %1891, %v41
    %v1893 = vpop.permute.xlu0 %1892
    %1895 = vset.pattern.permute.xlu0 1
    %1896 = vperm.xlu0 %1895, %v42
    %v1897 = vpop.permute.xlu0 %1896
    %1899 = vset.pattern.permute.xlu0 1
    %1900 = vperm.xlu0 %1899, %v43
    %v1901 = vpop.permute.xlu0 %1900
    %1903 = vset.pattern.permute.xlu0 1
    %1904 = vperm.xlu0 %1903, %v44
    %v1905 = vpop.permute.xlu0 %1904
    %1907 = vset.pattern.permute.xlu0 1
    %1908 = vperm.xlu0 %1907, %v45
    %v1909 = vpop.permute.xlu0 %1908
    %1911 = vset.pattern.permute.xlu0 1
    %1912 = vperm.xlu0 %1911, %v46
    %v1913 = vpop.permute.xlu0 %1912
    %1915 = vset.pattern.permute.xlu0 1
    %1916 = vperm.xlu0 %1915, %v47
    %v1917 = vpop.permute.xlu0 %1916
    %1919 = vset.pattern.permute.xlu0 1
    %1920 = vperm.xlu0 %1919, %v48
    %v1921 = vpop.permute.xlu0 %1920
    %1923 = vset.pattern.permute.xlu0 1
    %1924 = vperm.xlu0 %1923, %v49
    %v1925 = vpop.permute.xlu0 %1924
    %1927 = vset.pattern.permute.xlu0 1
    %1928 = vperm.xlu0 %1927, %v50
    %v1929 = vpop.permute.xlu0 %1928
    %1931 = vset.pattern.permute.xlu0 1
    %1932 = vperm.xlu0 %1931, %v51
    %v1933 = vpop.permute.xlu0 %1932
    %1935 = vset.pattern.permute.xlu0 1
    %1936 = vperm.xlu0 %1935, %v52
    %v1937 = vpop.permute.xlu0 %1936
    %1939 = vset.pattern.permute.xlu0 1
    %1940 = vperm.xlu0 %1939, %v53
    %v1941 = vpop.permute.xlu0 %1940
    %1943 = vset.pattern.permute.xlu0 1
    %1944 = vperm.xlu0 %1943, %v54
    %v1945 = vpop.permute.xlu0 %1944
    %1947 = vset.pattern.permute.xlu0 1
    %1948 = vperm.xlu0 %1947, %v55
    %v1949 = vpop.permute.xlu0 %1948
    %1951 = vset.pattern.permute.xlu0 1
    %1952 = vperm.xlu0 %1951, %v56
    %v1953 = vpop.permute.xlu0 %1952
    %1955 = vset.pattern.permute.xlu0 1
    %1956 = vperm.xlu0 %1955, %v57
    %v1957 = vpop.permute.xlu0 %1956
    %1959 = vset.pattern.permute.xlu0 1
    %1960 = vperm.xlu0 %1959, %v58
    %v1961 = vpop.permute.xlu0 %1960
    %1963 = vset.pattern.permute.xlu0 1
    %1964 = vperm.xlu0 %1963, %v59
    %v1965 = vpop.permute.xlu0 %1964
    %1967 = vset.pattern.permute.xlu0 1
    %1968 = vperm.xlu0 %1967, %v60
    %v1969 = vpop.permute.xlu0 %1968
    %1971 = vset.pattern.permute.xlu0 1
    %1972 = vperm.xlu0 %1971, %v61
    %v1973 = vpop.permute.xlu0 %1972
    %1975 = vset.pattern.permute.xlu0 1
    %1976 = vperm.xlu0 %1975, %v62
    %v1977 = vpop.permute.xlu0 %1976
    %1979 = vset.pattern.permute.xlu0 1
    %1980 = vperm.xlu0 %1979, %v63
    %v1981 = vpop.permute.xlu0 %1980
    %1983 = vset.pattern.permute.xlu0 1
    %1984 = vperm.xlu0 %1983, %v64
    %v1985 = vpop.permute.xlu0 %1984
    %1987 = vset.pattern.permute.xlu0 1
    %1988 = vperm.xlu0 %1987, %v65
    %v1989 = vpop.permute.xlu0 %1988
    %1991 = vset.pattern.permute.xlu0 1
    %1992 = vperm.xlu0 %1991, %v66
    %v1993 = vpop.permute.xlu0 %1992
    %1995 = vset.pattern.permute.xlu0 1
    %1996 = vperm.xlu0 %1995, %v67
    %v1997 = vpop.permute.xlu0 %1996
    %1999 = vset.pattern.permute.xlu0 1
    %2000 = vperm.xlu0 %1999, %v68
    %v2001 = vpop.permute.xlu0 %2000
    %2003 = vset.pattern.permute.xlu0 1
    %2004 = vperm.xlu0 %2003, %v69
    %v2005 = vpop.permute.xlu0 %2004
    %2007 = vset.pattern.permute.xlu0 1
    %2008 = vperm.xlu0 %2007, %v70
    %v2009 = vpop.permute.xlu0 %2008
    %2011 = vset.pattern.permute.xlu0 1
    %2012 = vperm.xlu0 %2011, %v71
    %v2013 = vpop.permute.xlu0 %2012
    %2015 = vset.pattern.permute.xlu0 1
    %2016 = vperm.xlu0 %2015, %v72
    %v2017 = vpop.permute.xlu0 %2016
    %2019 = vset.pattern.permute.xlu0 1
    %2020 = vperm.xlu0 %2019, %v73
    %v2021 = vpop.permute.xlu0 %2020
    %2023 = vset.pattern.permute.xlu0 1
    %2024 = vperm.xlu0 %2023, %v74
    %v2025 = vpop.permute.xlu0 %2024
    %2027 = vset.pattern.permute.xlu0 1
    %2028 = vperm.xlu0 %2027, %v75
    %v2029 = vpop.permute.xlu0 %2028
    %2031 = vset.pattern.permute.xlu0 1
    %2032 = vperm.xlu0 %2031, %v76
    %v2033 = vpop.permute.xlu0 %2032
    %2035 = vset.pattern.permute.xlu0 1
    %2036 = vperm.xlu0 %2035, %v77
    %v2037 = vpop.permute.xlu0 %2036
    %2039 = vset.pattern.permute.xlu0 1
    %2040 = vperm.xlu0 %2039, %v78
    %v2041 = vpop.permute.xlu0 %2040
    %2043 = vset.pattern.permute.xlu0 1
    %2044 = vperm.xlu0 %2043, %v79
    %v2045 = vpop.permute.xlu0 %2044
    %2047 = vset.pattern.permute.xlu0 1
    %2048 = vperm.xlu0 %2047, %v80
    %v2049 = vpop.permute.xlu0 %2048
    %2051 = vset.pattern.permute.xlu0 1
    %2052 = vperm.xlu0 %2051, %v81
    %v2053 = vpop.permute.xlu0 %2052
    %2055 = vset.pattern.permute.xlu0 1
    %2056 = vperm.xlu0 %2055, %v82
    %v2057 = vpop.permute.xlu0 %2056
    %2059 = vset.pattern.permute.xlu0 1
    %2060 = vperm.xlu0 %2059, %v83
    %v2061 = vpop.permute.xlu0 %2060
    %2063 = vset.pattern.permute.xlu0 1
    %2064 = vperm.xlu0 %2063, %v84
    %v2065 = vpop.permute.xlu0 %2064
    %2067 = vset.pattern.permute.xlu0 1
    %2068 = vperm.xlu0 %2067, %v85
    %v2069 = vpop.permute.xlu0 %2068
    %2071 = vset.pattern.permute.xlu0 1
    %2072 = vperm.xlu0 %2071, %v86
    %v2073 = vpop.permute.xlu0 %2072
    %2075 = vset.pattern.permute.xlu0 1
    %2076 = vperm.xlu0 %2075, %v87
    %v2077 = vpop.permute.xlu0 %2076
    %2079 = vset.pattern.permute.xlu0 1
    %2080 = vperm.xlu0 %2079, %v88
    %v2081 = vpop.permute.xlu0 %2080
    %2083 = vset.pattern.permute.xlu0 1
    %2084 = vperm.xlu0 %2083, %v89
    %v2085 = vpop.permute.xlu0 %2084
    %2087 = vset.pattern.permute.xlu0 1
    %2088 = vperm.xlu0 %2087, %v90
    %v2089 = vpop.permute.xlu0 %2088
    %2091 = vset.pattern.permute.xlu0 1
    %2092 = vperm.xlu0 %2091, %v91
    %v2093 = vpop.permute.xlu0 %2092
    %2095 = vset.pattern.permute.xlu0 1
    %2096 = vperm.xlu0 %2095, %v92
    %v2097 = vpop.permute.xlu0 %2096
    %2099 = vset.pattern.permute.xlu0 1
    %2100 = vperm.xlu0 %2099, %v93
    %v2101 = vpop.permute.xlu0 %2100
    %2103 = vset.pattern.permute.xlu0 1
    %2104 = vperm.xlu0 %2103, %v94
    %v2105 = vpop.permute.xlu0 %2104
    %2107 = vset.pattern.permute.xlu0 1
    %2108 = vperm.xlu0 %2107, %v95
    %v2109 = vpop.permute.xlu0 %2108
    %2111 = vset.pattern.permute.xlu0 1
    %2112 = vperm.xlu0 %2111, %v96
    %v2113 = vpop.permute.xlu0 %2112
    %2115 = vset.pattern.permute.xlu0 1
    %2116 = vperm.xlu0 %2115, %v97
    %v2117 = vpop.permute.xlu0 %2116
    %2119 = vset.pattern.permute.xlu0 1
    %2120 = vperm.xlu0 %2119, %v98
    %v2121 = vpop.permute.xlu0 %2120
    %2123 = vset.pattern.permute.xlu0 1
    %2124 = vperm.xlu0 %2123, %v99
    %v2125 = vpop.permute.xlu0 %2124
    %2127 = vset.pattern.permute.xlu0 1
    %2128 = vperm.xlu0 %2127, %v100
    %v2129 = vpop.permute.xlu0 %2128
    %2131 = vset.pattern.permute.xlu0 1
    %2132 = vperm.xlu0 %2131, %v101
    %v2133 = vpop.permute.xlu0 %2132
    %2135 = vset.pattern.permute.xlu0 1
    %2136 = vperm.xlu0 %2135, %v102
    %v2137 = vpop.permute.xlu0 %2136
    %2139 = vset.pattern.permute.xlu0 1
    %2140 = vperm.xlu0 %2139, %v103
    %v2141 = vpop.permute.xlu0 %2140
    %2143 = vset.pattern.permute.xlu0 1
    %2144 = vperm.xlu0 %2143, %v104
    %v2145 = vpop.permute.xlu0 %2144
    %2147 = vset.pattern.permute.xlu0 1
    %2148 = vperm.xlu0 %2147, %v105
    %v2149 = vpop.permute.xlu0 %2148
    %2151 = vset.pattern.permute.xlu0 1
    %2152 = vperm.xlu0 %2151, %v106
    %v2153 = vpop.permute.xlu0 %2152
    %2155 = vset.pattern.permute.xlu0 1
    %2156 = vperm.xlu0 %2155, %v107
    %v2157 = vpop.permute.xlu0 %2156
    %2159 = vset.pattern.permute.xlu0 1
    %2160 = vperm.xlu0 %2159, %v108
    %v2161 = vpop.permute.xlu0 %2160
    %2163 = vset.pattern.permute.xlu0 1
    %2164 = vperm.xlu0 %2163, %v109
    %v2165 = vpop.permute.xlu0 %2164
    %2167 = vset.pattern.permute.xlu0 1
    %2168 = vperm.xlu0 %2167, %v110
    %v2169 = vpop.permute.xlu0 %2168
    %2171 = vset.pattern.permute.xlu0 1
    %2172 = vperm.xlu0 %2171, %v111
    %v2173 = vpop.permute.xlu0 %2172
    %2175 = vset.pattern.permute.xlu0 1
    %2176 = vperm.xlu0 %2175, %v112
    %v2177 = vpop.permute.xlu0 %2176
    %2179 = vset.pattern.permute.xlu0 1
    %2180 = vperm.xlu0 %2179, %v113
    %v2181 = vpop.permute.xlu0 %2180
    %2183 = vset.pattern.permute.xlu0 1
    %2184 = vperm.xlu0 %2183, %v114
    %v2185 = vpop.permute.xlu0 %2184
    %2187 = vset.pattern.permute.xlu0 1
    %2188 = vperm.xlu0 %2187, %v115
    %v2189 = vpop.permute.xlu0 %2188
    %2191 = vset.pattern.permute.xlu0 1
    %2192 = vperm.xlu0 %2191, %v116
    %v2193 = vpop.permute.xlu0 %2192
    %2195 = vset.pattern.permute.xlu0 1
    %2196 = vperm.xlu0 %2195, %v117
    %v2197 = vpop.permute.xlu0 %2196
    %2199 = vset.pattern.permute.xlu0 1
    %2200 = vperm.xlu0 %2199, %v118
    %v2201 = vpop.permute.xlu0 %2200
    %2203 = vset.pattern.permute.xlu0 1
    %2204 = vperm.xlu0 %2203, %v119
    %v2205 = vpop.permute.xlu0 %2204
    %2207 = vset.pattern.permute.xlu0 1
    %2208 = vperm.xlu0 %2207, %v120
    %v2209 = vpop.permute.xlu0 %2208
    %2211 = vset.pattern.permute.xlu0 1
    %2212 = vperm.xlu0 %2211, %v121
    %v2213 = vpop.permute.xlu0 %2212
    %2215 = vset.pattern.permute.xlu0 1
    %2216 = vperm.xlu0 %2215, %v122
    %v2217 = vpop.permute.xlu0 %2216
    %2219 = vset.pattern.permute.xlu0 1
    %2220 = vperm.xlu0 %2219, %v123
    %v2221 = vpop.permute.xlu0 %2220
    %2223 = vset.pattern.permute.xlu0 1
    %2224 = vperm.xlu0 %2223, %v124
    %v2225 = vpop.permute.xlu0 %2224
    %2227 = vset.pattern.permute.xlu0 1
    %2228 = vperm.xlu0 %2227, %v125
    %v2229 = vpop.permute.xlu0 %2228
    %2231 = vset.pattern.permute.xlu0 1
    %2232 = vperm.xlu0 %2231, %v126
    %v2233 = vpop.permute.xlu0 %2232
    %2235 = vset.pattern.permute.xlu0 1
    %2236 = vperm.xlu0 %2235, %v127
    %v2237 = vpop.permute.xlu0 %2236
    %2239 = vset.pattern.permute.xlu0 1
    %2240 = vperm.xlu0 %2239, %v128
    %v2241 = vpop.permute.xlu0 %2240
    %2243 = vset.pattern.permute.xlu0 1
    %2244 = vperm.xlu0 %2243, %v129
    %v2245 = vpop.permute.xlu0 %2244
    %2247 = vset.pattern.permute.xlu0 1
    %2248 = vperm.xlu0 %2247, %v130
    %v2249 = vpop.permute.xlu0 %2248
    %2251 = vset.pattern.permute.xlu0 1
    %2252 = vperm.xlu0 %2251, %v131
    %v2253 = vpop.permute.xlu0 %2252
    %2255 = vset.pattern.permute.xlu0 1
    %2256 = vperm.xlu0 %2255, %v132
    %v2257 = vpop.permute.xlu0 %2256
    %2259 = vset.pattern.permute.xlu0 1
    %2260 = vperm.xlu0 %2259, %v133
    %v2261 = vpop.permute.xlu0 %2260
    %2263 = vset.pattern.permute.xlu0 1
    %2264 = vperm.xlu0 %2263, %v134
    %v2265 = vpop.permute.xlu0 %2264
    %2267 = vset.pattern.permute.xlu0 1
    %2268 = vperm.xlu0 %2267, %v135
    %v2269 = vpop.permute.xlu0 %2268
    %2271 = vset.pattern.permute.xlu0 1
    %2272 = vperm.xlu0 %2271, %v136
    %v2273 = vpop.permute.xlu0 %2272
    %2275 = vset.pattern.permute.xlu0 1
    %2276 = vperm.xlu0 %2275, %v137
    %v2277 = vpop.permute.xlu0 %2276
    %2279 = vset.pattern.permute.xlu0 1
    %2280 = vperm.xlu0 %2279, %v138
    %v2281 = vpop.permute.xlu0 %2280
    %2283 = vset.pattern.permute.xlu0 1
    %2284 = vperm.xlu0 %2283, %v139
    %v2285 = vpop.permute.xlu0 %2284
    %2287 = vset.pattern.permute.xlu0 1
    %2288 = vperm.xlu0 %2287, %v140
    %v2289 = vpop.permute.xlu0 %2288
    %2291 = vset.pattern.permute.xlu0 1
    %2292 = vperm.xlu0 %2291, %v141
    %v2293 = vpop.permute.xlu0 %2292
    %2295 = vset.pattern.permute.xlu0 1
    %2296 = vperm.xlu0 %2295, %v142
    %v2297 = vpop.permute.xlu0 %2296
    %2299 = vset.pattern.permute.xlu0 1
    %2300 = vperm.xlu0 %2299, %v143
    %v2301 = vpop.permute.xlu0 %2300
    %2303 = vset.pattern.permute.xlu0 1
    %2304 = vperm.xlu0 %2303, %v144
    %v2305 = vpop.permute.xlu0 %2304
    %2307 = vset.pattern.permute.xlu0 1
    %2308 = vperm.xlu0 %2307, %v145
    %v2309 = vpop.permute.xlu0 %2308
    %2311 = vset.pattern.permute.xlu0 1
    %2312 = vperm.xlu0 %2311, %v146
    %v2313 = vpop.permute.xlu0 %2312
    %2315 = vset.pattern.permute.xlu0 1
    %2316 = vperm.xlu0 %2315, %v147
    %v2317 = vpop.permute.xlu0 %2316
    %2319 = vset.pattern.permute.xlu0 1
    %2320 = vperm.xlu0 %2319, %v148
    %v2321 = vpop.permute.xlu0 %2320
    %2323 = vset.pattern.permute.xlu0 1
    %2324 = vperm.xlu0 %2323, %v149
    %v2325 = vpop.permute.xlu0 %2324
    %2327 = vset.pattern.permute.xlu0 1
    %2328 = vperm.xlu0 %2327, %v150
    %v2329 = vpop.permute.xlu0 %2328
    %2331 = vset.pattern.permute.xlu0 1
    %2332 = vperm.xlu0 %2331, %v151
    %v2333 = vpop.permute.xlu0 %2332
    %2335 = vset.pattern.permute.xlu0 1
    %2336 = vperm.xlu0 %2335, %v152
    %v2337 = vpop.permute.xlu0 %2336
    %2339 = vset.pattern.permute.xlu0 1
    %2340 = vperm.xlu0 %2339, %v153
    %v2341 = vpop.permute.xlu0 %2340
    %2343 = vset.pattern.permute.xlu0 1
    %2344 = vperm.xlu0 %2343, %v154
    %v2345 = vpop.permute.xlu0 %2344
    %2347 = vset.pattern.permute.xlu0 1
    %2348 = vperm.xlu0 %2347, %v155
    %v2349 = vpop.permute.xlu0 %2348
    %v2351 = vlaneseq
    %v2352 = vshrl.u32 %v2351, 7
    %v2353 = vsub.s32 1, %v2352
    %v2354 = vrot.slane %v21, %v2353
    %v2355 = vlaneseq
    %v2356 = vshrl.u32 %v2355, 7
    %v2357 = vsub.s32 5, %v2356
    %v2358 = vrot.slane %v21, %v2357
    %v2361 = vlaneseq
    %v2362 = vshrl.u32 %v2361, 7
    %v2363 = vsub.s32 1, %v2362
    %v2364 = vrot.slane %v2354, %v2363
    %v2365 = vlaneseq
    %v2366 = vshrl.u32 %v2365, 7
    %v2367 = vsub.s32 1, %v2366
    %v2368 = vrot.slane %v2358, %v2367
    %v2369 = vmul.f32 %v1841, %v2364
    %v2370 = vmul.f32 %v1841, %v2368
    %v2371 = vmul.f32 %v1845, %v2364
    %v2372 = vmul.f32 %v1845, %v2368
    %v2373 = vmul.f32 %v1849, %v2364
    %v2374 = vmul.f32 %v1849, %v2368
    %v2375 = vmul.f32 %v1853, %v2364
    %v2376 = vmul.f32 %v1853, %v2368
    %v2377 = vmul.f32 %v1857, %v2364
    %v2378 = vmul.f32 %v1857, %v2368
    %v2379 = vmul.f32 %v1861, %v2364
    %v2380 = vmul.f32 %v1861, %v2368
    %v2381 = vmul.f32 %v1865, %v2364
    %v2382 = vmul.f32 %v1865, %v2368
    %v2383 = vmul.f32 %v1869, %v2364
    %v2384 = vmul.f32 %v1869, %v2368
    %v2385 = vmul.f32 %v1873, %v2364
    %v2386 = vmul.f32 %v1873, %v2368
    %v2387 = vmul.f32 %v1877, %v2364
    %v2388 = vmul.f32 %v1877, %v2368
    %v2389 = vmul.f32 %v1881, %v2364
    %v2390 = vmul.f32 %v1881, %v2368
    %v2391 = vmul.f32 %v1885, %v2364
    %v2392 = vmul.f32 %v1885, %v2368
    %v2393 = vmul.f32 %v1889, %v2364
    %v2394 = vmul.f32 %v1889, %v2368
    %v2395 = vmul.f32 %v1893, %v2364
    %v2396 = vmul.f32 %v1893, %v2368
    %v2397 = vmul.f32 %v1897, %v2364
    %v2398 = vmul.f32 %v1897, %v2368
    %v2399 = vmul.f32 %v1901, %v2364
    %v2400 = vmul.f32 %v1901, %v2368
    %v2401 = vmul.f32 %v1905, %v2364
    %v2402 = vmul.f32 %v1905, %v2368
    %v2403 = vmul.f32 %v1909, %v2364
    %v2404 = vmul.f32 %v1909, %v2368
    %v2405 = vmul.f32 %v1913, %v2364
    %v2406 = vmul.f32 %v1913, %v2368
    %v2407 = vmul.f32 %v1917, %v2364
    %v2408 = vmul.f32 %v1917, %v2368
    %v2409 = vmul.f32 %v1921, %v2364
    %v2410 = vmul.f32 %v1921, %v2368
    %v2411 = vmul.f32 %v1925, %v2364
    %v2412 = vmul.f32 %v1925, %v2368
    %v2413 = vmul.f32 %v1929, %v2364
    %v2414 = vmul.f32 %v1929, %v2368
    %v2415 = vmul.f32 %v1933, %v2364
    %v2416 = vmul.f32 %v1933, %v2368
    %v2417 = vmul.f32 %v1937, %v2364
    %v2418 = vmul.f32 %v1937, %v2368
    %v2419 = vmul.f32 %v1941, %v2364
    %v2420 = vmul.f32 %v1941, %v2368
    %v2421 = vmul.f32 %v1945, %v2364
    %v2422 = vmul.f32 %v1945, %v2368
    %v2423 = vmul.f32 %v1949, %v2364
    %v2424 = vmul.f32 %v1949, %v2368
    %v2425 = vmul.f32 %v1953, %v2364
    %v2426 = vmul.f32 %v1953, %v2368
    %v2427 = vmul.f32 %v1957, %v2364
    %v2428 = vmul.f32 %v1957, %v2368
    %v2429 = vmul.f32 %v1961, %v2364
    %v2430 = vmul.f32 %v1961, %v2368
    %v2431 = vmul.f32 %v1965, %v2364
    %v2432 = vmul.f32 %v1965, %v2368
    %v2433 = vmul.f32 %v1969, %v2364
    %v2434 = vmul.f32 %v1969, %v2368
    %v2435 = vmul.f32 %v1973, %v2364
    %v2436 = vmul.f32 %v1973, %v2368
    %v2437 = vmul.f32 %v1977, %v2364
    %v2438 = vmul.f32 %v1977, %v2368
    %v2439 = vmul.f32 %v1981, %v2364
    %v2440 = vmul.f32 %v1981, %v2368
    %v2441 = vmul.f32 %v1985, %v2364
    %v2442 = vmul.f32 %v1985, %v2368
    %v2443 = vmul.f32 %v1989, %v2364
    %v2444 = vmul.f32 %v1989, %v2368
    %v2445 = vmul.f32 %v1993, %v2364
    %v2446 = vmul.f32 %v1993, %v2368
    %v2447 = vmul.f32 %v1997, %v2364
    %v2448 = vmul.f32 %v1997, %v2368
    %v2449 = vmul.f32 %v2001, %v2364
    %v2450 = vmul.f32 %v2001, %v2368
    %v2451 = vmul.f32 %v2005, %v2364
    %v2452 = vmul.f32 %v2005, %v2368
    %v2453 = vmul.f32 %v2009, %v2364
    %v2454 = vmul.f32 %v2009, %v2368
    %v2455 = vmul.f32 %v2013, %v2364
    %v2456 = vmul.f32 %v2013, %v2368
    %v2457 = vmul.f32 %v2017, %v2364
    %v2458 = vmul.f32 %v2017, %v2368
    %v2459 = vmul.f32 %v2021, %v2364
    %v2460 = vmul.f32 %v2021, %v2368
    %v2461 = vmul.f32 %v2025, %v2364
    %v2462 = vmul.f32 %v2025, %v2368
    %v2463 = vmul.f32 %v2029, %v2364
    %v2464 = vmul.f32 %v2029, %v2368
    %v2465 = vmul.f32 %v2033, %v2364
    %v2466 = vmul.f32 %v2033, %v2368
    %v2467 = vmul.f32 %v2037, %v2364
    %v2468 = vmul.f32 %v2037, %v2368
    %v2469 = vmul.f32 %v2041, %v2364
    %v2470 = vmul.f32 %v2041, %v2368
    %v2471 = vmul.f32 %v2045, %v2364
    %v2472 = vmul.f32 %v2045, %v2368
    %v2473 = vmul.f32 %v2049, %v2364
    %v2474 = vmul.f32 %v2049, %v2368
    %v2475 = vmul.f32 %v2053, %v2364
    %v2476 = vmul.f32 %v2053, %v2368
    %v2477 = vmul.f32 %v2057, %v2364
    %v2478 = vmul.f32 %v2057, %v2368
    %v2479 = vmul.f32 %v2061, %v2364
    %v2480 = vmul.f32 %v2061, %v2368
    %v2481 = vmul.f32 %v2065, %v2364
    %v2482 = vmul.f32 %v2065, %v2368
    %v2483 = vmul.f32 %v2069, %v2364
    %v2484 = vmul.f32 %v2069, %v2368
    %v2485 = vmul.f32 %v2073, %v2364
    %v2486 = vmul.f32 %v2073, %v2368
    %v2487 = vmul.f32 %v2077, %v2364
    %v2488 = vmul.f32 %v2077, %v2368
    %v2489 = vmul.f32 %v2081, %v2364
    %v2490 = vmul.f32 %v2081, %v2368
    %v2491 = vmul.f32 %v2085, %v2364
    %v2492 = vmul.f32 %v2085, %v2368
    %v2493 = vmul.f32 %v2089, %v2364
    %v2494 = vmul.f32 %v2089, %v2368
    %v2495 = vmul.f32 %v2093, %v2364
    %v2496 = vmul.f32 %v2093, %v2368
    %v2497 = vmul.f32 %v2097, %v2364
    %v2498 = vmul.f32 %v2097, %v2368
    %v2499 = vmul.f32 %v2101, %v2364
    %v2500 = vmul.f32 %v2101, %v2368
    %v2501 = vmul.f32 %v2105, %v2364
    %v2502 = vmul.f32 %v2105, %v2368
    %v2503 = vmul.f32 %v2109, %v2364
    %v2504 = vmul.f32 %v2109, %v2368
    %v2505 = vmul.f32 %v2113, %v2364
    %v2506 = vmul.f32 %v2113, %v2368
    %v2507 = vmul.f32 %v2117, %v2364
    %v2508 = vmul.f32 %v2117, %v2368
    %v2509 = vmul.f32 %v2121, %v2364
    %v2510 = vmul.f32 %v2121, %v2368
    %v2511 = vmul.f32 %v2125, %v2364
    %v2512 = vmul.f32 %v2125, %v2368
    %v2513 = vmul.f32 %v2129, %v2364
    %v2514 = vmul.f32 %v2129, %v2368
    %v2515 = vmul.f32 %v2133, %v2364
    %v2516 = vmul.f32 %v2133, %v2368
    %v2517 = vmul.f32 %v2137, %v2364
    %v2518 = vmul.f32 %v2137, %v2368
    %v2519 = vmul.f32 %v2141, %v2364
    %v2520 = vmul.f32 %v2141, %v2368
    %v2521 = vmul.f32 %v2145, %v2364
    %v2522 = vmul.f32 %v2145, %v2368
    %v2523 = vmul.f32 %v2149, %v2364
    %v2524 = vmul.f32 %v2149, %v2368
    %v2525 = vmul.f32 %v2153, %v2364
    %v2526 = vmul.f32 %v2153, %v2368
    %v2527 = vmul.f32 %v2157, %v2364
    %v2528 = vmul.f32 %v2157, %v2368
    %v2529 = vmul.f32 %v2161, %v2364
    %v2530 = vmul.f32 %v2161, %v2368
    %v2531 = vmul.f32 %v2165, %v2364
    %v2532 = vmul.f32 %v2165, %v2368
    %v2533 = vmul.f32 %v2169, %v2364
    %v2534 = vmul.f32 %v2169, %v2368
    %v2535 = vmul.f32 %v2173, %v2364
    %v2536 = vmul.f32 %v2173, %v2368
    %v2537 = vmul.f32 %v2177, %v2364
    %v2538 = vmul.f32 %v2177, %v2368
    %v2539 = vmul.f32 %v2181, %v2364
    %v2540 = vmul.f32 %v2181, %v2368
    %v2541 = vmul.f32 %v2185, %v2364
    %v2542 = vmul.f32 %v2185, %v2368
    %v2543 = vmul.f32 %v2189, %v2364
    %v2544 = vmul.f32 %v2189, %v2368
    %v2545 = vmul.f32 %v2193, %v2364
    %v2546 = vmul.f32 %v2193, %v2368
    %v2547 = vmul.f32 %v2197, %v2364
    %v2548 = vmul.f32 %v2197, %v2368
    %v2549 = vmul.f32 %v2201, %v2364
    %v2550 = vmul.f32 %v2201, %v2368
    %v2551 = vmul.f32 %v2205, %v2364
    %v2552 = vmul.f32 %v2205, %v2368
    %v2553 = vmul.f32 %v2209, %v2364
    %v2554 = vmul.f32 %v2209, %v2368
    %v2555 = vmul.f32 %v2213, %v2364
    %v2556 = vmul.f32 %v2213, %v2368
    %v2557 = vmul.f32 %v2217, %v2364
    %v2558 = vmul.f32 %v2217, %v2368
    %v2559 = vmul.f32 %v2221, %v2364
    %v2560 = vmul.f32 %v2221, %v2368
    %v2561 = vmul.f32 %v2225, %v2364
    %v2562 = vmul.f32 %v2225, %v2368
    %v2563 = vmul.f32 %v2229, %v2364
    %v2564 = vmul.f32 %v2229, %v2368
    %v2565 = vmul.f32 %v2233, %v2364
    %v2566 = vmul.f32 %v2233, %v2368
    %v2567 = vmul.f32 %v2237, %v2364
    %v2568 = vmul.f32 %v2237, %v2368
    %v2569 = vmul.f32 %v2241, %v2364
    %v2570 = vmul.f32 %v2241, %v2368
    %v2571 = vmul.f32 %v2245, %v2364
    %v2572 = vmul.f32 %v2245, %v2368
    %v2573 = vmul.f32 %v2249, %v2364
    %v2574 = vmul.f32 %v2249, %v2368
    %v2575 = vmul.f32 %v2253, %v2364
    %v2576 = vmul.f32 %v2253, %v2368
    %v2577 = vmul.f32 %v2257, %v2364
    %v2578 = vmul.f32 %v2257, %v2368
    %v2579 = vmul.f32 %v2261, %v2364
    %v2580 = vmul.f32 %v2261, %v2368
    %v2581 = vmul.f32 %v2265, %v2364
    %v2582 = vmul.f32 %v2265, %v2368
    %v2583 = vmul.f32 %v2269, %v2364
    %v2584 = vmul.f32 %v2269, %v2368
    %v2585 = vmul.f32 %v2273, %v2364
    %v2586 = vmul.f32 %v2273, %v2368
    %v2587 = vmul.f32 %v2277, %v2364
    %v2588 = vmul.f32 %v2277, %v2368
    %v2589 = vmul.f32 %v2281, %v2364
    %v2590 = vmul.f32 %v2281, %v2368
    %v2591 = vmul.f32 %v2285, %v2364
    %v2592 = vmul.f32 %v2285, %v2368
    %v2593 = vmul.f32 %v2289, %v2364
    %v2594 = vmul.f32 %v2289, %v2368
    %v2595 = vmul.f32 %v2293, %v2364
    %v2596 = vmul.f32 %v2293, %v2368
    %v2597 = vmul.f32 %v2297, %v2364
    %v2598 = vmul.f32 %v2297, %v2368
    %v2599 = vmul.f32 %v2301, %v2364
    %v2600 = vmul.f32 %v2301, %v2368
    %v2601 = vmul.f32 %v2305, %v2364
    %v2602 = vmul.f32 %v2305, %v2368
    %v2603 = vmul.f32 %v2309, %v2364
    %v2604 = vmul.f32 %v2309, %v2368
    %v2605 = vmul.f32 %v2313, %v2364
    %v2606 = vmul.f32 %v2313, %v2368
    %v2607 = vmul.f32 %v2317, %v2364
    %v2608 = vmul.f32 %v2317, %v2368
    %v2609 = vmul.f32 %v2321, %v2364
    %v2610 = vmul.f32 %v2321, %v2368
    %v2611 = vmul.f32 %v2325, %v2364
    %v2612 = vmul.f32 %v2325, %v2368
    %v2613 = vmul.f32 %v2329, %v2364
    %v2614 = vmul.f32 %v2329, %v2368
    %v2615 = vmul.f32 %v2333, %v2364
    %v2616 = vmul.f32 %v2333, %v2368
    %v2617 = vmul.f32 %v2337, %v2364
    %v2618 = vmul.f32 %v2337, %v2368
    %v2619 = vmul.f32 %v2341, %v2364
    %v2620 = vmul.f32 %v2341, %v2368
    %v2621 = vmul.f32 %v2345, %v2364
    %v2622 = vmul.f32 %v2345, %v2368
    %v2623 = vmul.f32 %v2349, %v2364
    %v2624 = vmul.f32 %v2349, %v2368
    %v2625 = vadd.f32 %v1583, %v2369
    %v2626 = vadd.f32 %v1584, %v2370
    %v2627 = vadd.f32 %v1585, %v2371
    %v2628 = vadd.f32 %v1586, %v2372
    %v2629 = vadd.f32 %v1587, %v2373
    %v2630 = vadd.f32 %v1588, %v2374
    %v2631 = vadd.f32 %v1589, %v2375
    %v2632 = vadd.f32 %v1590, %v2376
    %v2633 = vadd.f32 %v1591, %v2377
    %v2634 = vadd.f32 %v1592, %v2378
    %v2635 = vadd.f32 %v1593, %v2379
    %v2636 = vadd.f32 %v1594, %v2380
    %v2637 = vadd.f32 %v1595, %v2381
    %v2638 = vadd.f32 %v1596, %v2382
    %v2639 = vadd.f32 %v1597, %v2383
    %v2640 = vadd.f32 %v1598, %v2384
    %v2641 = vadd.f32 %v1599, %v2385
    %v2642 = vadd.f32 %v1600, %v2386
    %v2643 = vadd.f32 %v1601, %v2387
    %v2644 = vadd.f32 %v1602, %v2388
    %v2645 = vadd.f32 %v1603, %v2389
    %v2646 = vadd.f32 %v1604, %v2390
    %v2647 = vadd.f32 %v1605, %v2391
    %v2648 = vadd.f32 %v1606, %v2392
    %v2649 = vadd.f32 %v1607, %v2393
    %v2650 = vadd.f32 %v1608, %v2394
    %v2651 = vadd.f32 %v1609, %v2395
    %v2652 = vadd.f32 %v1610, %v2396
    %v2653 = vadd.f32 %v1611, %v2397
    %v2654 = vadd.f32 %v1612, %v2398
    %v2655 = vadd.f32 %v1613, %v2399
    %v2656 = vadd.f32 %v1614, %v2400
    %v2657 = vadd.f32 %v1615, %v2401
    %v2658 = vadd.f32 %v1616, %v2402
    %v2659 = vadd.f32 %v1617, %v2403
    %v2660 = vadd.f32 %v1618, %v2404
    %v2661 = vadd.f32 %v1619, %v2405
    %v2662 = vadd.f32 %v1620, %v2406
    %v2663 = vadd.f32 %v1621, %v2407
    %v2664 = vadd.f32 %v1622, %v2408
    %v2665 = vadd.f32 %v1623, %v2409
    %v2666 = vadd.f32 %v1624, %v2410
    %v2667 = vadd.f32 %v1625, %v2411
    %v2668 = vadd.f32 %v1626, %v2412
    %v2669 = vadd.f32 %v1627, %v2413
    %v2670 = vadd.f32 %v1628, %v2414
    %v2671 = vadd.f32 %v1629, %v2415
    %v2672 = vadd.f32 %v1630, %v2416
    %v2673 = vadd.f32 %v1631, %v2417
    %v2674 = vadd.f32 %v1632, %v2418
    %v2675 = vadd.f32 %v1633, %v2419
    %v2676 = vadd.f32 %v1634, %v2420
    %v2677 = vadd.f32 %v1635, %v2421
    %v2678 = vadd.f32 %v1636, %v2422
    %v2679 = vadd.f32 %v1637, %v2423
    %v2680 = vadd.f32 %v1638, %v2424
    %v2681 = vadd.f32 %v1639, %v2425
    %v2682 = vadd.f32 %v1640, %v2426
    %v2683 = vadd.f32 %v1641, %v2427
    %v2684 = vadd.f32 %v1642, %v2428
    %v2685 = vadd.f32 %v1643, %v2429
    %v2686 = vadd.f32 %v1644, %v2430
    %v2687 = vadd.f32 %v1645, %v2431
    %v2688 = vadd.f32 %v1646, %v2432
    %v2689 = vadd.f32 %v1647, %v2433
    %v2690 = vadd.f32 %v1648, %v2434
    %v2691 = vadd.f32 %v1649, %v2435
    %v2692 = vadd.f32 %v1650, %v2436
    %v2693 = vadd.f32 %v1651, %v2437
    %v2694 = vadd.f32 %v1652, %v2438
    %v2695 = vadd.f32 %v1653, %v2439
    %v2696 = vadd.f32 %v1654, %v2440
    %v2697 = vadd.f32 %v1655, %v2441
    %v2698 = vadd.f32 %v1656, %v2442
    %v2699 = vadd.f32 %v1657, %v2443
    %v2700 = vadd.f32 %v1658, %v2444
    %v2701 = vadd.f32 %v1659, %v2445
    %v2702 = vadd.f32 %v1660, %v2446
    %v2703 = vadd.f32 %v1661, %v2447
    %v2704 = vadd.f32 %v1662, %v2448
    %v2705 = vadd.f32 %v1663, %v2449
    %v2706 = vadd.f32 %v1664, %v2450
    %v2707 = vadd.f32 %v1665, %v2451
    %v2708 = vadd.f32 %v1666, %v2452
    %v2709 = vadd.f32 %v1667, %v2453
    %v2710 = vadd.f32 %v1668, %v2454
    %v2711 = vadd.f32 %v1669, %v2455
    %v2712 = vadd.f32 %v1670, %v2456
    %v2713 = vadd.f32 %v1671, %v2457
    %v2714 = vadd.f32 %v1672, %v2458
    %v2715 = vadd.f32 %v1673, %v2459
    %v2716 = vadd.f32 %v1674, %v2460
    %v2717 = vadd.f32 %v1675, %v2461
    %v2718 = vadd.f32 %v1676, %v2462
    %v2719 = vadd.f32 %v1677, %v2463
    %v2720 = vadd.f32 %v1678, %v2464
    %v2721 = vadd.f32 %v1679, %v2465
    %v2722 = vadd.f32 %v1680, %v2466
    %v2723 = vadd.f32 %v1681, %v2467
    %v2724 = vadd.f32 %v1682, %v2468
    %v2725 = vadd.f32 %v1683, %v2469
    %v2726 = vadd.f32 %v1684, %v2470
    %v2727 = vadd.f32 %v1685, %v2471
    %v2728 = vadd.f32 %v1686, %v2472
    %v2729 = vadd.f32 %v1687, %v2473
    %v2730 = vadd.f32 %v1688, %v2474
    %v2731 = vadd.f32 %v1689, %v2475
    %v2732 = vadd.f32 %v1690, %v2476
    %v2733 = vadd.f32 %v1691, %v2477
    %v2734 = vadd.f32 %v1692, %v2478
    %v2735 = vadd.f32 %v1693, %v2479
    %v2736 = vadd.f32 %v1694, %v2480
    %v2737 = vadd.f32 %v1695, %v2481
    %v2738 = vadd.f32 %v1696, %v2482
    %v2739 = vadd.f32 %v1697, %v2483
    %v2740 = vadd.f32 %v1698, %v2484
    %v2741 = vadd.f32 %v1699, %v2485
    %v2742 = vadd.f32 %v1700, %v2486
    %v2743 = vadd.f32 %v1701, %v2487
    %v2744 = vadd.f32 %v1702, %v2488
    %v2745 = vadd.f32 %v1703, %v2489
    %v2746 = vadd.f32 %v1704, %v2490
    %v2747 = vadd.f32 %v1705, %v2491
    %v2748 = vadd.f32 %v1706, %v2492
    %v2749 = vadd.f32 %v1707, %v2493
    %v2750 = vadd.f32 %v1708, %v2494
    %v2751 = vadd.f32 %v1709, %v2495
    %v2752 = vadd.f32 %v1710, %v2496
    %v2753 = vadd.f32 %v1711, %v2497
    %v2754 = vadd.f32 %v1712, %v2498
    %v2755 = vadd.f32 %v1713, %v2499
    %v2756 = vadd.f32 %v1714, %v2500
    %v2757 = vadd.f32 %v1715, %v2501
    %v2758 = vadd.f32 %v1716, %v2502
    %v2759 = vadd.f32 %v1717, %v2503
    %v2760 = vadd.f32 %v1718, %v2504
    %v2761 = vadd.f32 %v1719, %v2505
    %v2762 = vadd.f32 %v1720, %v2506
    %v2763 = vadd.f32 %v1721, %v2507
    %v2764 = vadd.f32 %v1722, %v2508
    %v2765 = vadd.f32 %v1723, %v2509
    %v2766 = vadd.f32 %v1724, %v2510
    %v2767 = vadd.f32 %v1725, %v2511
    %v2768 = vadd.f32 %v1726, %v2512
    %v2769 = vadd.f32 %v1727, %v2513
    %v2770 = vadd.f32 %v1728, %v2514
    %v2771 = vadd.f32 %v1729, %v2515
    %v2772 = vadd.f32 %v1730, %v2516
    %v2773 = vadd.f32 %v1731, %v2517
    %v2774 = vadd.f32 %v1732, %v2518
    %v2775 = vadd.f32 %v1733, %v2519
    %v2776 = vadd.f32 %v1734, %v2520
    %v2777 = vadd.f32 %v1735, %v2521
    %v2778 = vadd.f32 %v1736, %v2522
    %v2779 = vadd.f32 %v1737, %v2523
    %v2780 = vadd.f32 %v1738, %v2524
    %v2781 = vadd.f32 %v1739, %v2525
    %v2782 = vadd.f32 %v1740, %v2526
    %v2783 = vadd.f32 %v1741, %v2527
    %v2784 = vadd.f32 %v1742, %v2528
    %v2785 = vadd.f32 %v1743, %v2529
    %v2786 = vadd.f32 %v1744, %v2530
    %v2787 = vadd.f32 %v1745, %v2531
    %v2788 = vadd.f32 %v1746, %v2532
    %v2789 = vadd.f32 %v1747, %v2533
    %v2790 = vadd.f32 %v1748, %v2534
    %v2791 = vadd.f32 %v1749, %v2535
    %v2792 = vadd.f32 %v1750, %v2536
    %v2793 = vadd.f32 %v1751, %v2537
    %v2794 = vadd.f32 %v1752, %v2538
    %v2795 = vadd.f32 %v1753, %v2539
    %v2796 = vadd.f32 %v1754, %v2540
    %v2797 = vadd.f32 %v1755, %v2541
    %v2798 = vadd.f32 %v1756, %v2542
    %v2799 = vadd.f32 %v1757, %v2543
    %v2800 = vadd.f32 %v1758, %v2544
    %v2801 = vadd.f32 %v1759, %v2545
    %v2802 = vadd.f32 %v1760, %v2546
    %v2803 = vadd.f32 %v1761, %v2547
    %v2804 = vadd.f32 %v1762, %v2548
    %v2805 = vadd.f32 %v1763, %v2549
    %v2806 = vadd.f32 %v1764, %v2550
    %v2807 = vadd.f32 %v1765, %v2551
    %v2808 = vadd.f32 %v1766, %v2552
    %v2809 = vadd.f32 %v1767, %v2553
    %v2810 = vadd.f32 %v1768, %v2554
    %v2811 = vadd.f32 %v1769, %v2555
    %v2812 = vadd.f32 %v1770, %v2556
    %v2813 = vadd.f32 %v1771, %v2557
    %v2814 = vadd.f32 %v1772, %v2558
    %v2815 = vadd.f32 %v1773, %v2559
    %v2816 = vadd.f32 %v1774, %v2560
    %v2817 = vadd.f32 %v1775, %v2561
    %v2818 = vadd.f32 %v1776, %v2562
    %v2819 = vadd.f32 %v1777, %v2563
    %v2820 = vadd.f32 %v1778, %v2564
    %v2821 = vadd.f32 %v1779, %v2565
    %v2822 = vadd.f32 %v1780, %v2566
    %v2823 = vadd.f32 %v1781, %v2567
    %v2824 = vadd.f32 %v1782, %v2568
    %v2825 = vadd.f32 %v1783, %v2569
    %v2826 = vadd.f32 %v1784, %v2570
    %v2827 = vadd.f32 %v1785, %v2571
    %v2828 = vadd.f32 %v1786, %v2572
    %v2829 = vadd.f32 %v1787, %v2573
    %v2830 = vadd.f32 %v1788, %v2574
    %v2831 = vadd.f32 %v1789, %v2575
    %v2832 = vadd.f32 %v1790, %v2576
    %v2833 = vadd.f32 %v1791, %v2577
    %v2834 = vadd.f32 %v1792, %v2578
    %v2835 = vadd.f32 %v1793, %v2579
    %v2836 = vadd.f32 %v1794, %v2580
    %v2837 = vadd.f32 %v1795, %v2581
    %v2838 = vadd.f32 %v1796, %v2582
    %v2839 = vadd.f32 %v1797, %v2583
    %v2840 = vadd.f32 %v1798, %v2584
    %v2841 = vadd.f32 %v1799, %v2585
    %v2842 = vadd.f32 %v1800, %v2586
    %v2843 = vadd.f32 %v1801, %v2587
    %v2844 = vadd.f32 %v1802, %v2588
    %v2845 = vadd.f32 %v1803, %v2589
    %v2846 = vadd.f32 %v1804, %v2590
    %v2847 = vadd.f32 %v1805, %v2591
    %v2848 = vadd.f32 %v1806, %v2592
    %v2849 = vadd.f32 %v1807, %v2593
    %v2850 = vadd.f32 %v1808, %v2594
    %v2851 = vadd.f32 %v1809, %v2595
    %v2852 = vadd.f32 %v1810, %v2596
    %v2853 = vadd.f32 %v1811, %v2597
    %v2854 = vadd.f32 %v1812, %v2598
    %v2855 = vadd.f32 %v1813, %v2599
    %v2856 = vadd.f32 %v1814, %v2600
    %v2857 = vadd.f32 %v1815, %v2601
    %v2858 = vadd.f32 %v1816, %v2602
    %v2859 = vadd.f32 %v1817, %v2603
    %v2860 = vadd.f32 %v1818, %v2604
    %v2861 = vadd.f32 %v1819, %v2605
    %v2862 = vadd.f32 %v1820, %v2606
    %v2863 = vadd.f32 %v1821, %v2607
    %v2864 = vadd.f32 %v1822, %v2608
    %v2865 = vadd.f32 %v1823, %v2609
    %v2866 = vadd.f32 %v1824, %v2610
    %v2867 = vadd.f32 %v1825, %v2611
    %v2868 = vadd.f32 %v1826, %v2612
    %v2869 = vadd.f32 %v1827, %v2613
    %v2870 = vadd.f32 %v1828, %v2614
    %v2871 = vadd.f32 %v1829, %v2615
    %v2872 = vadd.f32 %v1830, %v2616
    %v2873 = vadd.f32 %v1831, %v2617
    %v2874 = vadd.f32 %v1832, %v2618
    %v2875 = vadd.f32 %v1833, %v2619
    %v2876 = vadd.f32 %v1834, %v2620
    %v2877 = vadd.f32 %v1835, %v2621
    %v2878 = vadd.f32 %v1836, %v2622
    %v2879 = vadd.f32 %v1837, %v2623
    %v2880 = vadd.f32 %v1838, %v2624
    %2881 = vset.pattern.permute.xlu0 2
    %2882 = vperm.xlu0 %2881, %v28
    %v2883 = vpop.permute.xlu0 %2882
    %2885 = vset.pattern.permute.xlu0 2
    %2886 = vperm.xlu0 %2885, %v29
    %v2887 = vpop.permute.xlu0 %2886
    %2889 = vset.pattern.permute.xlu0 2
    %2890 = vperm.xlu0 %2889, %v30
    %v2891 = vpop.permute.xlu0 %2890
    %2893 = vset.pattern.permute.xlu0 2
    %2894 = vperm.xlu0 %2893, %v31
    %v2895 = vpop.permute.xlu0 %2894
    %2897 = vset.pattern.permute.xlu0 2
    %2898 = vperm.xlu0 %2897, %v32
    %v2899 = vpop.permute.xlu0 %2898
    %2901 = vset.pattern.permute.xlu0 2
    %2902 = vperm.xlu0 %2901, %v33
    %v2903 = vpop.permute.xlu0 %2902
    %2905 = vset.pattern.permute.xlu0 2
    %2906 = vperm.xlu0 %2905, %v34
    %v2907 = vpop.permute.xlu0 %2906
    %2909 = vset.pattern.permute.xlu0 2
    %2910 = vperm.xlu0 %2909, %v35
    %v2911 = vpop.permute.xlu0 %2910
    %2913 = vset.pattern.permute.xlu0 2
    %2914 = vperm.xlu0 %2913, %v36
    %v2915 = vpop.permute.xlu0 %2914
    %2917 = vset.pattern.permute.xlu0 2
    %2918 = vperm.xlu0 %2917, %v37
    %v2919 = vpop.permute.xlu0 %2918
    %2921 = vset.pattern.permute.xlu0 2
    %2922 = vperm.xlu0 %2921, %v38
    %v2923 = vpop.permute.xlu0 %2922
    %2925 = vset.pattern.permute.xlu0 2
    %2926 = vperm.xlu0 %2925, %v39
    %v2927 = vpop.permute.xlu0 %2926
    %2929 = vset.pattern.permute.xlu0 2
    %2930 = vperm.xlu0 %2929, %v40
    %v2931 = vpop.permute.xlu0 %2930
    %2933 = vset.pattern.permute.xlu0 2
    %2934 = vperm.xlu0 %2933, %v41
    %v2935 = vpop.permute.xlu0 %2934
    %2937 = vset.pattern.permute.xlu0 2
    %2938 = vperm.xlu0 %2937, %v42
    %v2939 = vpop.permute.xlu0 %2938
    %2941 = vset.pattern.permute.xlu0 2
    %2942 = vperm.xlu0 %2941, %v43
    %v2943 = vpop.permute.xlu0 %2942
    %2945 = vset.pattern.permute.xlu0 2
    %2946 = vperm.xlu0 %2945, %v44
    %v2947 = vpop.permute.xlu0 %2946
    %2949 = vset.pattern.permute.xlu0 2
    %2950 = vperm.xlu0 %2949, %v45
    %v2951 = vpop.permute.xlu0 %2950
    %2953 = vset.pattern.permute.xlu0 2
    %2954 = vperm.xlu0 %2953, %v46
    %v2955 = vpop.permute.xlu0 %2954
    %2957 = vset.pattern.permute.xlu0 2
    %2958 = vperm.xlu0 %2957, %v47
    %v2959 = vpop.permute.xlu0 %2958
    %2961 = vset.pattern.permute.xlu0 2
    %2962 = vperm.xlu0 %2961, %v48
    %v2963 = vpop.permute.xlu0 %2962
    %2965 = vset.pattern.permute.xlu0 2
    %2966 = vperm.xlu0 %2965, %v49
    %v2967 = vpop.permute.xlu0 %2966
    %2969 = vset.pattern.permute.xlu0 2
    %2970 = vperm.xlu0 %2969, %v50
    %v2971 = vpop.permute.xlu0 %2970
    %2973 = vset.pattern.permute.xlu0 2
    %2974 = vperm.xlu0 %2973, %v51
    %v2975 = vpop.permute.xlu0 %2974
    %2977 = vset.pattern.permute.xlu0 2
    %2978 = vperm.xlu0 %2977, %v52
    %v2979 = vpop.permute.xlu0 %2978
    %2981 = vset.pattern.permute.xlu0 2
    %2982 = vperm.xlu0 %2981, %v53
    %v2983 = vpop.permute.xlu0 %2982
    %2985 = vset.pattern.permute.xlu0 2
    %2986 = vperm.xlu0 %2985, %v54
    %v2987 = vpop.permute.xlu0 %2986
    %2989 = vset.pattern.permute.xlu0 2
    %2990 = vperm.xlu0 %2989, %v55
    %v2991 = vpop.permute.xlu0 %2990
    %2993 = vset.pattern.permute.xlu0 2
    %2994 = vperm.xlu0 %2993, %v56
    %v2995 = vpop.permute.xlu0 %2994
    %2997 = vset.pattern.permute.xlu0 2
    %2998 = vperm.xlu0 %2997, %v57
    %v2999 = vpop.permute.xlu0 %2998
    %3001 = vset.pattern.permute.xlu0 2
    %3002 = vperm.xlu0 %3001, %v58
    %v3003 = vpop.permute.xlu0 %3002
    %3005 = vset.pattern.permute.xlu0 2
    %3006 = vperm.xlu0 %3005, %v59
    %v3007 = vpop.permute.xlu0 %3006
    %3009 = vset.pattern.permute.xlu0 2
    %3010 = vperm.xlu0 %3009, %v60
    %v3011 = vpop.permute.xlu0 %3010
    %3013 = vset.pattern.permute.xlu0 2
    %3014 = vperm.xlu0 %3013, %v61
    %v3015 = vpop.permute.xlu0 %3014
    %3017 = vset.pattern.permute.xlu0 2
    %3018 = vperm.xlu0 %3017, %v62
    %v3019 = vpop.permute.xlu0 %3018
    %3021 = vset.pattern.permute.xlu0 2
    %3022 = vperm.xlu0 %3021, %v63
    %v3023 = vpop.permute.xlu0 %3022
    %3025 = vset.pattern.permute.xlu0 2
    %3026 = vperm.xlu0 %3025, %v64
    %v3027 = vpop.permute.xlu0 %3026
    %3029 = vset.pattern.permute.xlu0 2
    %3030 = vperm.xlu0 %3029, %v65
    %v3031 = vpop.permute.xlu0 %3030
    %3033 = vset.pattern.permute.xlu0 2
    %3034 = vperm.xlu0 %3033, %v66
    %v3035 = vpop.permute.xlu0 %3034
    %3037 = vset.pattern.permute.xlu0 2
    %3038 = vperm.xlu0 %3037, %v67
    %v3039 = vpop.permute.xlu0 %3038
    %3041 = vset.pattern.permute.xlu0 2
    %3042 = vperm.xlu0 %3041, %v68
    %v3043 = vpop.permute.xlu0 %3042
    %3045 = vset.pattern.permute.xlu0 2
    %3046 = vperm.xlu0 %3045, %v69
    %v3047 = vpop.permute.xlu0 %3046
    %3049 = vset.pattern.permute.xlu0 2
    %3050 = vperm.xlu0 %3049, %v70
    %v3051 = vpop.permute.xlu0 %3050
    %3053 = vset.pattern.permute.xlu0 2
    %3054 = vperm.xlu0 %3053, %v71
    %v3055 = vpop.permute.xlu0 %3054
    %3057 = vset.pattern.permute.xlu0 2
    %3058 = vperm.xlu0 %3057, %v72
    %v3059 = vpop.permute.xlu0 %3058
    %3061 = vset.pattern.permute.xlu0 2
    %3062 = vperm.xlu0 %3061, %v73
    %v3063 = vpop.permute.xlu0 %3062
    %3065 = vset.pattern.permute.xlu0 2
    %3066 = vperm.xlu0 %3065, %v74
    %v3067 = vpop.permute.xlu0 %3066
    %3069 = vset.pattern.permute.xlu0 2
    %3070 = vperm.xlu0 %3069, %v75
    %v3071 = vpop.permute.xlu0 %3070
    %3073 = vset.pattern.permute.xlu0 2
    %3074 = vperm.xlu0 %3073, %v76
    %v3075 = vpop.permute.xlu0 %3074
    %3077 = vset.pattern.permute.xlu0 2
    %3078 = vperm.xlu0 %3077, %v77
    %v3079 = vpop.permute.xlu0 %3078
    %3081 = vset.pattern.permute.xlu0 2
    %3082 = vperm.xlu0 %3081, %v78
    %v3083 = vpop.permute.xlu0 %3082
    %3085 = vset.pattern.permute.xlu0 2
    %3086 = vperm.xlu0 %3085, %v79
    %v3087 = vpop.permute.xlu0 %3086
    %3089 = vset.pattern.permute.xlu0 2
    %3090 = vperm.xlu0 %3089, %v80
    %v3091 = vpop.permute.xlu0 %3090
    %3093 = vset.pattern.permute.xlu0 2
    %3094 = vperm.xlu0 %3093, %v81
    %v3095 = vpop.permute.xlu0 %3094
    %3097 = vset.pattern.permute.xlu0 2
    %3098 = vperm.xlu0 %3097, %v82
    %v3099 = vpop.permute.xlu0 %3098
    %3101 = vset.pattern.permute.xlu0 2
    %3102 = vperm.xlu0 %3101, %v83
    %v3103 = vpop.permute.xlu0 %3102
    %3105 = vset.pattern.permute.xlu0 2
    %3106 = vperm.xlu0 %3105, %v84
    %v3107 = vpop.permute.xlu0 %3106
    %3109 = vset.pattern.permute.xlu0 2
    %3110 = vperm.xlu0 %3109, %v85
    %v3111 = vpop.permute.xlu0 %3110
    %3113 = vset.pattern.permute.xlu0 2
    %3114 = vperm.xlu0 %3113, %v86
    %v3115 = vpop.permute.xlu0 %3114
    %3117 = vset.pattern.permute.xlu0 2
    %3118 = vperm.xlu0 %3117, %v87
    %v3119 = vpop.permute.xlu0 %3118
    %3121 = vset.pattern.permute.xlu0 2
    %3122 = vperm.xlu0 %3121, %v88
    %v3123 = vpop.permute.xlu0 %3122
    %3125 = vset.pattern.permute.xlu0 2
    %3126 = vperm.xlu0 %3125, %v89
    %v3127 = vpop.permute.xlu0 %3126
    %3129 = vset.pattern.permute.xlu0 2
    %3130 = vperm.xlu0 %3129, %v90
    %v3131 = vpop.permute.xlu0 %3130
    %3133 = vset.pattern.permute.xlu0 2
    %3134 = vperm.xlu0 %3133, %v91
    %v3135 = vpop.permute.xlu0 %3134
    %3137 = vset.pattern.permute.xlu0 2
    %3138 = vperm.xlu0 %3137, %v92
    %v3139 = vpop.permute.xlu0 %3138
    %3141 = vset.pattern.permute.xlu0 2
    %3142 = vperm.xlu0 %3141, %v93
    %v3143 = vpop.permute.xlu0 %3142
    %3145 = vset.pattern.permute.xlu0 2
    %3146 = vperm.xlu0 %3145, %v94
    %v3147 = vpop.permute.xlu0 %3146
    %3149 = vset.pattern.permute.xlu0 2
    %3150 = vperm.xlu0 %3149, %v95
    %v3151 = vpop.permute.xlu0 %3150
    %3153 = vset.pattern.permute.xlu0 2
    %3154 = vperm.xlu0 %3153, %v96
    %v3155 = vpop.permute.xlu0 %3154
    %3157 = vset.pattern.permute.xlu0 2
    %3158 = vperm.xlu0 %3157, %v97
    %v3159 = vpop.permute.xlu0 %3158
    %3161 = vset.pattern.permute.xlu0 2
    %3162 = vperm.xlu0 %3161, %v98
    %v3163 = vpop.permute.xlu0 %3162
    %3165 = vset.pattern.permute.xlu0 2
    %3166 = vperm.xlu0 %3165, %v99
    %v3167 = vpop.permute.xlu0 %3166
    %3169 = vset.pattern.permute.xlu0 2
    %3170 = vperm.xlu0 %3169, %v100
    %v3171 = vpop.permute.xlu0 %3170
    %3173 = vset.pattern.permute.xlu0 2
    %3174 = vperm.xlu0 %3173, %v101
    %v3175 = vpop.permute.xlu0 %3174
    %3177 = vset.pattern.permute.xlu0 2
    %3178 = vperm.xlu0 %3177, %v102
    %v3179 = vpop.permute.xlu0 %3178
    %3181 = vset.pattern.permute.xlu0 2
    %3182 = vperm.xlu0 %3181, %v103
    %v3183 = vpop.permute.xlu0 %3182
    %3185 = vset.pattern.permute.xlu0 2
    %3186 = vperm.xlu0 %3185, %v104
    %v3187 = vpop.permute.xlu0 %3186
    %3189 = vset.pattern.permute.xlu0 2
    %3190 = vperm.xlu0 %3189, %v105
    %v3191 = vpop.permute.xlu0 %3190
    %3193 = vset.pattern.permute.xlu0 2
    %3194 = vperm.xlu0 %3193, %v106
    %v3195 = vpop.permute.xlu0 %3194
    %3197 = vset.pattern.permute.xlu0 2
    %3198 = vperm.xlu0 %3197, %v107
    %v3199 = vpop.permute.xlu0 %3198
    %3201 = vset.pattern.permute.xlu0 2
    %3202 = vperm.xlu0 %3201, %v108
    %v3203 = vpop.permute.xlu0 %3202
    %3205 = vset.pattern.permute.xlu0 2
    %3206 = vperm.xlu0 %3205, %v109
    %v3207 = vpop.permute.xlu0 %3206
    %3209 = vset.pattern.permute.xlu0 2
    %3210 = vperm.xlu0 %3209, %v110
    %v3211 = vpop.permute.xlu0 %3210
    %3213 = vset.pattern.permute.xlu0 2
    %3214 = vperm.xlu0 %3213, %v111
    %v3215 = vpop.permute.xlu0 %3214
    %3217 = vset.pattern.permute.xlu0 2
    %3218 = vperm.xlu0 %3217, %v112
    %v3219 = vpop.permute.xlu0 %3218
    %3221 = vset.pattern.permute.xlu0 2
    %3222 = vperm.xlu0 %3221, %v113
    %v3223 = vpop.permute.xlu0 %3222
    %3225 = vset.pattern.permute.xlu0 2
    %3226 = vperm.xlu0 %3225, %v114
    %v3227 = vpop.permute.xlu0 %3226
    %3229 = vset.pattern.permute.xlu0 2
    %3230 = vperm.xlu0 %3229, %v115
    %v3231 = vpop.permute.xlu0 %3230
    %3233 = vset.pattern.permute.xlu0 2
    %3234 = vperm.xlu0 %3233, %v116
    %v3235 = vpop.permute.xlu0 %3234
    %3237 = vset.pattern.permute.xlu0 2
    %3238 = vperm.xlu0 %3237, %v117
    %v3239 = vpop.permute.xlu0 %3238
    %3241 = vset.pattern.permute.xlu0 2
    %3242 = vperm.xlu0 %3241, %v118
    %v3243 = vpop.permute.xlu0 %3242
    %3245 = vset.pattern.permute.xlu0 2
    %3246 = vperm.xlu0 %3245, %v119
    %v3247 = vpop.permute.xlu0 %3246
    %3249 = vset.pattern.permute.xlu0 2
    %3250 = vperm.xlu0 %3249, %v120
    %v3251 = vpop.permute.xlu0 %3250
    %3253 = vset.pattern.permute.xlu0 2
    %3254 = vperm.xlu0 %3253, %v121
    %v3255 = vpop.permute.xlu0 %3254
    %3257 = vset.pattern.permute.xlu0 2
    %3258 = vperm.xlu0 %3257, %v122
    %v3259 = vpop.permute.xlu0 %3258
    %3261 = vset.pattern.permute.xlu0 2
    %3262 = vperm.xlu0 %3261, %v123
    %v3263 = vpop.permute.xlu0 %3262
    %3265 = vset.pattern.permute.xlu0 2
    %3266 = vperm.xlu0 %3265, %v124
    %v3267 = vpop.permute.xlu0 %3266
    %3269 = vset.pattern.permute.xlu0 2
    %3270 = vperm.xlu0 %3269, %v125
    %v3271 = vpop.permute.xlu0 %3270
    %3273 = vset.pattern.permute.xlu0 2
    %3274 = vperm.xlu0 %3273, %v126
    %v3275 = vpop.permute.xlu0 %3274
    %3277 = vset.pattern.permute.xlu0 2
    %3278 = vperm.xlu0 %3277, %v127
    %v3279 = vpop.permute.xlu0 %3278
    %3281 = vset.pattern.permute.xlu0 2
    %3282 = vperm.xlu0 %3281, %v128
    %v3283 = vpop.permute.xlu0 %3282
    %3285 = vset.pattern.permute.xlu0 2
    %3286 = vperm.xlu0 %3285, %v129
    %v3287 = vpop.permute.xlu0 %3286
    %3289 = vset.pattern.permute.xlu0 2
    %3290 = vperm.xlu0 %3289, %v130
    %v3291 = vpop.permute.xlu0 %3290
    %3293 = vset.pattern.permute.xlu0 2
    %3294 = vperm.xlu0 %3293, %v131
    %v3295 = vpop.permute.xlu0 %3294
    %3297 = vset.pattern.permute.xlu0 2
    %3298 = vperm.xlu0 %3297, %v132
    %v3299 = vpop.permute.xlu0 %3298
    %3301 = vset.pattern.permute.xlu0 2
    %3302 = vperm.xlu0 %3301, %v133
    %v3303 = vpop.permute.xlu0 %3302
    %3305 = vset.pattern.permute.xlu0 2
    %3306 = vperm.xlu0 %3305, %v134
    %v3307 = vpop.permute.xlu0 %3306
    %3309 = vset.pattern.permute.xlu0 2
    %3310 = vperm.xlu0 %3309, %v135
    %v3311 = vpop.permute.xlu0 %3310
    %3313 = vset.pattern.permute.xlu0 2
    %3314 = vperm.xlu0 %3313, %v136
    %v3315 = vpop.permute.xlu0 %3314
    %3317 = vset.pattern.permute.xlu0 2
    %3318 = vperm.xlu0 %3317, %v137
    %v3319 = vpop.permute.xlu0 %3318
    %3321 = vset.pattern.permute.xlu0 2
    %3322 = vperm.xlu0 %3321, %v138
    %v3323 = vpop.permute.xlu0 %3322
    %3325 = vset.pattern.permute.xlu0 2
    %3326 = vperm.xlu0 %3325, %v139
    %v3327 = vpop.permute.xlu0 %3326
    %3329 = vset.pattern.permute.xlu0 2
    %3330 = vperm.xlu0 %3329, %v140
    %v3331 = vpop.permute.xlu0 %3330
    %3333 = vset.pattern.permute.xlu0 2
    %3334 = vperm.xlu0 %3333, %v141
    %v3335 = vpop.permute.xlu0 %3334
    %3337 = vset.pattern.permute.xlu0 2
    %3338 = vperm.xlu0 %3337, %v142
    %v3339 = vpop.permute.xlu0 %3338
    %3341 = vset.pattern.permute.xlu0 2
    %3342 = vperm.xlu0 %3341, %v143
    %v3343 = vpop.permute.xlu0 %3342
    %3345 = vset.pattern.permute.xlu0 2
    %3346 = vperm.xlu0 %3345, %v144
    %v3347 = vpop.permute.xlu0 %3346
    %3349 = vset.pattern.permute.xlu0 2
    %3350 = vperm.xlu0 %3349, %v145
    %v3351 = vpop.permute.xlu0 %3350
    %3353 = vset.pattern.permute.xlu0 2
    %3354 = vperm.xlu0 %3353, %v146
    %v3355 = vpop.permute.xlu0 %3354
    %3357 = vset.pattern.permute.xlu0 2
    %3358 = vperm.xlu0 %3357, %v147
    %v3359 = vpop.permute.xlu0 %3358
    %3361 = vset.pattern.permute.xlu0 2
    %3362 = vperm.xlu0 %3361, %v148
    %v3363 = vpop.permute.xlu0 %3362
    %3365 = vset.pattern.permute.xlu0 2
    %3366 = vperm.xlu0 %3365, %v149
    %v3367 = vpop.permute.xlu0 %3366
    %3369 = vset.pattern.permute.xlu0 2
    %3370 = vperm.xlu0 %3369, %v150
    %v3371 = vpop.permute.xlu0 %3370
    %3373 = vset.pattern.permute.xlu0 2
    %3374 = vperm.xlu0 %3373, %v151
    %v3375 = vpop.permute.xlu0 %3374
    %3377 = vset.pattern.permute.xlu0 2
    %3378 = vperm.xlu0 %3377, %v152
    %v3379 = vpop.permute.xlu0 %3378
    %3381 = vset.pattern.permute.xlu0 2
    %3382 = vperm.xlu0 %3381, %v153
    %v3383 = vpop.permute.xlu0 %3382
    %3385 = vset.pattern.permute.xlu0 2
    %3386 = vperm.xlu0 %3385, %v154
    %v3387 = vpop.permute.xlu0 %3386
    %3389 = vset.pattern.permute.xlu0 2
    %3390 = vperm.xlu0 %3389, %v155
    %v3391 = vpop.permute.xlu0 %3390
    %v3393 = vlaneseq
    %v3394 = vshrl.u32 %v3393, 7
    %v3395 = vsub.s32 2, %v3394
    %v3396 = vrot.slane %v21, %v3395
    %v3397 = vlaneseq
    %v3398 = vshrl.u32 %v3397, 7
    %v3399 = vsub.s32 6, %v3398
    %v3400 = vrot.slane %v21, %v3399
    %v3403 = vlaneseq
    %v3404 = vshrl.u32 %v3403, 7
    %v3405 = vsub.s32 2, %v3404
    %v3406 = vrot.slane %v3396, %v3405
    %v3407 = vlaneseq
    %v3408 = vshrl.u32 %v3407, 7
    %v3409 = vsub.s32 2, %v3408
    %v3410 = vrot.slane %v3400, %v3409
    %v3411 = vmul.f32 %v2883, %v3406
    %v3412 = vmul.f32 %v2883, %v3410
    %v3413 = vmul.f32 %v2887, %v3406
    %v3414 = vmul.f32 %v2887, %v3410
    %v3415 = vmul.f32 %v2891, %v3406
    %v3416 = vmul.f32 %v2891, %v3410
    %v3417 = vmul.f32 %v2895, %v3406
    %v3418 = vmul.f32 %v2895, %v3410
    %v3419 = vmul.f32 %v2899, %v3406
    %v3420 = vmul.f32 %v2899, %v3410
    %v3421 = vmul.f32 %v2903, %v3406
    %v3422 = vmul.f32 %v2903, %v3410
    %v3423 = vmul.f32 %v2907, %v3406
    %v3424 = vmul.f32 %v2907, %v3410
    %v3425 = vmul.f32 %v2911, %v3406
    %v3426 = vmul.f32 %v2911, %v3410
    %v3427 = vmul.f32 %v2915, %v3406
    %v3428 = vmul.f32 %v2915, %v3410
    %v3429 = vmul.f32 %v2919, %v3406
    %v3430 = vmul.f32 %v2919, %v3410
    %v3431 = vmul.f32 %v2923, %v3406
    %v3432 = vmul.f32 %v2923, %v3410
    %v3433 = vmul.f32 %v2927, %v3406
    %v3434 = vmul.f32 %v2927, %v3410
    %v3435 = vmul.f32 %v2931, %v3406
    %v3436 = vmul.f32 %v2931, %v3410
    %v3437 = vmul.f32 %v2935, %v3406
    %v3438 = vmul.f32 %v2935, %v3410
    %v3439 = vmul.f32 %v2939, %v3406
    %v3440 = vmul.f32 %v2939, %v3410
    %v3441 = vmul.f32 %v2943, %v3406
    %v3442 = vmul.f32 %v2943, %v3410
    %v3443 = vmul.f32 %v2947, %v3406
    %v3444 = vmul.f32 %v2947, %v3410
    %v3445 = vmul.f32 %v2951, %v3406
    %v3446 = vmul.f32 %v2951, %v3410
    %v3447 = vmul.f32 %v2955, %v3406
    %v3448 = vmul.f32 %v2955, %v3410
    %v3449 = vmul.f32 %v2959, %v3406
    %v3450 = vmul.f32 %v2959, %v3410
    %v3451 = vmul.f32 %v2963, %v3406
    %v3452 = vmul.f32 %v2963, %v3410
    %v3453 = vmul.f32 %v2967, %v3406
    %v3454 = vmul.f32 %v2967, %v3410
    %v3455 = vmul.f32 %v2971, %v3406
    %v3456 = vmul.f32 %v2971, %v3410
    %v3457 = vmul.f32 %v2975, %v3406
    %v3458 = vmul.f32 %v2975, %v3410
    %v3459 = vmul.f32 %v2979, %v3406
    %v3460 = vmul.f32 %v2979, %v3410
    %v3461 = vmul.f32 %v2983, %v3406
    %v3462 = vmul.f32 %v2983, %v3410
    %v3463 = vmul.f32 %v2987, %v3406
    %v3464 = vmul.f32 %v2987, %v3410
    %v3465 = vmul.f32 %v2991, %v3406
    %v3466 = vmul.f32 %v2991, %v3410
    %v3467 = vmul.f32 %v2995, %v3406
    %v3468 = vmul.f32 %v2995, %v3410
    %v3469 = vmul.f32 %v2999, %v3406
    %v3470 = vmul.f32 %v2999, %v3410
    %v3471 = vmul.f32 %v3003, %v3406
    %v3472 = vmul.f32 %v3003, %v3410
    %v3473 = vmul.f32 %v3007, %v3406
    %v3474 = vmul.f32 %v3007, %v3410
    %v3475 = vmul.f32 %v3011, %v3406
    %v3476 = vmul.f32 %v3011, %v3410
    %v3477 = vmul.f32 %v3015, %v3406
    %v3478 = vmul.f32 %v3015, %v3410
    %v3479 = vmul.f32 %v3019, %v3406
    %v3480 = vmul.f32 %v3019, %v3410
    %v3481 = vmul.f32 %v3023, %v3406
    %v3482 = vmul.f32 %v3023, %v3410
    %v3483 = vmul.f32 %v3027, %v3406
    %v3484 = vmul.f32 %v3027, %v3410
    %v3485 = vmul.f32 %v3031, %v3406
    %v3486 = vmul.f32 %v3031, %v3410
    %v3487 = vmul.f32 %v3035, %v3406
    %v3488 = vmul.f32 %v3035, %v3410
    %v3489 = vmul.f32 %v3039, %v3406
    %v3490 = vmul.f32 %v3039, %v3410
    %v3491 = vmul.f32 %v3043, %v3406
    %v3492 = vmul.f32 %v3043, %v3410
    %v3493 = vmul.f32 %v3047, %v3406
    %v3494 = vmul.f32 %v3047, %v3410
    %v3495 = vmul.f32 %v3051, %v3406
    %v3496 = vmul.f32 %v3051, %v3410
    %v3497 = vmul.f32 %v3055, %v3406
    %v3498 = vmul.f32 %v3055, %v3410
    %v3499 = vmul.f32 %v3059, %v3406
    %v3500 = vmul.f32 %v3059, %v3410
    %v3501 = vmul.f32 %v3063, %v3406
    %v3502 = vmul.f32 %v3063, %v3410
    %v3503 = vmul.f32 %v3067, %v3406
    %v3504 = vmul.f32 %v3067, %v3410
    %v3505 = vmul.f32 %v3071, %v3406
    %v3506 = vmul.f32 %v3071, %v3410
    %v3507 = vmul.f32 %v3075, %v3406
    %v3508 = vmul.f32 %v3075, %v3410
    %v3509 = vmul.f32 %v3079, %v3406
    %v3510 = vmul.f32 %v3079, %v3410
    %v3511 = vmul.f32 %v3083, %v3406
    %v3512 = vmul.f32 %v3083, %v3410
    %v3513 = vmul.f32 %v3087, %v3406
    %v3514 = vmul.f32 %v3087, %v3410
    %v3515 = vmul.f32 %v3091, %v3406
    %v3516 = vmul.f32 %v3091, %v3410
    %v3517 = vmul.f32 %v3095, %v3406
    %v3518 = vmul.f32 %v3095, %v3410
    %v3519 = vmul.f32 %v3099, %v3406
    %v3520 = vmul.f32 %v3099, %v3410
    %v3521 = vmul.f32 %v3103, %v3406
    %v3522 = vmul.f32 %v3103, %v3410
    %v3523 = vmul.f32 %v3107, %v3406
    %v3524 = vmul.f32 %v3107, %v3410
    %v3525 = vmul.f32 %v3111, %v3406
    %v3526 = vmul.f32 %v3111, %v3410
    %v3527 = vmul.f32 %v3115, %v3406
    %v3528 = vmul.f32 %v3115, %v3410
    %v3529 = vmul.f32 %v3119, %v3406
    %v3530 = vmul.f32 %v3119, %v3410
    %v3531 = vmul.f32 %v3123, %v3406
    %v3532 = vmul.f32 %v3123, %v3410
    %v3533 = vmul.f32 %v3127, %v3406
    %v3534 = vmul.f32 %v3127, %v3410
    %v3535 = vmul.f32 %v3131, %v3406
    %v3536 = vmul.f32 %v3131, %v3410
    %v3537 = vmul.f32 %v3135, %v3406
    %v3538 = vmul.f32 %v3135, %v3410
    %v3539 = vmul.f32 %v3139, %v3406
    %v3540 = vmul.f32 %v3139, %v3410
    %v3541 = vmul.f32 %v3143, %v3406
    %v3542 = vmul.f32 %v3143, %v3410
    %v3543 = vmul.f32 %v3147, %v3406
    %v3544 = vmul.f32 %v3147, %v3410
    %v3545 = vmul.f32 %v3151, %v3406
    %v3546 = vmul.f32 %v3151, %v3410
    %v3547 = vmul.f32 %v3155, %v3406
    %v3548 = vmul.f32 %v3155, %v3410
    %v3549 = vmul.f32 %v3159, %v3406
    %v3550 = vmul.f32 %v3159, %v3410
    %v3551 = vmul.f32 %v3163, %v3406
    %v3552 = vmul.f32 %v3163, %v3410
    %v3553 = vmul.f32 %v3167, %v3406
    %v3554 = vmul.f32 %v3167, %v3410
    %v3555 = vmul.f32 %v3171, %v3406
    %v3556 = vmul.f32 %v3171, %v3410
    %v3557 = vmul.f32 %v3175, %v3406
    %v3558 = vmul.f32 %v3175, %v3410
    %v3559 = vmul.f32 %v3179, %v3406
    %v3560 = vmul.f32 %v3179, %v3410
    %v3561 = vmul.f32 %v3183, %v3406
    %v3562 = vmul.f32 %v3183, %v3410
    %v3563 = vmul.f32 %v3187, %v3406
    %v3564 = vmul.f32 %v3187, %v3410
    %v3565 = vmul.f32 %v3191, %v3406
    %v3566 = vmul.f32 %v3191, %v3410
    %v3567 = vmul.f32 %v3195, %v3406
    %v3568 = vmul.f32 %v3195, %v3410
    %v3569 = vmul.f32 %v3199, %v3406
    %v3570 = vmul.f32 %v3199, %v3410
    %v3571 = vmul.f32 %v3203, %v3406
    %v3572 = vmul.f32 %v3203, %v3410
    %v3573 = vmul.f32 %v3207, %v3406
    %v3574 = vmul.f32 %v3207, %v3410
    %v3575 = vmul.f32 %v3211, %v3406
    %v3576 = vmul.f32 %v3211, %v3410
    %v3577 = vmul.f32 %v3215, %v3406
    %v3578 = vmul.f32 %v3215, %v3410
    %v3579 = vmul.f32 %v3219, %v3406
    %v3580 = vmul.f32 %v3219, %v3410
    %v3581 = vmul.f32 %v3223, %v3406
    %v3582 = vmul.f32 %v3223, %v3410
    %v3583 = vmul.f32 %v3227, %v3406
    %v3584 = vmul.f32 %v3227, %v3410
    %v3585 = vmul.f32 %v3231, %v3406
    %v3586 = vmul.f32 %v3231, %v3410
    %v3587 = vmul.f32 %v3235, %v3406
    %v3588 = vmul.f32 %v3235, %v3410
    %v3589 = vmul.f32 %v3239, %v3406
    %v3590 = vmul.f32 %v3239, %v3410
    %v3591 = vmul.f32 %v3243, %v3406
    %v3592 = vmul.f32 %v3243, %v3410
    %v3593 = vmul.f32 %v3247, %v3406
    %v3594 = vmul.f32 %v3247, %v3410
    %v3595 = vmul.f32 %v3251, %v3406
    %v3596 = vmul.f32 %v3251, %v3410
    %v3597 = vmul.f32 %v3255, %v3406
    %v3598 = vmul.f32 %v3255, %v3410
    %v3599 = vmul.f32 %v3259, %v3406
    %v3600 = vmul.f32 %v3259, %v3410
    %v3601 = vmul.f32 %v3263, %v3406
    %v3602 = vmul.f32 %v3263, %v3410
    %v3603 = vmul.f32 %v3267, %v3406
    %v3604 = vmul.f32 %v3267, %v3410
    %v3605 = vmul.f32 %v3271, %v3406
    %v3606 = vmul.f32 %v3271, %v3410
    %v3607 = vmul.f32 %v3275, %v3406
    %v3608 = vmul.f32 %v3275, %v3410
    %v3609 = vmul.f32 %v3279, %v3406
    %v3610 = vmul.f32 %v3279, %v3410
    %v3611 = vmul.f32 %v3283, %v3406
    %v3612 = vmul.f32 %v3283, %v3410
    %v3613 = vmul.f32 %v3287, %v3406
    %v3614 = vmul.f32 %v3287, %v3410
    %v3615 = vmul.f32 %v3291, %v3406
    %v3616 = vmul.f32 %v3291, %v3410
    %v3617 = vmul.f32 %v3295, %v3406
    %v3618 = vmul.f32 %v3295, %v3410
    %v3619 = vmul.f32 %v3299, %v3406
    %v3620 = vmul.f32 %v3299, %v3410
    %v3621 = vmul.f32 %v3303, %v3406
    %v3622 = vmul.f32 %v3303, %v3410
    %v3623 = vmul.f32 %v3307, %v3406
    %v3624 = vmul.f32 %v3307, %v3410
    %v3625 = vmul.f32 %v3311, %v3406
    %v3626 = vmul.f32 %v3311, %v3410
    %v3627 = vmul.f32 %v3315, %v3406
    %v3628 = vmul.f32 %v3315, %v3410
    %v3629 = vmul.f32 %v3319, %v3406
    %v3630 = vmul.f32 %v3319, %v3410
    %v3631 = vmul.f32 %v3323, %v3406
    %v3632 = vmul.f32 %v3323, %v3410
    %v3633 = vmul.f32 %v3327, %v3406
    %v3634 = vmul.f32 %v3327, %v3410
    %v3635 = vmul.f32 %v3331, %v3406
    %v3636 = vmul.f32 %v3331, %v3410
    %v3637 = vmul.f32 %v3335, %v3406
    %v3638 = vmul.f32 %v3335, %v3410
    %v3639 = vmul.f32 %v3339, %v3406
    %v3640 = vmul.f32 %v3339, %v3410
    %v3641 = vmul.f32 %v3343, %v3406
    %v3642 = vmul.f32 %v3343, %v3410
    %v3643 = vmul.f32 %v3347, %v3406
    %v3644 = vmul.f32 %v3347, %v3410
    %v3645 = vmul.f32 %v3351, %v3406
    %v3646 = vmul.f32 %v3351, %v3410
    %v3647 = vmul.f32 %v3355, %v3406
    %v3648 = vmul.f32 %v3355, %v3410
    %v3649 = vmul.f32 %v3359, %v3406
    %v3650 = vmul.f32 %v3359, %v3410
    %v3651 = vmul.f32 %v3363, %v3406
    %v3652 = vmul.f32 %v3363, %v3410
    %v3653 = vmul.f32 %v3367, %v3406
    %v3654 = vmul.f32 %v3367, %v3410
    %v3655 = vmul.f32 %v3371, %v3406
    %v3656 = vmul.f32 %v3371, %v3410
    %v3657 = vmul.f32 %v3375, %v3406
    %v3658 = vmul.f32 %v3375, %v3410
    %v3659 = vmul.f32 %v3379, %v3406
    %v3660 = vmul.f32 %v3379, %v3410
    %v3661 = vmul.f32 %v3383, %v3406
    %v3662 = vmul.f32 %v3383, %v3410
    %v3663 = vmul.f32 %v3387, %v3406
    %v3664 = vmul.f32 %v3387, %v3410
    %v3665 = vmul.f32 %v3391, %v3406
    %v3666 = vmul.f32 %v3391, %v3410
    %v3667 = vadd.f32 %v2625, %v3411
    %v3668 = vadd.f32 %v2626, %v3412
    %v3669 = vadd.f32 %v2627, %v3413
    %v3670 = vadd.f32 %v2628, %v3414
    %v3671 = vadd.f32 %v2629, %v3415
    %v3672 = vadd.f32 %v2630, %v3416
    %v3673 = vadd.f32 %v2631, %v3417
    %v3674 = vadd.f32 %v2632, %v3418
    %v3675 = vadd.f32 %v2633, %v3419
    %v3676 = vadd.f32 %v2634, %v3420
    %v3677 = vadd.f32 %v2635, %v3421
    %v3678 = vadd.f32 %v2636, %v3422
    %v3679 = vadd.f32 %v2637, %v3423
    %v3680 = vadd.f32 %v2638, %v3424
    %v3681 = vadd.f32 %v2639, %v3425
    %v3682 = vadd.f32 %v2640, %v3426
    %v3683 = vadd.f32 %v2641, %v3427
    %v3684 = vadd.f32 %v2642, %v3428
    %v3685 = vadd.f32 %v2643, %v3429
    %v3686 = vadd.f32 %v2644, %v3430
    %v3687 = vadd.f32 %v2645, %v3431
    %v3688 = vadd.f32 %v2646, %v3432
    %v3689 = vadd.f32 %v2647, %v3433
    %v3690 = vadd.f32 %v2648, %v3434
    %v3691 = vadd.f32 %v2649, %v3435
    %v3692 = vadd.f32 %v2650, %v3436
    %v3693 = vadd.f32 %v2651, %v3437
    %v3694 = vadd.f32 %v2652, %v3438
    %v3695 = vadd.f32 %v2653, %v3439
    %v3696 = vadd.f32 %v2654, %v3440
    %v3697 = vadd.f32 %v2655, %v3441
    %v3698 = vadd.f32 %v2656, %v3442
    %v3699 = vadd.f32 %v2657, %v3443
    %v3700 = vadd.f32 %v2658, %v3444
    %v3701 = vadd.f32 %v2659, %v3445
    %v3702 = vadd.f32 %v2660, %v3446
    %v3703 = vadd.f32 %v2661, %v3447
    %v3704 = vadd.f32 %v2662, %v3448
    %v3705 = vadd.f32 %v2663, %v3449
    %v3706 = vadd.f32 %v2664, %v3450
    %v3707 = vadd.f32 %v2665, %v3451
    %v3708 = vadd.f32 %v2666, %v3452
    %v3709 = vadd.f32 %v2667, %v3453
    %v3710 = vadd.f32 %v2668, %v3454
    %v3711 = vadd.f32 %v2669, %v3455
    %v3712 = vadd.f32 %v2670, %v3456
    %v3713 = vadd.f32 %v2671, %v3457
    %v3714 = vadd.f32 %v2672, %v3458
    %v3715 = vadd.f32 %v2673, %v3459
    %v3716 = vadd.f32 %v2674, %v3460
    %v3717 = vadd.f32 %v2675, %v3461
    %v3718 = vadd.f32 %v2676, %v3462
    %v3719 = vadd.f32 %v2677, %v3463
    %v3720 = vadd.f32 %v2678, %v3464
    %v3721 = vadd.f32 %v2679, %v3465
    %v3722 = vadd.f32 %v2680, %v3466
    %v3723 = vadd.f32 %v2681, %v3467
    %v3724 = vadd.f32 %v2682, %v3468
    %v3725 = vadd.f32 %v2683, %v3469
    %v3726 = vadd.f32 %v2684, %v3470
    %v3727 = vadd.f32 %v2685, %v3471
    %v3728 = vadd.f32 %v2686, %v3472
    %v3729 = vadd.f32 %v2687, %v3473
    %v3730 = vadd.f32 %v2688, %v3474
    %v3731 = vadd.f32 %v2689, %v3475
    %v3732 = vadd.f32 %v2690, %v3476
    %v3733 = vadd.f32 %v2691, %v3477
    %v3734 = vadd.f32 %v2692, %v3478
    %v3735 = vadd.f32 %v2693, %v3479
    %v3736 = vadd.f32 %v2694, %v3480
    %v3737 = vadd.f32 %v2695, %v3481
    %v3738 = vadd.f32 %v2696, %v3482
    %v3739 = vadd.f32 %v2697, %v3483
    %v3740 = vadd.f32 %v2698, %v3484
    %v3741 = vadd.f32 %v2699, %v3485
    %v3742 = vadd.f32 %v2700, %v3486
    %v3743 = vadd.f32 %v2701, %v3487
    %v3744 = vadd.f32 %v2702, %v3488
    %v3745 = vadd.f32 %v2703, %v3489
    %v3746 = vadd.f32 %v2704, %v3490
    %v3747 = vadd.f32 %v2705, %v3491
    %v3748 = vadd.f32 %v2706, %v3492
    %v3749 = vadd.f32 %v2707, %v3493
    %v3750 = vadd.f32 %v2708, %v3494
    %v3751 = vadd.f32 %v2709, %v3495
    %v3752 = vadd.f32 %v2710, %v3496
    %v3753 = vadd.f32 %v2711, %v3497
    %v3754 = vadd.f32 %v2712, %v3498
    %v3755 = vadd.f32 %v2713, %v3499
    %v3756 = vadd.f32 %v2714, %v3500
    %v3757 = vadd.f32 %v2715, %v3501
    %v3758 = vadd.f32 %v2716, %v3502
    %v3759 = vadd.f32 %v2717, %v3503
    %v3760 = vadd.f32 %v2718, %v3504
    %v3761 = vadd.f32 %v2719, %v3505
    %v3762 = vadd.f32 %v2720, %v3506
    %v3763 = vadd.f32 %v2721, %v3507
    %v3764 = vadd.f32 %v2722, %v3508
    %v3765 = vadd.f32 %v2723, %v3509
    %v3766 = vadd.f32 %v2724, %v3510
    %v3767 = vadd.f32 %v2725, %v3511
    %v3768 = vadd.f32 %v2726, %v3512
    %v3769 = vadd.f32 %v2727, %v3513
    %v3770 = vadd.f32 %v2728, %v3514
    %v3771 = vadd.f32 %v2729, %v3515
    %v3772 = vadd.f32 %v2730, %v3516
    %v3773 = vadd.f32 %v2731, %v3517
    %v3774 = vadd.f32 %v2732, %v3518
    %v3775 = vadd.f32 %v2733, %v3519
    %v3776 = vadd.f32 %v2734, %v3520
    %v3777 = vadd.f32 %v2735, %v3521
    %v3778 = vadd.f32 %v2736, %v3522
    %v3779 = vadd.f32 %v2737, %v3523
    %v3780 = vadd.f32 %v2738, %v3524
    %v3781 = vadd.f32 %v2739, %v3525
    %v3782 = vadd.f32 %v2740, %v3526
    %v3783 = vadd.f32 %v2741, %v3527
    %v3784 = vadd.f32 %v2742, %v3528
    %v3785 = vadd.f32 %v2743, %v3529
    %v3786 = vadd.f32 %v2744, %v3530
    %v3787 = vadd.f32 %v2745, %v3531
    %v3788 = vadd.f32 %v2746, %v3532
    %v3789 = vadd.f32 %v2747, %v3533
    %v3790 = vadd.f32 %v2748, %v3534
    %v3791 = vadd.f32 %v2749, %v3535
    %v3792 = vadd.f32 %v2750, %v3536
    %v3793 = vadd.f32 %v2751, %v3537
    %v3794 = vadd.f32 %v2752, %v3538
    %v3795 = vadd.f32 %v2753, %v3539
    %v3796 = vadd.f32 %v2754, %v3540
    %v3797 = vadd.f32 %v2755, %v3541
    %v3798 = vadd.f32 %v2756, %v3542
    %v3799 = vadd.f32 %v2757, %v3543
    %v3800 = vadd.f32 %v2758, %v3544
    %v3801 = vadd.f32 %v2759, %v3545
    %v3802 = vadd.f32 %v2760, %v3546
    %v3803 = vadd.f32 %v2761, %v3547
    %v3804 = vadd.f32 %v2762, %v3548
    %v3805 = vadd.f32 %v2763, %v3549
    %v3806 = vadd.f32 %v2764, %v3550
    %v3807 = vadd.f32 %v2765, %v3551
    %v3808 = vadd.f32 %v2766, %v3552
    %v3809 = vadd.f32 %v2767, %v3553
    %v3810 = vadd.f32 %v2768, %v3554
    %v3811 = vadd.f32 %v2769, %v3555
    %v3812 = vadd.f32 %v2770, %v3556
    %v3813 = vadd.f32 %v2771, %v3557
    %v3814 = vadd.f32 %v2772, %v3558
    %v3815 = vadd.f32 %v2773, %v3559
    %v3816 = vadd.f32 %v2774, %v3560
    %v3817 = vadd.f32 %v2775, %v3561
    %v3818 = vadd.f32 %v2776, %v3562
    %v3819 = vadd.f32 %v2777, %v3563
    %v3820 = vadd.f32 %v2778, %v3564
    %v3821 = vadd.f32 %v2779, %v3565
    %v3822 = vadd.f32 %v2780, %v3566
    %v3823 = vadd.f32 %v2781, %v3567
    %v3824 = vadd.f32 %v2782, %v3568
    %v3825 = vadd.f32 %v2783, %v3569
    %v3826 = vadd.f32 %v2784, %v3570
    %v3827 = vadd.f32 %v2785, %v3571
    %v3828 = vadd.f32 %v2786, %v3572
    %v3829 = vadd.f32 %v2787, %v3573
    %v3830 = vadd.f32 %v2788, %v3574
    %v3831 = vadd.f32 %v2789, %v3575
    %v3832 = vadd.f32 %v2790, %v3576
    %v3833 = vadd.f32 %v2791, %v3577
    %v3834 = vadd.f32 %v2792, %v3578
    %v3835 = vadd.f32 %v2793, %v3579
    %v3836 = vadd.f32 %v2794, %v3580
    %v3837 = vadd.f32 %v2795, %v3581
    %v3838 = vadd.f32 %v2796, %v3582
    %v3839 = vadd.f32 %v2797, %v3583
    %v3840 = vadd.f32 %v2798, %v3584
    %v3841 = vadd.f32 %v2799, %v3585
    %v3842 = vadd.f32 %v2800, %v3586
    %v3843 = vadd.f32 %v2801, %v3587
    %v3844 = vadd.f32 %v2802, %v3588
    %v3845 = vadd.f32 %v2803, %v3589
    %v3846 = vadd.f32 %v2804, %v3590
    %v3847 = vadd.f32 %v2805, %v3591
    %v3848 = vadd.f32 %v2806, %v3592
    %v3849 = vadd.f32 %v2807, %v3593
    %v3850 = vadd.f32 %v2808, %v3594
    %v3851 = vadd.f32 %v2809, %v3595
    %v3852 = vadd.f32 %v2810, %v3596
    %v3853 = vadd.f32 %v2811, %v3597
    %v3854 = vadd.f32 %v2812, %v3598
    %v3855 = vadd.f32 %v2813, %v3599
    %v3856 = vadd.f32 %v2814, %v3600
    %v3857 = vadd.f32 %v2815, %v3601
    %v3858 = vadd.f32 %v2816, %v3602
    %v3859 = vadd.f32 %v2817, %v3603
    %v3860 = vadd.f32 %v2818, %v3604
    %v3861 = vadd.f32 %v2819, %v3605
    %v3862 = vadd.f32 %v2820, %v3606
    %v3863 = vadd.f32 %v2821, %v3607
    %v3864 = vadd.f32 %v2822, %v3608
    %v3865 = vadd.f32 %v2823, %v3609
    %v3866 = vadd.f32 %v2824, %v3610
    %v3867 = vadd.f32 %v2825, %v3611
    %v3868 = vadd.f32 %v2826, %v3612
    %v3869 = vadd.f32 %v2827, %v3613
    %v3870 = vadd.f32 %v2828, %v3614
    %v3871 = vadd.f32 %v2829, %v3615
    %v3872 = vadd.f32 %v2830, %v3616
    %v3873 = vadd.f32 %v2831, %v3617
    %v3874 = vadd.f32 %v2832, %v3618
    %v3875 = vadd.f32 %v2833, %v3619
    %v3876 = vadd.f32 %v2834, %v3620
    %v3877 = vadd.f32 %v2835, %v3621
    %v3878 = vadd.f32 %v2836, %v3622
    %v3879 = vadd.f32 %v2837, %v3623
    %v3880 = vadd.f32 %v2838, %v3624
    %v3881 = vadd.f32 %v2839, %v3625
    %v3882 = vadd.f32 %v2840, %v3626
    %v3883 = vadd.f32 %v2841, %v3627
    %v3884 = vadd.f32 %v2842, %v3628
    %v3885 = vadd.f32 %v2843, %v3629
    %v3886 = vadd.f32 %v2844, %v3630
    %v3887 = vadd.f32 %v2845, %v3631
    %v3888 = vadd.f32 %v2846, %v3632
    %v3889 = vadd.f32 %v2847, %v3633
    %v3890 = vadd.f32 %v2848, %v3634
    %v3891 = vadd.f32 %v2849, %v3635
    %v3892 = vadd.f32 %v2850, %v3636
    %v3893 = vadd.f32 %v2851, %v3637
    %v3894 = vadd.f32 %v2852, %v3638
    %v3895 = vadd.f32 %v2853, %v3639
    %v3896 = vadd.f32 %v2854, %v3640
    %v3897 = vadd.f32 %v2855, %v3641
    %v3898 = vadd.f32 %v2856, %v3642
    %v3899 = vadd.f32 %v2857, %v3643
    %v3900 = vadd.f32 %v2858, %v3644
    %v3901 = vadd.f32 %v2859, %v3645
    %v3902 = vadd.f32 %v2860, %v3646
    %v3903 = vadd.f32 %v2861, %v3647
    %v3904 = vadd.f32 %v2862, %v3648
    %v3905 = vadd.f32 %v2863, %v3649
    %v3906 = vadd.f32 %v2864, %v3650
    %v3907 = vadd.f32 %v2865, %v3651
    %v3908 = vadd.f32 %v2866, %v3652
    %v3909 = vadd.f32 %v2867, %v3653
    %v3910 = vadd.f32 %v2868, %v3654
    %v3911 = vadd.f32 %v2869, %v3655
    %v3912 = vadd.f32 %v2870, %v3656
    %v3913 = vadd.f32 %v2871, %v3657
    %v3914 = vadd.f32 %v2872, %v3658
    %v3915 = vadd.f32 %v2873, %v3659
    %v3916 = vadd.f32 %v2874, %v3660
    %v3917 = vadd.f32 %v2875, %v3661
    %v3918 = vadd.f32 %v2876, %v3662
    %v3919 = vadd.f32 %v2877, %v3663
    %v3920 = vadd.f32 %v2878, %v3664
    %v3921 = vadd.f32 %v2879, %v3665
    %v3922 = vadd.f32 %v2880, %v3666
    %v3923 = vmax.f32 %v3667, 0.0
    %v3924 = vmax.f32 %v3668, 0.0
    %v3925 = vmax.f32 %v3669, 0.0
    %v3926 = vmax.f32 %v3670, 0.0
    %v3927 = vmax.f32 %v3671, 0.0
    %v3928 = vmax.f32 %v3672, 0.0
    %v3929 = vmax.f32 %v3673, 0.0
    %v3930 = vmax.f32 %v3674, 0.0
    %v3931 = vmax.f32 %v3675, 0.0
    %v3932 = vmax.f32 %v3676, 0.0
    %v3933 = vmax.f32 %v3677, 0.0
    %v3934 = vmax.f32 %v3678, 0.0
    %v3935 = vmax.f32 %v3679, 0.0
    %v3936 = vmax.f32 %v3680, 0.0
    %v3937 = vmax.f32 %v3681, 0.0
    %v3938 = vmax.f32 %v3682, 0.0
    %v3939 = vmax.f32 %v3683, 0.0
    %v3940 = vmax.f32 %v3684, 0.0
    %v3941 = vmax.f32 %v3685, 0.0
    %v3942 = vmax.f32 %v3686, 0.0
    %v3943 = vmax.f32 %v3687, 0.0
    %v3944 = vmax.f32 %v3688, 0.0
    %v3945 = vmax.f32 %v3689, 0.0
    %v3946 = vmax.f32 %v3690, 0.0
    %v3947 = vmax.f32 %v3691, 0.0
    %v3948 = vmax.f32 %v3692, 0.0
    %v3949 = vmax.f32 %v3693, 0.0
    %v3950 = vmax.f32 %v3694, 0.0
    %v3951 = vmax.f32 %v3695, 0.0
    %v3952 = vmax.f32 %v3696, 0.0
    %v3953 = vmax.f32 %v3697, 0.0
    %v3954 = vmax.f32 %v3698, 0.0
    %v3955 = vmax.f32 %v3699, 0.0
    %v3956 = vmax.f32 %v3700, 0.0
    %v3957 = vmax.f32 %v3701, 0.0
    %v3958 = vmax.f32 %v3702, 0.0
    %v3959 = vmax.f32 %v3703, 0.0
    %v3960 = vmax.f32 %v3704, 0.0
    %v3961 = vmax.f32 %v3705, 0.0
    %v3962 = vmax.f32 %v3706, 0.0
    %v3963 = vmax.f32 %v3707, 0.0
    %v3964 = vmax.f32 %v3708, 0.0
    %v3965 = vmax.f32 %v3709, 0.0
    %v3966 = vmax.f32 %v3710, 0.0
    %v3967 = vmax.f32 %v3711, 0.0
    %v3968 = vmax.f32 %v3712, 0.0
    %v3969 = vmax.f32 %v3713, 0.0
    %v3970 = vmax.f32 %v3714, 0.0
    %v3971 = vmax.f32 %v3715, 0.0
    %v3972 = vmax.f32 %v3716, 0.0
    %v3973 = vmax.f32 %v3717, 0.0
    %v3974 = vmax.f32 %v3718, 0.0
    %v3975 = vmax.f32 %v3719, 0.0
    %v3976 = vmax.f32 %v3720, 0.0
    %v3977 = vmax.f32 %v3721, 0.0
    %v3978 = vmax.f32 %v3722, 0.0
    %v3979 = vmax.f32 %v3723, 0.0
    %v3980 = vmax.f32 %v3724, 0.0
    %v3981 = vmax.f32 %v3725, 0.0
    %v3982 = vmax.f32 %v3726, 0.0
    %v3983 = vmax.f32 %v3727, 0.0
    %v3984 = vmax.f32 %v3728, 0.0
    %v3985 = vmax.f32 %v3729, 0.0
    %v3986 = vmax.f32 %v3730, 0.0
    %v3987 = vmax.f32 %v3731, 0.0
    %v3988 = vmax.f32 %v3732, 0.0
    %v3989 = vmax.f32 %v3733, 0.0
    %v3990 = vmax.f32 %v3734, 0.0
    %v3991 = vmax.f32 %v3735, 0.0
    %v3992 = vmax.f32 %v3736, 0.0
    %v3993 = vmax.f32 %v3737, 0.0
    %v3994 = vmax.f32 %v3738, 0.0
    %v3995 = vmax.f32 %v3739, 0.0
    %v3996 = vmax.f32 %v3740, 0.0
    %v3997 = vmax.f32 %v3741, 0.0
    %v3998 = vmax.f32 %v3742, 0.0
    %v3999 = vmax.f32 %v3743, 0.0
    %v4000 = vmax.f32 %v3744, 0.0
    %v4001 = vmax.f32 %v3745, 0.0
    %v4002 = vmax.f32 %v3746, 0.0
    %v4003 = vmax.f32 %v3747, 0.0
    %v4004 = vmax.f32 %v3748, 0.0
    %v4005 = vmax.f32 %v3749, 0.0
    %v4006 = vmax.f32 %v3750, 0.0
    %v4007 = vmax.f32 %v3751, 0.0
    %v4008 = vmax.f32 %v3752, 0.0
    %v4009 = vmax.f32 %v3753, 0.0
    %v4010 = vmax.f32 %v3754, 0.0
    %v4011 = vmax.f32 %v3755, 0.0
    %v4012 = vmax.f32 %v3756, 0.0
    %v4013 = vmax.f32 %v3757, 0.0
    %v4014 = vmax.f32 %v3758, 0.0
    %v4015 = vmax.f32 %v3759, 0.0
    %v4016 = vmax.f32 %v3760, 0.0
    %v4017 = vmax.f32 %v3761, 0.0
    %v4018 = vmax.f32 %v3762, 0.0
    %v4019 = vmax.f32 %v3763, 0.0
    %v4020 = vmax.f32 %v3764, 0.0
    %v4021 = vmax.f32 %v3765, 0.0
    %v4022 = vmax.f32 %v3766, 0.0
    %v4023 = vmax.f32 %v3767, 0.0
    %v4024 = vmax.f32 %v3768, 0.0
    %v4025 = vmax.f32 %v3769, 0.0
    %v4026 = vmax.f32 %v3770, 0.0
    %v4027 = vmax.f32 %v3771, 0.0
    %v4028 = vmax.f32 %v3772, 0.0
    %v4029 = vmax.f32 %v3773, 0.0
    %v4030 = vmax.f32 %v3774, 0.0
    %v4031 = vmax.f32 %v3775, 0.0
    %v4032 = vmax.f32 %v3776, 0.0
    %v4033 = vmax.f32 %v3777, 0.0
    %v4034 = vmax.f32 %v3778, 0.0
    %v4035 = vmax.f32 %v3779, 0.0
    %v4036 = vmax.f32 %v3780, 0.0
    %v4037 = vmax.f32 %v3781, 0.0
    %v4038 = vmax.f32 %v3782, 0.0
    %v4039 = vmax.f32 %v3783, 0.0
    %v4040 = vmax.f32 %v3784, 0.0
    %v4041 = vmax.f32 %v3785, 0.0
    %v4042 = vmax.f32 %v3786, 0.0
    %v4043 = vmax.f32 %v3787, 0.0
    %v4044 = vmax.f32 %v3788, 0.0
    %v4045 = vmax.f32 %v3789, 0.0
    %v4046 = vmax.f32 %v3790, 0.0
    %v4047 = vmax.f32 %v3791, 0.0
    %v4048 = vmax.f32 %v3792, 0.0
    %v4049 = vmax.f32 %v3793, 0.0
    %v4050 = vmax.f32 %v3794, 0.0
    %v4051 = vmax.f32 %v3795, 0.0
    %v4052 = vmax.f32 %v3796, 0.0
    %v4053 = vmax.f32 %v3797, 0.0
    %v4054 = vmax.f32 %v3798, 0.0
    %v4055 = vmax.f32 %v3799, 0.0
    %v4056 = vmax.f32 %v3800, 0.0
    %v4057 = vmax.f32 %v3801, 0.0
    %v4058 = vmax.f32 %v3802, 0.0
    %v4059 = vmax.f32 %v3803, 0.0
    %v4060 = vmax.f32 %v3804, 0.0
    %v4061 = vmax.f32 %v3805, 0.0
    %v4062 = vmax.f32 %v3806, 0.0
    %v4063 = vmax.f32 %v3807, 0.0
    %v4064 = vmax.f32 %v3808, 0.0
    %v4065 = vmax.f32 %v3809, 0.0
    %v4066 = vmax.f32 %v3810, 0.0
    %v4067 = vmax.f32 %v3811, 0.0
    %v4068 = vmax.f32 %v3812, 0.0
    %v4069 = vmax.f32 %v3813, 0.0
    %v4070 = vmax.f32 %v3814, 0.0
    %v4071 = vmax.f32 %v3815, 0.0
    %v4072 = vmax.f32 %v3816, 0.0
    %v4073 = vmax.f32 %v3817, 0.0
    %v4074 = vmax.f32 %v3818, 0.0
    %v4075 = vmax.f32 %v3819, 0.0
    %v4076 = vmax.f32 %v3820, 0.0
    %v4077 = vmax.f32 %v3821, 0.0
    %v4078 = vmax.f32 %v3822, 0.0
    %v4079 = vmax.f32 %v3823, 0.0
    %v4080 = vmax.f32 %v3824, 0.0
    %v4081 = vmax.f32 %v3825, 0.0
    %v4082 = vmax.f32 %v3826, 0.0
    %v4083 = vmax.f32 %v3827, 0.0
    %v4084 = vmax.f32 %v3828, 0.0
    %v4085 = vmax.f32 %v3829, 0.0
    %v4086 = vmax.f32 %v3830, 0.0
    %v4087 = vmax.f32 %v3831, 0.0
    %v4088 = vmax.f32 %v3832, 0.0
    %v4089 = vmax.f32 %v3833, 0.0
    %v4090 = vmax.f32 %v3834, 0.0
    %v4091 = vmax.f32 %v3835, 0.0
    %v4092 = vmax.f32 %v3836, 0.0
    %v4093 = vmax.f32 %v3837, 0.0
    %v4094 = vmax.f32 %v3838, 0.0
    %v4095 = vmax.f32 %v3839, 0.0
    %v4096 = vmax.f32 %v3840, 0.0
    %v4097 = vmax.f32 %v3841, 0.0
    %v4098 = vmax.f32 %v3842, 0.0
    %v4099 = vmax.f32 %v3843, 0.0
    %v4100 = vmax.f32 %v3844, 0.0
    %v4101 = vmax.f32 %v3845, 0.0
    %v4102 = vmax.f32 %v3846, 0.0
    %v4103 = vmax.f32 %v3847, 0.0
    %v4104 = vmax.f32 %v3848, 0.0
    %v4105 = vmax.f32 %v3849, 0.0
    %v4106 = vmax.f32 %v3850, 0.0
    %v4107 = vmax.f32 %v3851, 0.0
    %v4108 = vmax.f32 %v3852, 0.0
    %v4109 = vmax.f32 %v3853, 0.0
    %v4110 = vmax.f32 %v3854, 0.0
    %v4111 = vmax.f32 %v3855, 0.0
    %v4112 = vmax.f32 %v3856, 0.0
    %v4113 = vmax.f32 %v3857, 0.0
    %v4114 = vmax.f32 %v3858, 0.0
    %v4115 = vmax.f32 %v3859, 0.0
    %v4116 = vmax.f32 %v3860, 0.0
    %v4117 = vmax.f32 %v3861, 0.0
    %v4118 = vmax.f32 %v3862, 0.0
    %v4119 = vmax.f32 %v3863, 0.0
    %v4120 = vmax.f32 %v3864, 0.0
    %v4121 = vmax.f32 %v3865, 0.0
    %v4122 = vmax.f32 %v3866, 0.0
    %v4123 = vmax.f32 %v3867, 0.0
    %v4124 = vmax.f32 %v3868, 0.0
    %v4125 = vmax.f32 %v3869, 0.0
    %v4126 = vmax.f32 %v3870, 0.0
    %v4127 = vmax.f32 %v3871, 0.0
    %v4128 = vmax.f32 %v3872, 0.0
    %v4129 = vmax.f32 %v3873, 0.0
    %v4130 = vmax.f32 %v3874, 0.0
    %v4131 = vmax.f32 %v3875, 0.0
    %v4132 = vmax.f32 %v3876, 0.0
    %v4133 = vmax.f32 %v3877, 0.0
    %v4134 = vmax.f32 %v3878, 0.0
    %v4135 = vmax.f32 %v3879, 0.0
    %v4136 = vmax.f32 %v3880, 0.0
    %v4137 = vmax.f32 %v3881, 0.0
    %v4138 = vmax.f32 %v3882, 0.0
    %v4139 = vmax.f32 %v3883, 0.0
    %v4140 = vmax.f32 %v3884, 0.0
    %v4141 = vmax.f32 %v3885, 0.0
    %v4142 = vmax.f32 %v3886, 0.0
    %v4143 = vmax.f32 %v3887, 0.0
    %v4144 = vmax.f32 %v3888, 0.0
    %v4145 = vmax.f32 %v3889, 0.0
    %v4146 = vmax.f32 %v3890, 0.0
    %v4147 = vmax.f32 %v3891, 0.0
    %v4148 = vmax.f32 %v3892, 0.0
    %v4149 = vmax.f32 %v3893, 0.0
    %v4150 = vmax.f32 %v3894, 0.0
    %v4151 = vmax.f32 %v3895, 0.0
    %v4152 = vmax.f32 %v3896, 0.0
    %v4153 = vmax.f32 %v3897, 0.0
    %v4154 = vmax.f32 %v3898, 0.0
    %v4155 = vmax.f32 %v3899, 0.0
    %v4156 = vmax.f32 %v3900, 0.0
    %v4157 = vmax.f32 %v3901, 0.0
    %v4158 = vmax.f32 %v3902, 0.0
    %v4159 = vmax.f32 %v3903, 0.0
    %v4160 = vmax.f32 %v3904, 0.0
    %v4161 = vmax.f32 %v3905, 0.0
    %v4162 = vmax.f32 %v3906, 0.0
    %v4163 = vmax.f32 %v3907, 0.0
    %v4164 = vmax.f32 %v3908, 0.0
    %v4165 = vmax.f32 %v3909, 0.0
    %v4166 = vmax.f32 %v3910, 0.0
    %v4167 = vmax.f32 %v3911, 0.0
    %v4168 = vmax.f32 %v3912, 0.0
    %v4169 = vmax.f32 %v3913, 0.0
    %v4170 = vmax.f32 %v3914, 0.0
    %v4171 = vmax.f32 %v3915, 0.0
    %v4172 = vmax.f32 %v3916, 0.0
    %v4173 = vmax.f32 %v3917, 0.0
    %v4174 = vmax.f32 %v3918, 0.0
    %v4175 = vmax.f32 %v3919, 0.0
    %v4176 = vmax.f32 %v3920, 0.0
    %v4177 = vmax.f32 %v3921, 0.0
    %v4178 = vmax.f32 %v3922, 0.0
    %v4179 = vpack.c.bf16 %v3925, %v3923
    %v4180 = vpack.c.bf16 %v3926, %v3924
    %v4181 = vpack.c.bf16 %v3929, %v3927
    %v4182 = vpack.c.bf16 %v3930, %v3928
    %v4183 = vpack.c.bf16 %v3933, %v3931
    %v4184 = vpack.c.bf16 %v3934, %v3932
    %v4185 = vpack.c.bf16 %v3937, %v3935
    %v4186 = vpack.c.bf16 %v3938, %v3936
    %v4187 = vpack.c.bf16 %v3941, %v3939
    %v4188 = vpack.c.bf16 %v3942, %v3940
    %v4189 = vpack.c.bf16 %v3945, %v3943
    %v4190 = vpack.c.bf16 %v3946, %v3944
    %v4191 = vpack.c.bf16 %v3949, %v3947
    %v4192 = vpack.c.bf16 %v3950, %v3948
    %v4193 = vpack.c.bf16 %v3953, %v3951
    %v4194 = vpack.c.bf16 %v3954, %v3952
    %v4195 = vpack.c.bf16 %v3957, %v3955
    %v4196 = vpack.c.bf16 %v3958, %v3956
    %v4197 = vpack.c.bf16 %v3961, %v3959
    %v4198 = vpack.c.bf16 %v3962, %v3960
    %v4199 = vpack.c.bf16 %v3965, %v3963
    %v4200 = vpack.c.bf16 %v3966, %v3964
    %v4201 = vpack.c.bf16 %v3969, %v3967
    %v4202 = vpack.c.bf16 %v3970, %v3968
    %v4203 = vpack.c.bf16 %v3973, %v3971
    %v4204 = vpack.c.bf16 %v3974, %v3972
    %v4205 = vpack.c.bf16 %v3977, %v3975
    %v4206 = vpack.c.bf16 %v3978, %v3976
    %v4207 = vpack.c.bf16 %v3981, %v3979
    %v4208 = vpack.c.bf16 %v3982, %v3980
    %v4209 = vpack.c.bf16 %v3985, %v3983
    %v4210 = vpack.c.bf16 %v3986, %v3984
    %v4211 = vpack.c.bf16 %v3989, %v3987
    %v4212 = vpack.c.bf16 %v3990, %v3988
    %v4213 = vpack.c.bf16 %v3993, %v3991
    %v4214 = vpack.c.bf16 %v3994, %v3992
    %v4215 = vpack.c.bf16 %v3997, %v3995
    %v4216 = vpack.c.bf16 %v3998, %v3996
    %v4217 = vpack.c.bf16 %v4001, %v3999
    %v4218 = vpack.c.bf16 %v4002, %v4000
    %v4219 = vpack.c.bf16 %v4005, %v4003
    %v4220 = vpack.c.bf16 %v4006, %v4004
    %v4221 = vpack.c.bf16 %v4009, %v4007
    %v4222 = vpack.c.bf16 %v4010, %v4008
    %v4223 = vpack.c.bf16 %v4013, %v4011
    %v4224 = vpack.c.bf16 %v4014, %v4012
    %v4225 = vpack.c.bf16 %v4017, %v4015
    %v4226 = vpack.c.bf16 %v4018, %v4016
    %v4227 = vpack.c.bf16 %v4021, %v4019
    %v4228 = vpack.c.bf16 %v4022, %v4020
    %v4229 = vpack.c.bf16 %v4025, %v4023
    %v4230 = vpack.c.bf16 %v4026, %v4024
    %v4231 = vpack.c.bf16 %v4029, %v4027
    %v4232 = vpack.c.bf16 %v4030, %v4028
    %v4233 = vpack.c.bf16 %v4033, %v4031
    %v4234 = vpack.c.bf16 %v4034, %v4032
    %v4235 = vpack.c.bf16 %v4037, %v4035
    %v4236 = vpack.c.bf16 %v4038, %v4036
    %v4237 = vpack.c.bf16 %v4041, %v4039
    %v4238 = vpack.c.bf16 %v4042, %v4040
    %v4239 = vpack.c.bf16 %v4045, %v4043
    %v4240 = vpack.c.bf16 %v4046, %v4044
    %v4241 = vpack.c.bf16 %v4049, %v4047
    %v4242 = vpack.c.bf16 %v4050, %v4048
    %v4243 = vpack.c.bf16 %v4053, %v4051
    %v4244 = vpack.c.bf16 %v4054, %v4052
    %v4245 = vpack.c.bf16 %v4057, %v4055
    %v4246 = vpack.c.bf16 %v4058, %v4056
    %v4247 = vpack.c.bf16 %v4061, %v4059
    %v4248 = vpack.c.bf16 %v4062, %v4060
    %v4249 = vpack.c.bf16 %v4065, %v4063
    %v4250 = vpack.c.bf16 %v4066, %v4064
    %v4251 = vpack.c.bf16 %v4069, %v4067
    %v4252 = vpack.c.bf16 %v4070, %v4068
    %v4253 = vpack.c.bf16 %v4073, %v4071
    %v4254 = vpack.c.bf16 %v4074, %v4072
    %v4255 = vpack.c.bf16 %v4077, %v4075
    %v4256 = vpack.c.bf16 %v4078, %v4076
    %v4257 = vpack.c.bf16 %v4081, %v4079
    %v4258 = vpack.c.bf16 %v4082, %v4080
    %v4259 = vpack.c.bf16 %v4085, %v4083
    %v4260 = vpack.c.bf16 %v4086, %v4084
    %v4261 = vpack.c.bf16 %v4089, %v4087
    %v4262 = vpack.c.bf16 %v4090, %v4088
    %v4263 = vpack.c.bf16 %v4093, %v4091
    %v4264 = vpack.c.bf16 %v4094, %v4092
    %v4265 = vpack.c.bf16 %v4097, %v4095
    %v4266 = vpack.c.bf16 %v4098, %v4096
    %v4267 = vpack.c.bf16 %v4101, %v4099
    %v4268 = vpack.c.bf16 %v4102, %v4100
    %v4269 = vpack.c.bf16 %v4105, %v4103
    %v4270 = vpack.c.bf16 %v4106, %v4104
    %v4271 = vpack.c.bf16 %v4109, %v4107
    %v4272 = vpack.c.bf16 %v4110, %v4108
    %v4273 = vpack.c.bf16 %v4113, %v4111
    %v4274 = vpack.c.bf16 %v4114, %v4112
    %v4275 = vpack.c.bf16 %v4117, %v4115
    %v4276 = vpack.c.bf16 %v4118, %v4116
    %v4277 = vpack.c.bf16 %v4121, %v4119
    %v4278 = vpack.c.bf16 %v4122, %v4120
    %v4279 = vpack.c.bf16 %v4125, %v4123
    %v4280 = vpack.c.bf16 %v4126, %v4124
    %v4281 = vpack.c.bf16 %v4129, %v4127
    %v4282 = vpack.c.bf16 %v4130, %v4128
    %v4283 = vpack.c.bf16 %v4133, %v4131
    %v4284 = vpack.c.bf16 %v4134, %v4132
    %v4285 = vpack.c.bf16 %v4137, %v4135
    %v4286 = vpack.c.bf16 %v4138, %v4136
    %v4287 = vpack.c.bf16 %v4141, %v4139
    %v4288 = vpack.c.bf16 %v4142, %v4140
    %v4289 = vpack.c.bf16 %v4145, %v4143
    %v4290 = vpack.c.bf16 %v4146, %v4144
    %v4291 = vpack.c.bf16 %v4149, %v4147
    %v4292 = vpack.c.bf16 %v4150, %v4148
    %v4293 = vpack.c.bf16 %v4153, %v4151
    %v4294 = vpack.c.bf16 %v4154, %v4152
    %v4295 = vpack.c.bf16 %v4157, %v4155
    %v4296 = vpack.c.bf16 %v4158, %v4156
    %v4297 = vpack.c.bf16 %v4161, %v4159
    %v4298 = vpack.c.bf16 %v4162, %v4160
    %v4299 = vpack.c.bf16 %v4165, %v4163
    %v4300 = vpack.c.bf16 %v4166, %v4164
    %v4301 = vpack.c.bf16 %v4169, %v4167
    %v4302 = vpack.c.bf16 %v4170, %v4168
    %v4303 = vpack.c.bf16 %v4173, %v4171
    %v4304 = vpack.c.bf16 %v4174, %v4172
    %v4305 = vpack.c.bf16 %v4177, %v4175
    %v4306 = vpack.c.bf16 %v4178, %v4176
    %v4307 = vld [vmem:[%s2] sm:$0xff]
    %v4308 = vld [vmem:[%s2 + $0x8] sm:$0xff]
    %v4309 = vld [vmem:[%s2 + $0x10] sm:$0xff]
    %v4310 = vld [vmem:[%s2 + $0x18] sm:$0xff]
    %v4311 = vld [vmem:[%s2 + $0x20] sm:$0xff]
    %v4312 = vld [vmem:[%s2 + $0x28] sm:$0xff]
    %v4313 = vld [vmem:[%s2 + $0x30] sm:$0xff]
    %v4314 = vld [vmem:[%s2 + $0x38] sm:$0xff]
    %v4315 = vld [vmem:[%s2 + $0x40] sm:$0xff]
    %v4316 = vld [vmem:[%s2 + $0x48] sm:$0xff]
    %v4317 = vld [vmem:[%s2 + $0x50] sm:$0xff]
    %v4318 = vld [vmem:[%s2 + $0x58] sm:$0xff]
    %v4319 = vld [vmem:[%s2 + $0x60] sm:$0xff]
    %v4320 = vld [vmem:[%s2 + $0x68] sm:$0xff]
    %v4321 = vld [vmem:[%s2 + $0x70] sm:$0xff]
    %v4322 = vld [vmem:[%s2 + $0x78] sm:$0xff]
    %4324 = vset.pattern.permute.xlu0 0
    %4325 = vperm.xlu0 %4324, %v22
    %v4326 = vpop.permute.xlu0 %4325
    %4329 = vset.pattern.permute.xlu0 0
    %4330 = vperm.xlu0 %4329, %v23
    %v4331 = vpop.permute.xlu0 %4330
    %4334 = vset.pattern.permute.xlu0 0
    %4335 = vperm.xlu0 %4334, %v24
    %v4336 = vpop.permute.xlu0 %4335
    %4339 = vset.pattern.permute.xlu0 0
    %4340 = vperm.xlu0 %4339, %v25
    %v4341 = vpop.permute.xlu0 %4340
    %v4359 = vunpack.c.l.b16 %v4307
    %v4360 = vunpack.c.h.b16 %v4307
    %v4361 = vunpack.c.l.b16 %v4308
    %v4362 = vunpack.c.h.b16 %v4308
    %v4363 = vunpack.c.l.b16 %v4309
    %v4364 = vunpack.c.h.b16 %v4309
    %v4365 = vunpack.c.l.b16 %v4310
    %v4366 = vunpack.c.h.b16 %v4310
    %v4367 = vunpack.c.l.b16 %v4311
    %v4368 = vunpack.c.h.b16 %v4311
    %v4369 = vunpack.c.l.b16 %v4312
    %v4370 = vunpack.c.h.b16 %v4312
    %v4371 = vunpack.c.l.b16 %v4313
    %v4372 = vunpack.c.h.b16 %v4313
    %v4373 = vunpack.c.l.b16 %v4314
    %v4374 = vunpack.c.h.b16 %v4314
    %v4375 = vunpack.c.l.b16 %v4315
    %v4376 = vunpack.c.h.b16 %v4315
    %v4377 = vunpack.c.l.b16 %v4316
    %v4378 = vunpack.c.h.b16 %v4316
    %v4379 = vunpack.c.l.b16 %v4317
    %v4380 = vunpack.c.h.b16 %v4317
    %v4381 = vunpack.c.l.b16 %v4318
    %v4382 = vunpack.c.h.b16 %v4318
    %v4383 = vunpack.c.l.b16 %v4319
    %v4384 = vunpack.c.h.b16 %v4319
    %v4385 = vunpack.c.l.b16 %v4320
    %v4386 = vunpack.c.h.b16 %v4320
    %v4387 = vunpack.c.l.b16 %v4321
    %v4388 = vunpack.c.h.b16 %v4321
    %v4389 = vunpack.c.l.b16 %v4322
    %v4390 = vunpack.c.h.b16 %v4322
    %v4391 = vpack.c.b16 %v4367, %v4359
    %v4392 = vpack.c.b16 %v4368, %v4360
    %v4393 = vpack.c.b16 %v4369, %v4361
    %v4394 = vpack.c.b16 %v4370, %v4362
    %v4395 = vpack.c.b16 %v4371, %v4363
    %v4396 = vpack.c.b16 %v4372, %v4364
    %v4397 = vpack.c.b16 %v4373, %v4365
    %v4398 = vpack.c.b16 %v4374, %v4366
    %v4399 = vpack.c.b16 %v4383, %v4375
    %v4400 = vpack.c.b16 %v4384, %v4376
    %v4401 = vpack.c.b16 %v4385, %v4377
    %v4402 = vpack.c.b16 %v4386, %v4378
    %v4403 = vpack.c.b16 %v4387, %v4379
    %v4404 = vpack.c.b16 %v4388, %v4380
    %v4405 = vpack.c.b16 %v4389, %v4381
    %v4406 = vpack.c.b16 %v4390, %v4382
    %4423 = vmatprep.subr.bf16.mxu0 %v4194
    %4424 = vmatpush1.bf16.msra.mxu0 %v4193
    %4425 = vmatprep.subr.bf16.mxu0 %v4192
    %4426 = vmatpush1.bf16.msra.mxu0 %v4191
    %4427 = vmatprep.subr.bf16.mxu0 %v4190
    %4428 = vmatpush1.bf16.msra.mxu0 %v4189
    %4429 = vmatprep.subr.bf16.mxu0 %v4188
    %4430 = vmatpush1.bf16.msra.mxu0 %v4187
    %4431 = vmatprep.subr.bf16.mxu0 %v4186
    %4432 = vmatpush1.bf16.msra.mxu0 %v4185
    %4433 = vmatprep.subr.bf16.mxu0 %v4184
    %4434 = vmatpush1.bf16.msra.mxu0 %v4183
    %4435 = vmatprep.subr.bf16.mxu0 %v4182
    %4436 = vmatpush1.bf16.msra.mxu0 %v4181
    %4437 = vmatprep.subr.bf16.mxu0 %v4180
    %4438 = vmatpush1.bf16.msra.mxu0 %v4179
    %4439 = vmatprep.subr.bf16.mxu0 %v4210
    %4440 = vmatpush2.bf16.msra.mxu0 %v4209
    %4441 = vmatprep.subr.bf16.mxu0 %v4208
    %4442 = vmatpush2.bf16.msra.mxu0 %v4207
    %4443 = vmatprep.subr.bf16.mxu0 %v4206
    %4444 = vmatpush2.bf16.msra.mxu0 %v4205
    %4445 = vmatprep.subr.bf16.mxu0 %v4204
    %4446 = vmatpush2.bf16.msra.mxu0 %v4203
    %4447 = vmatprep.subr.bf16.mxu0 %v4202
    %4448 = vmatpush2.bf16.msra.mxu0 %v4201
    %4449 = vmatprep.subr.bf16.mxu0 %v4200
    %4450 = vmatpush2.bf16.msra.mxu0 %v4199
    %4451 = vmatprep.subr.bf16.mxu0 %v4198
    %4452 = vmatpush2.bf16.msra.mxu0 %v4197
    %4453 = vmatprep.subr.bf16.mxu0 %v4196
    %4454 = vmatpush2.bf16.msra.mxu0 %v4195
    %4455 = vmatprep.mubr.bf16.mxu0 %v4392
    %4456 = vmatmul.mubr.bf16.gmra.mxu0 %v4391
    %v4457 = vpop.f32.mrf.mxu0
    %v4458 = vadd.f32 %v4326, %v4457
    %v4459 = vpop.f32.mrf.mxu0
    %v4460 = vadd.f32 %v4326, %v4459
    %v4461 = vpop.f32.mrf.mxu0
    %v4462 = vadd.f32 %v4331, %v4461
    %v4463 = vpop.f32.mrf.mxu0
    %v4464 = vadd.f32 %v4331, %v4463
    %4465 = vmatprep.mubr.bf16.mxu0 %v4400
    %4466 = vmatmul.mubr.bf16.gmra.mxu0 %v4399
    %v4467 = vpop.f32.mrf.mxu0
    %v4468 = vadd.f32 %v4336, %v4467
    %v4469 = vpop.f32.mrf.mxu0
    %v4470 = vadd.f32 %v4336, %v4469
    %v4471 = vpop.f32.mrf.mxu0
    %v4472 = vadd.f32 %v4341, %v4471
    %v4473 = vpop.f32.mrf.mxu0
    %v4474 = vadd.f32 %v4341, %v4473
    %4475 = vdwg.mxu0
    %4476 = vmatprep.subr.bf16.mxu0 %v4226
    %4477 = vmatpush1.bf16.msra.mxu0 %v4225
    %4478 = vmatprep.subr.bf16.mxu0 %v4224
    %4479 = vmatpush1.bf16.msra.mxu0 %v4223
    %4480 = vmatprep.subr.bf16.mxu0 %v4222
    %4481 = vmatpush1.bf16.msra.mxu0 %v4221
    %4482 = vmatprep.subr.bf16.mxu0 %v4220
    %4483 = vmatpush1.bf16.msra.mxu0 %v4219
    %4484 = vmatprep.subr.bf16.mxu0 %v4218
    %4485 = vmatpush1.bf16.msra.mxu0 %v4217
    %4486 = vmatprep.subr.bf16.mxu0 %v4216
    %4487 = vmatpush1.bf16.msra.mxu0 %v4215
    %4488 = vmatprep.subr.bf16.mxu0 %v4214
    %4489 = vmatpush1.bf16.msra.mxu0 %v4213
    %4490 = vmatprep.subr.bf16.mxu0 %v4212
    %4491 = vmatpush1.bf16.msra.mxu0 %v4211
    %4492 = vmatprep.subr.bf16.mxu0 %v4242
    %4493 = vmatpush2.bf16.msra.mxu0 %v4241
    %4494 = vmatprep.subr.bf16.mxu0 %v4240
    %4495 = vmatpush2.bf16.msra.mxu0 %v4239
    %4496 = vmatprep.subr.bf16.mxu0 %v4238
    %4497 = vmatpush2.bf16.msra.mxu0 %v4237
    %4498 = vmatprep.subr.bf16.mxu0 %v4236
    %4499 = vmatpush2.bf16.msra.mxu0 %v4235
    %4500 = vmatprep.subr.bf16.mxu0 %v4234
    %4501 = vmatpush2.bf16.msra.mxu0 %v4233
    %4502 = vmatprep.subr.bf16.mxu0 %v4232
    %4503 = vmatpush2.bf16.msra.mxu0 %v4231
    %4504 = vmatprep.subr.bf16.mxu0 %v4230
    %4505 = vmatpush2.bf16.msra.mxu0 %v4229
    %4506 = vmatprep.subr.bf16.mxu0 %v4228
    %4507 = vmatpush2.bf16.msra.mxu0 %v4227
    %4508 = vmatprep.mubr.bf16.mxu0 %v4394
    %4509 = vmatmul.mubr.bf16.gmra.mxu0 %v4393
    %v4510 = vpop.f32.mrf.mxu0
    %v4511 = vadd.f32 %v4458, %v4510
    %v4512 = vpop.f32.mrf.mxu0
    %v4513 = vadd.f32 %v4460, %v4512
    %v4514 = vpop.f32.mrf.mxu0
    %v4515 = vadd.f32 %v4462, %v4514
    %v4516 = vpop.f32.mrf.mxu0
    %v4517 = vadd.f32 %v4464, %v4516
    %4518 = vmatprep.mubr.bf16.mxu0 %v4402
    %4519 = vmatmul.mubr.bf16.gmra.mxu0 %v4401
    %v4520 = vpop.f32.mrf.mxu0
    %v4521 = vadd.f32 %v4468, %v4520
    %v4522 = vpop.f32.mrf.mxu0
    %v4523 = vadd.f32 %v4470, %v4522
    %v4524 = vpop.f32.mrf.mxu0
    %v4525 = vadd.f32 %v4472, %v4524
    %v4526 = vpop.f32.mrf.mxu0
    %v4527 = vadd.f32 %v4474, %v4526
    %4528 = vdwg.mxu0
    %4529 = vmatprep.subr.bf16.mxu0 %v4258
    %4530 = vmatpush1.bf16.msra.mxu0 %v4257
    %4531 = vmatprep.subr.bf16.mxu0 %v4256
    %4532 = vmatpush1.bf16.msra.mxu0 %v4255
    %4533 = vmatprep.subr.bf16.mxu0 %v4254
    %4534 = vmatpush1.bf16.msra.mxu0 %v4253
    %4535 = vmatprep.subr.bf16.mxu0 %v4252
    %4536 = vmatpush1.bf16.msra.mxu0 %v4251
    %4537 = vmatprep.subr.bf16.mxu0 %v4250
    %4538 = vmatpush1.bf16.msra.mxu0 %v4249
    %4539 = vmatprep.subr.bf16.mxu0 %v4248
    %4540 = vmatpush1.bf16.msra.mxu0 %v4247
    %4541 = vmatprep.subr.bf16.mxu0 %v4246
    %4542 = vmatpush1.bf16.msra.mxu0 %v4245
    %4543 = vmatprep.subr.bf16.mxu0 %v4244
    %4544 = vmatpush1.bf16.msra.mxu0 %v4243
    %4545 = vmatprep.subr.bf16.mxu0 %v4274
    %4546 = vmatpush2.bf16.msra.mxu0 %v4273
    %4547 = vmatprep.subr.bf16.mxu0 %v4272
    %4548 = vmatpush2.bf16.msra.mxu0 %v4271
    %4549 = vmatprep.subr.bf16.mxu0 %v4270
    %4550 = vmatpush2.bf16.msra.mxu0 %v4269
    %4551 = vmatprep.subr.bf16.mxu0 %v4268
    %4552 = vmatpush2.bf16.msra.mxu0 %v4267
    %4553 = vmatprep.subr.bf16.mxu0 %v4266
    %4554 = vmatpush2.bf16.msra.mxu0 %v4265
    %4555 = vmatprep.subr.bf16.mxu0 %v4264
    %4556 = vmatpush2.bf16.msra.mxu0 %v4263
    %4557 = vmatprep.subr.bf16.mxu0 %v4262
    %4558 = vmatpush2.bf16.msra.mxu0 %v4261
    %4559 = vmatprep.subr.bf16.mxu0 %v4260
    %4560 = vmatpush2.bf16.msra.mxu0 %v4259
    %4561 = vmatprep.mubr.bf16.mxu0 %v4396
    %4562 = vmatmul.mubr.bf16.gmra.mxu0 %v4395
    %v4563 = vpop.f32.mrf.mxu0
    %v4564 = vadd.f32 %v4511, %v4563
    %v4565 = vpop.f32.mrf.mxu0
    %v4566 = vadd.f32 %v4513, %v4565
    %v4567 = vpop.f32.mrf.mxu0
    %v4568 = vadd.f32 %v4515, %v4567
    %v4569 = vpop.f32.mrf.mxu0
    %v4570 = vadd.f32 %v4517, %v4569
    %4571 = vmatprep.mubr.bf16.mxu0 %v4404
    %4572 = vmatmul.mubr.bf16.gmra.mxu0 %v4403
    %v4573 = vpop.f32.mrf.mxu0
    %v4574 = vadd.f32 %v4521, %v4573
    %v4575 = vpop.f32.mrf.mxu0
    %v4576 = vadd.f32 %v4523, %v4575
    %v4577 = vpop.f32.mrf.mxu0
    %v4578 = vadd.f32 %v4525, %v4577
    %v4579 = vpop.f32.mrf.mxu0
    %v4580 = vadd.f32 %v4527, %v4579
    %4581 = vdwg.mxu0
    %4582 = vmatprep.subr.bf16.mxu0 %v4290
    %4583 = vmatpush1.bf16.msra.mxu0 %v4289
    %4584 = vmatprep.subr.bf16.mxu0 %v4288
    %4585 = vmatpush1.bf16.msra.mxu0 %v4287
    %4586 = vmatprep.subr.bf16.mxu0 %v4286
    %4587 = vmatpush1.bf16.msra.mxu0 %v4285
    %4588 = vmatprep.subr.bf16.mxu0 %v4284
    %4589 = vmatpush1.bf16.msra.mxu0 %v4283
    %4590 = vmatprep.subr.bf16.mxu0 %v4282
    %4591 = vmatpush1.bf16.msra.mxu0 %v4281
    %4592 = vmatprep.subr.bf16.mxu0 %v4280
    %4593 = vmatpush1.bf16.msra.mxu0 %v4279
    %4594 = vmatprep.subr.bf16.mxu0 %v4278
    %4595 = vmatpush1.bf16.msra.mxu0 %v4277
    %4596 = vmatprep.subr.bf16.mxu0 %v4276
    %4597 = vmatpush1.bf16.msra.mxu0 %v4275
    %4598 = vmatprep.subr.bf16.mxu0 %v4306
    %4599 = vmatpush2.bf16.msra.mxu0 %v4305
    %4600 = vmatprep.subr.bf16.mxu0 %v4304
    %4601 = vmatpush2.bf16.msra.mxu0 %v4303
    %4602 = vmatprep.subr.bf16.mxu0 %v4302
    %4603 = vmatpush2.bf16.msra.mxu0 %v4301
    %4604 = vmatprep.subr.bf16.mxu0 %v4300
    %4605 = vmatpush2.bf16.msra.mxu0 %v4299
    %4606 = vmatprep.subr.bf16.mxu0 %v4298
    %4607 = vmatpush2.bf16.msra.mxu0 %v4297
    %4608 = vmatprep.subr.bf16.mxu0 %v4296
    %4609 = vmatpush2.bf16.msra.mxu0 %v4295
    %4610 = vmatprep.subr.bf16.mxu0 %v4294
    %4611 = vmatpush2.bf16.msra.mxu0 %v4293
    %4612 = vmatprep.subr.bf16.mxu0 %v4292
    %4613 = vmatpush2.bf16.msra.mxu0 %v4291
    %4614 = vmatprep.mubr.bf16.mxu0 %v4398
    %4615 = vmatmul.mubr.bf16.gmra.mxu0 %v4397
    %v4616 = vpop.f32.mrf.mxu0
    %v4617 = vadd.f32 %v4564, %v4616
    %v4618 = vpop.f32.mrf.mxu0
    %v4619 = vadd.f32 %v4566, %v4618
    %v4620 = vpop.f32.mrf.mxu0
    %v4621 = vadd.f32 %v4568, %v4620
    %v4622 = vpop.f32.mrf.mxu0
    %v4623 = vadd.f32 %v4570, %v4622
    %4624 = vmatprep.mubr.bf16.mxu0 %v4406
    %4625 = vmatmul.mubr.bf16.gmra.mxu0 %v4405
    %v4626 = vpop.f32.mrf.mxu0
    %v4627 = vadd.f32 %v4574, %v4626
    %v4628 = vpop.f32.mrf.mxu0
    %v4629 = vadd.f32 %v4576, %v4628
    %v4630 = vpop.f32.mrf.mxu0
    %v4631 = vadd.f32 %v4578, %v4630
    %v4632 = vpop.f32.mrf.mxu0
    %v4633 = vadd.f32 %v4580, %v4632
    %4634 = vdwg.mxu0
    %v4635 = vmax.f32 %v4617, %v4627
    %v4636 = vmax.f32 %v4621, %v4631
    %v4637 = vmax.f32 %v4635, %v4636
    %v4638 = vrot.slane %v4637, 4
    %v4639 = vmax.f32 %v4637, %v4638
    %v4640 = vrot.slane %v4639, 2
    %v4641 = vmax.f32 %v4639, %v4640
    %v4642 = vrot.slane %v4641, 1
    %v4643 = vmax.f32 %v4641, %v4642
    %v4644 = vmax.f32 %v4619, %v4629
    %v4645 = vmax.f32 %v4623, %v4633
    %v4646 = vmax.f32 %v4644, %v4645
    %v4647 = vrot.slane %v4646, 4
    %v4648 = vmax.f32 %v4646, %v4647
    %v4649 = vrot.slane %v4648, 2
    %v4650 = vmax.f32 %v4648, %v4649
    %v4651 = vrot.slane %v4650, 1
    %v4652 = vmax.f32 %v4650, %v4651
    %v4653 = vsub.f32 %v4617, %v4643
    %v4654 = vsub.f32 %v4619, %v4652
    %v4655 = vsub.f32 %v4621, %v4643
    %v4656 = vsub.f32 %v4623, %v4652
    %v4657 = vsub.f32 %v4627, %v4643
    %v4658 = vsub.f32 %v4629, %v4652
    %v4659 = vsub.f32 %v4631, %v4643
    %v4660 = vsub.f32 %v4633, %v4652
    %v4661 = vmul.f32 %v4653, 1.442695
    %v4662 = vpow.pop %v4661
    %v4663 = vmul.f32 %v4654, 1.442695
    %v4664 = vpow.pop %v4663
    %v4665 = vmul.f32 %v4655, 1.442695
    %v4666 = vpow.pop %v4665
    %v4667 = vmul.f32 %v4656, 1.442695
    %v4668 = vpow.pop %v4667
    %v4669 = vmul.f32 %v4657, 1.442695
    %v4670 = vpow.pop %v4669
    %v4671 = vmul.f32 %v4658, 1.442695
    %v4672 = vpow.pop %v4671
    %v4673 = vmul.f32 %v4659, 1.442695
    %v4674 = vpow.pop %v4673
    %v4675 = vmul.f32 %v4660, 1.442695
    %v4676 = vpow.pop %v4675
    %v4677 = vadd.f32 %v4662, %v4666
    %v4678 = vadd.f32 %v4677, %v4670
    %v4679 = vadd.f32 %v4678, %v4674
    %v4680 = vrot.slane %v4679, 4
    %v4681 = vadd.f32 %v4679, %v4680
    %v4682 = vrot.slane %v4681, 2
    %v4683 = vadd.f32 %v4681, %v4682
    %v4684 = vrot.slane %v4683, 1
    %v4685 = vadd.f32 %v4683, %v4684
    %v4686 = vadd.f32 %v4664, %v4668
    %v4687 = vadd.f32 %v4686, %v4672
    %v4688 = vadd.f32 %v4687, %v4676
    %v4689 = vrot.slane %v4688, 4
    %v4690 = vadd.f32 %v4688, %v4689
    %v4691 = vrot.slane %v4690, 2
    %v4692 = vadd.f32 %v4690, %v4691
    %v4693 = vrot.slane %v4692, 1
    %v4694 = vadd.f32 %v4692, %v4693
    %v4695 = vrcp.pop %v4685
    %v4696 = vmul.f32 %v4662, %v4695
    %v4697 = vrcp.pop %v4694
    %v4698 = vmul.f32 %v4664, %v4697
    %v4699 = vmul.f32 %v4666, %v4695
    %v4700 = vmul.f32 %v4668, %v4697
    %v4701 = vmul.f32 %v4670, %v4695
    %v4702 = vmul.f32 %v4672, %v4697
    %v4703 = vmul.f32 %v4674, %v4695
    %v4704 = vmul.f32 %v4676, %v4697
    %vm4705 = vcmask 261120
    %v4707 = vsel %vm4705, %v26, 0
    %v4710 = vsel %vm4705, %v27, 0
    %4712 = vmatprep.subr.mxu0 0.0
    %4713 = vmatpush1.msra.mxu0 0.0
    %4714 = vmatprep.subr.mxu0 0.0
    %4715 = vmatpush1.msra.mxu0 0.0
    %4716 = vmatprep.subr.mxu0 0.0
    %4717 = vmatpush1.msra.mxu0 0.0
    %4718 = vmatprep.subr.mxu0 0.0
    %4719 = vmatpush1.msra.mxu0 0.0
    %4720 = vmatprep.subr.mxu0 0.0
    %4721 = vmatpush1.msra.mxu0 0.0
    %4722 = vmatprep.subr.mxu0 0.0
    %4723 = vmatpush1.msra.mxu0 0.0
    %4724 = vmatprep.subr.mxu0 0.0
    %4725 = vmatpush1.msra.mxu0 0.0
    %4726 = vmatprep.subr.mxu0 0.0
    %4727 = vmatpush1.msra.mxu0 0.0
    %4728 = vmatprep.subr.mxu0 0.0
    %4729 = vmatpush1.msra.mxu0 0.0
    %4730 = vmatprep.subr.mxu0 0.0
    %4731 = vmatpush1.msra.mxu0 0.0
    %4732 = vmatprep.subr.mxu0 0.0
    %4733 = vmatpush1.msra.mxu0 0.0
    %4734 = vmatprep.subr.mxu0 0.0
    %4735 = vmatpush1.msra.mxu0 0.0
    %4736 = vmatprep.subr.mxu0 %v4704
    %4737 = vmatpush1.msra.mxu0 %v4703
    %4738 = vmatprep.subr.mxu0 %v4702
    %4739 = vmatpush1.msra.mxu0 %v4701
    %4740 = vmatprep.subr.mxu0 %v4700
    %4741 = vmatpush1.msra.mxu0 %v4699
    %4742 = vmatprep.subr.mxu0 %v4698
    %4743 = vmatpush1.msra.mxu0 %v4696
    %4744 = vmatprep.subr.mxu0 0.0
    %4745 = vmatpush2.msra.mxu0 0.0
    %4746 = vmatprep.subr.mxu0 0.0
    %4747 = vmatpush2.msra.mxu0 0.0
    %4748 = vmatprep.subr.mxu0 0.0
    %4749 = vmatpush2.msra.mxu0 0.0
    %4750 = vmatprep.subr.mxu0 0.0
    %4751 = vmatpush2.msra.mxu0 0.0
    %4752 = vmatprep.subr.mxu0 0.0
    %4753 = vmatpush2.msra.mxu0 0.0
    %4754 = vmatprep.subr.mxu0 0.0
    %4755 = vmatpush2.msra.mxu0 0.0
    %4756 = vmatprep.subr.mxu0 0.0
    %4757 = vmatpush2.msra.mxu0 0.0
    %4758 = vmatprep.subr.mxu0 0.0
    %4759 = vmatpush2.msra.mxu0 0.0
    %4760 = vmatprep.subr.mxu0 0.0
    %4761 = vmatpush2.msra.mxu0 0.0
    %4762 = vmatprep.subr.mxu0 0.0
    %4763 = vmatpush2.msra.mxu0 0.0
    %4764 = vmatprep.subr.mxu0 0.0
    %4765 = vmatpush2.msra.mxu0 0.0
    %4766 = vmatprep.subr.mxu0 0.0
    %4767 = vmatpush2.msra.mxu0 0.0
    %4768 = vmatprep.subr.mxu0 0.0
    %4769 = vmatpush2.msra.mxu0 0.0
    %4770 = vmatprep.subr.mxu0 0.0
    %4771 = vmatpush2.msra.mxu0 0.0
    %4772 = vmatprep.subr.mxu0 0.0
    %4773 = vmatpush2.msra.mxu0 0.0
    %4774 = vmatprep.subr.mxu0 0.0
    %4775 = vmatpush2.msra.mxu0 0.0
    %4776 = vmatprep.mubr.f32.mxu0 0.0
    %4777 = vmatmul.mubr.f32.gmra.mxu0 %v4707
    %v4778 = vpop.f32.mrf.mxu0
    %v4779 = vadd.f32 0.0, %v4778
    %v4780 = vpop.f32.mrf.mxu0
    %v4781 = vadd.f32 0.0, %v4780
    %4782 = vmatprep.mubr.f32.mxu0 0.0
    %4783 = vmatmul.mubr.f32.gmra.mxu0 %v4710
    %v4784 = vpop.f32.mrf.mxu0
    %v4785 = vadd.f32 0.0, %v4784
    %v4786 = vpop.f32.mrf.mxu0
    %v4787 = vadd.f32 0.0, %v4786
    %4788 = vdwg.mxu0
    %v4789 = vmul.f32 %v810, %v4779
    %v4790 = vmul.f32 %v814, %v4781
    %v4793 = vcombine.low %v4789, %v4790
    %v4795 = vadd.f32 %v21, %v4793
    %v4796 = vmul.f32 %v2364, %v4779
    %v4797 = vmul.f32 %v2368, %v4781
    %v4800 = vcombine.low %v4796, %v4797
    %v4801 = vcombine.high %v4796, %v4797
    %vm4802 = vcmask 1040384
    %vm4803 = vcmask 1044484
    %vm4804 = vmor %vm4802, %vm4803
    %v4805 = vrot.slane %v4800, 7
    %v4806 = vrot.slane %v4805, 4
    %v4807 = vrot.slane %v4801, 7
    %v4808 = vsel %vm4804, %v4806, %v4807
    %v4810 = vadd.f32 %v4795, %v4808
    %v4811 = vmul.f32 %v3406, %v4779
    %v4812 = vmul.f32 %v3410, %v4781
    %v4813 = vmul.f32 %v3406, %v4785
    %v4814 = vmul.f32 %v3410, %v4787
    %v4819 = vcombine.high %v4811, %v4812
    %v4820 = vcombine.low %v4813, %v4814
    %vm4821 = vcmask 1041408
    %vm4822 = vcmask 1045508
    %vm4823 = vmor %vm4821, %vm4822
    %v4824 = vrot.slane %v4819, 6
    %v4825 = vrot.slane %v4824, 4
    %v4826 = vrot.slane %v4820, 6
    %v4827 = vsel %vm4823, %v4825, %v4826
    %v4829 = vadd.f32 %v4810, %v4827
    %4830 = vst [vmem:[#allocation2] sm:$0x77] %v4829
    // Predicated region
    $region22: #{tpu_custom_call.1} parent=1 // pred_check
      _
    $region23: #{tpu_custom_call.1} parent=1 // pred_check_branch
      %4832 = sbr.rel (0) target = $region25
    $region24: #{tpu_custom_call.1} parent=1 // pred_region
      %s4834 = ssub.s32 128, 128
      %4835 = vsyncadd [#allocation3], %s4834
      %s4837 = sshll.u32 [#allocation2], 4
      %s4838 = int_to_ptr.vmem [resolvable:$true] %s4837
      %4840 = dma.vmem_to_hbm [thread:$0]  %s4838, 128, %s5, [#allocation3]
    $region25: #{tpu_custom_call.1} parent=1 // pred_fallthru
      _
    // Predicated region
    $region26: #{tpu_custom_call.1} parent=1 // pred_check
      _
    $region27: #{tpu_custom_call.1} parent=1 // pred_check_branch
      %4842 = sbr.rel (0) target = $region29
    $region28: #{tpu_custom_call.1} parent=1 // pred_region
      %4843 = dma.done [#allocation3], 128
    $region29: #{tpu_custom_call.1} parent=1 // pred_fallthru
      _
    %4844 = vsyncpa [#allocation3], 1

</llo_original>
